<compile_context>
chip_gen: v7x
topology: tpu7x:2x2x1
jax: 0.10.0
libtpu: 0.0.40
codegen_flags: <defaults>
</compile_context>

<pallas_src>
import jax
import jax.numpy as jnp
import numpy as np
from jax.experimental import pallas as pl
from jax.experimental.pallas import tpu as pltpu

# ------------------------- model hyper-parameters -------------------------
C_FEAT = 1280        # EfficientNet feature channels (fixed by the module)
R = 8                # LoRA rank
ALPHA = 32
SCALING = ALPHA / R  # 4.0
NUM_CLASSES = 10
LANES = 128          # TPU lane width


# ------------------------------ Pallas kernel ------------------------------
def _head_kernel(feats_ref, wf_ref, bc_ref, out_ref):
    """feats_ref: [TB, HW, C]  feature-map tile (bf16/f32), C on lanes
       wf_ref   : [C, NP]      fused (down @ up @ cls) * scaling weight, f32
       bc_ref   : [1, NP]      classifier bias, zero-padded to NP lanes, f32
       out_ref  : [TB, NP]     padded logits, f32
    """
    x = feats_ref[...].astype(jnp.float32)                 # widen bf16 -> f32
    # AdaptiveAvgPool2d((1,1)) + flatten: mean over spatial, f32 accumulation.
    pooled = jnp.mean(x, axis=1)                           # [TB, C]
    # Dropout(p=0.5): identity in eval mode.
    # LoRA + final Linear folded into one GEMM against the pre-fused weight.
    logits = jnp.dot(pooled, wf_ref[...],
                     preferred_element_type=jnp.float32)   # [TB, NP]
    out_ref[...] = (logits + bc_ref[...]).astype(out_ref.dtype)


# ------------------------------ wrapper ------------------------------
def _pick_batch_tile(B, HW, C, itemsize, budget_bytes=8 * 1024 * 1024):
    """Largest batch tile whose double-buffered feats block fits the budget,
    respecting the (8, 128) block-shape rule on the 2-D output."""
    if B <= 8:
        return B                                  # full extent -> always legal
    tb = max(1, budget_bytes // (2 * HW * C * itemsize))
    tb = min(tb, B)
    tb = max(8, (tb // 8) * 8)                    # multiple of 8 when tiling
    return tb


def efficientnet_lora_head(feats_nhwc, w_down, w_up, w_cls, b_cls, *, tb=None):
    """feats_nhwc: [B, H, W, C]  output of base_model.features (NHWC)
       w_down: [r, C]     nn.Linear(C, r).weight
       w_up:   [C, r]     nn.Linear(r, C).weight   (zero-init in the module)
       w_cls:  [ncls, C]  nn.Linear(C, ncls).weight
       b_cls:  [ncls]
       returns [B, ncls] logits (float32)
    """
    B, H, W, C = feats_nhwc.shape
    HW = H * W
    ncls = w_cls.shape[0]
    NP = ((ncls + LANES - 1) // LANES) * LANES    # lane-dense padded class dim

    # Free reshape (contiguous NHWC merge); no transpose of the big operand.
    feats = feats_nhwc.reshape(B, HW, C)

    # Fold LoRA + classifier into one weight (exact weight algebra):
    #   logits = pooled @ (Wd^T @ Wu^T @ Wc^T) * scaling + b
    w_fused = (w_down.T.astype(jnp.float32)
               @ (w_up.T.astype(jnp.float32) @ w_cls.T.astype(jnp.float32)))
    w_fused = w_fused * SCALING                              # [C, ncls]
    w_fused = jnp.pad(w_fused, ((0, 0), (0, NP - ncls)))     # [C, NP]
    bias = jnp.pad(b_cls.astype(jnp.float32), (0, NP - ncls)).reshape(1, NP)

    if tb is None:
        tb = _pick_batch_tile(B, HW, C, feats.dtype.itemsize)
    grid = (pl.cdiv(B, tb),)

    out = pl.pallas_call(
        _head_kernel,
        out_shape=jax.ShapeDtypeStruct((B, NP), jnp.float32),
        grid=grid,
        in_specs=[
            pl.BlockSpec((tb, HW, C), lambda i: (i, 0, 0)),   # streamed per step
            pl.BlockSpec((C, NP), lambda i: (0, 0)),          # resident weight
            pl.BlockSpec((1, NP), lambda i: (0, 0)),          # resident bias
        ],
        out_specs=pl.BlockSpec((tb, NP), lambda i: (i, 0)),
        compiler_params=pltpu.CompilerParams(
            dimension_semantics=("parallel",),
            vmem_limit_bytes=32 * 1024 * 1024),
    )(feats, w_fused, bias)

    return out[:, :ncls]


# ------------------------------ reference ------------------------------
def reference_head(feats_nhwc, w_down, w_up, w_cls, b_cls):
    """Pure-JAX reference with the module's original (unfused) structure."""
    x = feats_nhwc.astype(jnp.float32)
    pooled = jnp.mean(x, axis=(1, 2))                 # pool + flatten  [B, C]
    h = pooled @ w_down.T.astype(jnp.float32)         # down_proj       [B, r]
    lora = (h @ w_up.T.astype(jnp.float32)) * SCALING  # up_proj*scale  [B, C]
    return lora @ w_cls.T.astype(jnp.float32) + b_cls[None, :].astype(jnp.float32)


# -------------------------------- main --------------------------------
if __name__ == "__main__":
    # Full f32 matmul precision so kernel and XLA reference agree tightly.
    jax.config.update("jax_default_matmul_precision", "highest")

    key = jax.random.PRNGKey(0)
    k_feat, k_wd, k_wu, k_wc, k_bc = jax.random.split(key, 5)

    # Small deterministic example: backbone feature map for batch=16, 4x4
    # spatial, 1280 channels (NHWC), streamed as bf16.
    B, H, W = 16, 4, 4
    feats = jax.random.normal(
        k_feat, (B, H, W, C_FEAT), dtype=jnp.float32).astype(jnp.bfloat16)

    # Parameters (shapes follow the PyTorch module's __init__).
    # NOTE: the module zero-inits up_proj (LoRA output is 0 at init); small
    # random values are used here so the full data path is exercised.
    w_down = jax.random.normal(k_wd, (R, C_FEAT), dtype=jnp.float32) * 0.02
    w_up = jax.random.normal(k_wu, (C_FEAT, R), dtype=jnp.float32) * 0.02
    w_cls = jax.random.normal(k_wc, (NUM_CLASSES, C_FEAT), dtype=jnp.float32) * 0.02
    b_cls = jax.random.normal(k_bc, (NUM_CLASSES,), dtype=jnp.float32) * 0.02

    # tb=8 -> grid of 2 steps to exercise the batch-tiled pipeline.
    out = efficientnet_lora_head(feats, w_down, w_up, w_cls, b_cls, tb=8)
    out = jax.block_until_ready(out)

    ref = jax.block_until_ready(reference_head(feats, w_down, w_up, w_cls, b_cls))
    np.testing.assert_allclose(np.asarray(out), np.asarray(ref),
                               rtol=1e-3, atol=1e-4)

    print("KERNEL_OK")
</pallas_src>

<mosaic_0001>
module attributes {stable_mosaic.version = 11 : i64} {
  func.func @_head_kernel(%arg0: i32, %arg1: memref<8x16x1280xbf16, #tpu.memory_space<vmem>>, %arg2: memref<1280x128xf32, #tpu.memory_space<vmem>>, %arg3: memref<1x128xf32, #tpu.memory_space<vmem>>, %arg4: memref<8x128xf32, #tpu.memory_space<vmem>>) attributes {dimension_semantics = [#tpu.dimension_semantics<parallel>], iteration_bounds = array<i64: 2>, scalar_prefetch = 0 : i64, scratch_operands = 0 : i64, tpu.core_type = #tpu.core_type<tc>, window_params = [{transform_indices = @transform_0, window_bounds = array<i64: 8, 16, 1280>}, {pipeline_mode = #tpu.pipeline_mode<synchronous>, transform_indices = @transform_1, window_bounds = array<i64: 1280, 128>}, {pipeline_mode = #tpu.pipeline_mode<synchronous>, transform_indices = @transform_2, window_bounds = array<i64: 1, 128>}, {transform_indices = @transform_3, window_bounds = array<i64: 8, 128>}]} {
    %c0 = arith.constant 0 : index
    %c0_0 = arith.constant 0 : index
    %c0_1 = arith.constant 0 : index
    %0 = vector.load %arg1[%c0, %c0_0, %c0_1] : memref<8x16x1280xbf16, #tpu.memory_space<vmem>>, vector<8x16x1280xbf16>
    %1 = arith.extf %0 : vector<8x16x1280xbf16> to vector<8x16x1280xf32>
    %cst = arith.constant dense<0.000000e+00> : vector<8x1280xf32>
    %2 = vector.multi_reduction <add>, %1, %cst [1] : vector<8x16x1280xf32> to vector<8x1280xf32>
    %cst_2 = arith.constant 1.600000e+01 : f32
    %3 = vector.broadcast %cst_2 : f32 to vector<8x1280xf32>
    %4 = arith.divf %2, %3 : vector<8x1280xf32>
    %c0_3 = arith.constant 0 : index
    %c0_4 = arith.constant 0 : index
    %5 = vector.load %arg2[%c0_3, %c0_4] : memref<1280x128xf32, #tpu.memory_space<vmem>>, vector<1280x128xf32>
    %cst_5 = arith.constant dense<0.000000e+00> : vector<8x128xf32>
    %6 = tpu.matmul %4, %5, %cst_5 {dimension_numbers = #tpu.dot_dimension_numbers<[1], [0], [0], [1], [0, 0, 1, 1], [], []>, precision = #tpu.contract_precision<fp32>} : vector<8x1280xf32>, vector<1280x128xf32>, vector<8x128xf32> -> vector<8x128xf32>
    %c0_6 = arith.constant 0 : index
    %c0_7 = arith.constant 0 : index
    %7 = vector.load %arg3[%c0_6, %c0_7] : memref<1x128xf32, #tpu.memory_space<vmem>>, vector<1x128xf32>
    %8 = vector.broadcast %7 : vector<1x128xf32> to vector<8x128xf32>
    %9 = arith.addf %6, %8 : vector<8x128xf32>
    %c0_8 = arith.constant 0 : index
    %c0_9 = arith.constant 0 : index
    %10 = vector.load %arg4[%c0_8, %c0_9] : memref<8x128xf32, #tpu.memory_space<vmem>>, vector<8x128xf32>
    tpu.vector_store %arg4[%c0_8, %c0_9], %9 {strides = array<i32>} : memref<8x128xf32, #tpu.memory_space<vmem>>, vector<8x128xf32>,
    return
  }
  func.func @transform_0(%arg0: i32) -> (i32, i32, i32) {
    %c0_i32 = arith.constant 0 : i32
    %c0_i32_0 = arith.constant 0 : i32
    %c0_i32_1 = arith.constant 0 : i32
    return %arg0, %c0_i32, %c0_i32_0 : i32, i32, i32
  }
  func.func @transform_1(%arg0: i32) -> (i32, i32) {
    %c0_i32 = arith.constant 0 : i32
    %c0_i32_0 = arith.constant 0 : i32
    %c0_i32_1 = arith.constant 0 : i32
    return %c0_i32, %c0_i32_0 : i32, i32
  }
  func.func @transform_2(%arg0: i32) -> (i32, i32) {
    %c0_i32 = arith.constant 0 : i32
    %c0_i32_0 = arith.constant 0 : i32
    %c0_i32_1 = arith.constant 0 : i32
    return %c0_i32, %c0_i32_0 : i32, i32
  }
  func.func @transform_3(%arg0: i32) -> (i32, i32) {
    %c0_i32 = arith.constant 0 : i32
    %c0_i32_0 = arith.constant 0 : i32
    return %arg0, %c0_i32 : i32, i32
  }
}

</mosaic_0001>

<llo_original>
// kernel: tpu_custom_call.1
$region0: #{tpu_custom_call.1}
  #allocation0 [shape = 'u32[]', space=smem, size = 0x4, offset = 0x4, fixed_abs, tag = 'smem constant byte address 0x4 - core index']
  #allocation1 [shape = 'u32[144,128]{1,0:T(1,128)}', space=vmem, size = 0x12000, scoped, tag = 'internal scratch']
  %s0 = inlined_call_operand.hbm [shape: bf16[16,16,1280], index: 0, kind: input, shape index: {}]
  %s1 = inlined_call_operand.hbm [shape: f32[1280,128], index: 1, kind: input, shape index: {}]
  %s2 = inlined_call_operand.vmem [shape: f32[1,128], index: 2, kind: input, shape index: {}]
  %s3 = inlined_call_operand.hbm [shape: f32[16,128], index: 3, kind: output, shape index: {}]
  %s4 = sld [smem:[#allocation0]]
  $region53: #{tpu_custom_call.1} parent=0
    _
  %s6 = ssub.s32 1, %s4
  %s7 = scalar_select 0, %s6, %s4
  $region1: #{tpu_custom_call.1} parent=0
    #allocation2 [shape = 'u8[655360]{0}', space=vmem, size = 0xa0000, scoped, tag = 'input window, operand 0']
    #allocation3 [shape = 's32[2]{0}', space=sflag, size = 0x8, scoped, tag = 'scoped memory for tpu_custom_call.1']
    #allocation4 [shape = 's32[2]{0}', space=sflag, size = 0x8, scoped, tag = 'scoped memory for tpu_custom_call.1']
    #allocation5 [shape = 'u8[655360]{0}', space=vmem, size = 0xa0000, scoped, tag = 'input window, operand 1, single buffered']
    #allocation6 [shape = 's32[1]{0}', space=sflag, size = 0x4, scoped, tag = 'scoped memory for tpu_custom_call.1']
    #allocation7 [shape = 'u8[8192]{0}', space=vmem, size = 0x2000, scoped, tag = 'output window, operand 0']
    %8 = vsyncpa [#allocation3], 0
    %s9 = scalar_lea.sflag [#allocation3], 1
    %10 = vsyncpa %s9, 0
    %11 = vsyncpa [#allocation6], 0
    %12 = vsyncpa [#allocation4], 0
    %s13 = scalar_lea.sflag [#allocation4], 1
    %14 = vsyncpa %s13, 0
    loop: start=0, step=1, limit=4
    $region2: #{tpu_custom_call.1} parent=1 // loop_pre_header
      _
    $region3: #{tpu_custom_call.1} parent=1 // loop_header
      %s16 = sphi 0, %s20
      %p17 = scmp.ge.s32.totalorder %s16, 4
      %s26 = sphi 0, %s28
      %s29 = sphi 0, %s26
      %s30 = sphi 0, %s29
      %s46 = sphi 0, %s30
      %s50 = sphi 0, %s50
      %s52 = sphi 0, %s50
      %s53 = sphi 0, %s52
      %s67 = sphi 0, %s53
      %s71 = sphi 0, %s71
      %s73 = sphi 0, %s71
      %s74 = sphi 0, %s73
      %s88 = sphi 0, %s74
      %s94 = sphi 0, %s96
      %s97 = sphi 0, %s94
      %s98 = sphi 0, %s97
      %s114 = sphi 0, %s98
    $region4: #{tpu_custom_call.1} parent=1 // loop_header_branch
      %19 = sbr.rel (%p17) target = $region8
    $region5: #{tpu_custom_call.1} parent=1 // loop_body
      %s21 = ssub.s32 %s16, 1
      %s22 = ssub.s32 %s16, 2
      %s23 = sadd.s32 %s16, 1
      %s24 = ssub.s32 %s16, %s23
      %p25 = scmp.eq.s32.totalorder %s24, 0
      %s27 = sadd.s32 %s26, 1
      %s28 = scalar_select %p25, %s26, %s27
      %p31 = pneg %p25
      %p32 = scmp.eq.s32.totalorder %s16, 1
      %p33 = por %p31, %p32
      %p34 = scmp.ne.s32.totalorder %s26, %s29
      %p35 = scmp.eq.s32.totalorder %s16, 0
      %p36 = por %p34, %p35
      %p37 = scmp.ne.s32.totalorder %s26, %s29
      %p38 = scmp.eq.s32.totalorder %s21, 1
      %p39 = por %p37, %p38
      %p40 = scmp.ne.s32.totalorder %s29, %s30
      %p41 = scmp.eq.s32.totalorder %s21, 0
      %p42 = por %p40, %p41
      %p43 = scmp.ne.s32.totalorder %s29, %s30
      %p44 = scmp.eq.s32.totalorder %s22, 1
      %p45 = por %p43, %p44
      %p47 = scmp.ne.s32.totalorder %s30, %s46
      %p48 = scmp.eq.s32.totalorder %s22, 0
      %p49 = por %p47, %p48
      %s51 = sadd.s32 %s50, 1
      %p54 = scmp.eq.s32.totalorder %s16, 1
      %p55 = scmp.ne.s32.totalorder %s50, %s52
      %p56 = scmp.eq.s32.totalorder %s16, 0
      %p57 = por %p55, %p56
      %p58 = scmp.ne.s32.totalorder %s50, %s52
      %p59 = scmp.eq.s32.totalorder %s21, 1
      %p60 = por %p58, %p59
      %p61 = scmp.ne.s32.totalorder %s52, %s53
      %p62 = scmp.eq.s32.totalorder %s21, 0
      %p63 = por %p61, %p62
      %p64 = scmp.ne.s32.totalorder %s52, %s53
      %p65 = scmp.eq.s32.totalorder %s22, 1
      %p66 = por %p64, %p65
      %p68 = scmp.ne.s32.totalorder %s53, %s67
      %p69 = scmp.eq.s32.totalorder %s22, 0
      %p70 = por %p68, %p69
      %s72 = sadd.s32 %s71, 1
      %p75 = scmp.eq.s32.totalorder %s16, 1
      %p76 = scmp.ne.s32.totalorder %s71, %s73
      %p77 = scmp.eq.s32.totalorder %s16, 0
      %p78 = por %p76, %p77
      %p79 = scmp.ne.s32.totalorder %s71, %s73
      %p80 = scmp.eq.s32.totalorder %s21, 1
      %p81 = por %p79, %p80
      %p82 = scmp.ne.s32.totalorder %s73, %s74
      %p83 = scmp.eq.s32.totalorder %s21, 0
      %p84 = por %p82, %p83
      %p85 = scmp.ne.s32.totalorder %s73, %s74
      %p86 = scmp.eq.s32.totalorder %s22, 1
      %p87 = por %p85, %p86
      %p89 = scmp.ne.s32.totalorder %s74, %s88
      %p90 = scmp.eq.s32.totalorder %s22, 0
      %p91 = por %p89, %p90
      %s92 = ssub.s32 %s16, %s23
      %p93 = scmp.eq.s32.totalorder %s92, 0
      %s95 = sadd.s32 %s94, 1
      %s96 = scalar_select %p93, %s94, %s95
      %p99 = pneg %p93
      %p100 = scmp.eq.s32.totalorder %s16, 1
      %p101 = por %p99, %p100
      %p102 = scmp.ne.s32.totalorder %s94, %s97
      %p103 = scmp.eq.s32.totalorder %s16, 0
      %p104 = por %p102, %p103
      %p105 = scmp.ne.s32.totalorder %s94, %s97
      %p106 = scmp.eq.s32.totalorder %s21, 1
      %p107 = por %p105, %p106
      %p108 = scmp.ne.s32.totalorder %s97, %s98
      %p109 = scmp.eq.s32.totalorder %s21, 0
      %p110 = por %p108, %p109
      %p111 = scmp.ne.s32.totalorder %s97, %s98
      %p112 = scmp.eq.s32.totalorder %s22, 1
      %p113 = por %p111, %p112
      %p115 = scmp.ne.s32.totalorder %s98, %s114
      %p116 = scmp.eq.s32.totalorder %s22, 0
      %p117 = por %p115, %p116
      %p118 = scmp.le.s32.totalorder 1, %s16
      %p119 = scmp.lt.s32.totalorder %s16, 3
      %p120 = pnand %p118, %p119
      %p121 = pneg %p120
      // Predicated region
      $region9: #{tpu_custom_call.1} parent=5 // pred_check
        _
      $region10: #{tpu_custom_call.1} parent=5 // pred_check_branch
        %123 = sbr.rel (%p120) target = $region12
      $region11: #{tpu_custom_call.1} parent=5 // pred_region
        %s124 = ssub.s32 %s16, 1
        // Predicated region
        $region13: #{tpu_custom_call.1} parent=11 // pred_check
          %p125 = pneg %p63
        $region14: #{tpu_custom_call.1} parent=11 // pred_check_branch
          %127 = sbr.rel (%p125) target = $region16
        $region15: #{tpu_custom_call.1} parent=11 // pred_region
          %s129 = ssub.s32 20480, 20480
          %130 = vsyncadd [#allocation6], %s129
          %s131 = sshll.u32 [#allocation5], 4
          %s132 = int_to_ptr.vmem [resolvable:$true] %s131
          %137 = dma.hbm_to_vmem [thread:$0]  %s1, 20480, %s132, [#allocation6], 128, 128, 8
        $region16: #{tpu_custom_call.1} parent=11 // pred_fallthru
          _
        // Predicated region
        $region17: #{tpu_custom_call.1} parent=11 // pred_check
          %p138 = pneg %p84
        $region18: #{tpu_custom_call.1} parent=11 // pred_check_branch
          %140 = sbr.rel (%p138) target = $region20
        $region19: #{tpu_custom_call.1} parent=11 // pred_region
          _
        $region20: #{tpu_custom_call.1} parent=11 // pred_fallthru
          _
      $region12: #{tpu_custom_call.1} parent=5 // pred_fallthru
        _
      %p141 = scmp.lt.s32.totalorder %s16, 2
      // Predicated region
      $region21: #{tpu_custom_call.1} parent=5 // pred_check
        %p142 = pneg %p141
      $region22: #{tpu_custom_call.1} parent=5 // pred_check_branch
        %144 = sbr.rel (%p142) target = $region24
      $region23: #{tpu_custom_call.1} parent=5 // pred_region
        // Predicated region
        $region25: #{tpu_custom_call.1} parent=23 // pred_check
          %p145 = pneg %p36
        $region26: #{tpu_custom_call.1} parent=23 // pred_check_branch
          %147 = sbr.rel (%p145) target = $region28
        $region27: #{tpu_custom_call.1} parent=23 // pred_region
          %s148 = sand.u32 %s26, 1
          %s149 = scalar_lea.sflag [#allocation3], %s148
          %s150 = sand.u32 %s26, 1
          %s151 = smul.addr %s150, 640
          %s152 = scalar_lea.vmem [#allocation2], %s151
          %s153 = smul.u32 8, %s16
          %s155 = ssub.s32 10240, 10240
          %156 = vsyncadd %s149, %s155
          %s157 = smul.addr %s153, 20
          %s158 = smul.addr %s157, 64
          %s159 = scalar_lea.hbm %s0, %s158
          %s160 = sshll.u32 %s152, 4
          %s161 = int_to_ptr.vmem [resolvable:$true] %s160
          %166 = dma.hbm_to_vmem [thread:$0]  %s159, 10240, %s161, %s149, 640, 640, 40
        $region28: #{tpu_custom_call.1} parent=23 // pred_fallthru
          _
      $region24: #{tpu_custom_call.1} parent=5 // pred_fallthru
        _
      %p167 = scmp.le.s32.totalorder 1, %s16
      %p168 = scmp.lt.s32.totalorder %s16, 3
      %p169 = pnand %p167, %p168
      %p170 = pneg %p169
      // Predicated region
      $region29: #{tpu_custom_call.1} parent=5 // pred_check
        _
      $region30: #{tpu_custom_call.1} parent=5 // pred_check_branch
        %172 = sbr.rel (%p169) target = $region32
      $region31: #{tpu_custom_call.1} parent=5 // pred_region
        %s173 = ssub.s32 %s16, 1
        %s174 = sand.u32 %s29, 1
        %s175 = scalar_lea.sflag [#allocation3], %s174
        %s176 = sand.u32 %s29, 1
        %s177 = smul.addr %s176, 640
        %s178 = scalar_lea.vmem [#allocation2], %s177
        // Predicated region
        $region33: #{tpu_custom_call.1} parent=31 // pred_check
          %p179 = pneg %p42
        $region34: #{tpu_custom_call.1} parent=31 // pred_check_branch
          %181 = sbr.rel (%p179) target = $region36
        $region35: #{tpu_custom_call.1} parent=31 // pred_region
          %182 = dma.done %s175, 10240
        $region36: #{tpu_custom_call.1} parent=31 // pred_fallthru
          _
        // Predicated region
        $region37: #{tpu_custom_call.1} parent=31 // pred_check
          %p183 = pneg %p63
        $region38: #{tpu_custom_call.1} parent=31 // pred_check_branch
          %185 = sbr.rel (%p183) target = $region40
        $region39: #{tpu_custom_call.1} parent=31 // pred_region
          %186 = dma.done [#allocation6], 20480
        $region40: #{tpu_custom_call.1} parent=31 // pred_fallthru
          _
        %s187 = sand.u32 %s29, 1
        %s188 = scalar_lea.sflag [#allocation3], %s187
        %s189 = sand.u32 %s29, 1
        %s190 = smul.addr %s189, 640
        %s191 = scalar_lea.vmem [#allocation2], %s190
        %p192 = pneg %p42
        %p193 = pneg %p39
        %p194 = pneg %p63
        %p195 = pneg %p60
        %p196 = pneg %p84
        %p197 = pneg %p81
        %p198 = pneg %p110
        %p199 = pneg %p107
        %s200 = sand.u32 %s97, 1
        %s201 = scalar_lea.sflag [#allocation4], %s200
        %s202 = sand.u32 %s97, 1
        %s203 = smul.addr %s202, 8
        %s204 = scalar_lea.vmem [#allocation7], %s203
        %s205 = smul.u32 8, %s21
        %v206 = vld [vmem:[%s178] sm:$0xff]
        %v207 = vld [vmem:[%s178 + $0x8] sm:$0xff]
        %v208 = vld [vmem:[%s178 + $0x10] sm:$0xff]
        %v209 = vld [vmem:[%s178 + $0x18] sm:$0xff]
        %v210 = vld [vmem:[%s178 + $0x20] sm:$0xff]
        %v211 = vld [vmem:[%s178 + $0x28] sm:$0xff]
        %v212 = vld [vmem:[%s178 + $0x30] sm:$0xff]
        %v213 = vld [vmem:[%s178 + $0x38] sm:$0xff]
        %v214 = vld [vmem:[%s178 + $0x40] sm:$0xff]
        %v215 = vld [vmem:[%s178 + $0x48] sm:$0xff]
        %v216 = vld [vmem:[%s178 + $0x50] sm:$0xff]
        %v217 = vld [vmem:[%s178 + $0x58] sm:$0xff]
        %v218 = vld [vmem:[%s178 + $0x60] sm:$0xff]
        %v219 = vld [vmem:[%s178 + $0x68] sm:$0xff]
        %v220 = vld [vmem:[%s178 + $0x70] sm:$0xff]
        %v221 = vld [vmem:[%s178 + $0x78] sm:$0xff]
        %v222 = vld [vmem:[%s178 + $0x80] sm:$0xff]
        %v223 = vld [vmem:[%s178 + $0x88] sm:$0xff]
        %v224 = vld [vmem:[%s178 + $0x90] sm:$0xff]
        %v225 = vld [vmem:[%s178 + $0x98] sm:$0xff]
        %v226 = vld [vmem:[%s178 + $0xa0] sm:$0xff]
        %v227 = vld [vmem:[%s178 + $0xa8] sm:$0xff]
        %v228 = vld [vmem:[%s178 + $0xb0] sm:$0xff]
        %v229 = vld [vmem:[%s178 + $0xb8] sm:$0xff]
        %v230 = vld [vmem:[%s178 + $0xc0] sm:$0xff]
        %v231 = vld [vmem:[%s178 + $0xc8] sm:$0xff]
        %v232 = vld [vmem:[%s178 + $0xd0] sm:$0xff]
        %v233 = vld [vmem:[%s178 + $0xd8] sm:$0xff]
        %v234 = vld [vmem:[%s178 + $0xe0] sm:$0xff]
        %v235 = vld [vmem:[%s178 + $0xe8] sm:$0xff]
        %v236 = vld [vmem:[%s178 + $0xf0] sm:$0xff]
        %v237 = vld [vmem:[%s178 + $0xf8] sm:$0xff]
        %v238 = vld [vmem:[%s178 + $0x100] sm:$0xff]
        %v239 = vld [vmem:[%s178 + $0x108] sm:$0xff]
        %v240 = vld [vmem:[%s178 + $0x110] sm:$0xff]
        %v241 = vld [vmem:[%s178 + $0x118] sm:$0xff]
        %v242 = vld [vmem:[%s178 + $0x120] sm:$0xff]
        %v243 = vld [vmem:[%s178 + $0x128] sm:$0xff]
        %v244 = vld [vmem:[%s178 + $0x130] sm:$0xff]
        %v245 = vld [vmem:[%s178 + $0x138] sm:$0xff]
        %v246 = vld [vmem:[%s178 + $0x140] sm:$0xff]
        %v247 = vld [vmem:[%s178 + $0x148] sm:$0xff]
        %v248 = vld [vmem:[%s178 + $0x150] sm:$0xff]
        %v249 = vld [vmem:[%s178 + $0x158] sm:$0xff]
        %v250 = vld [vmem:[%s178 + $0x160] sm:$0xff]
        %v251 = vld [vmem:[%s178 + $0x168] sm:$0xff]
        %v252 = vld [vmem:[%s178 + $0x170] sm:$0xff]
        %v253 = vld [vmem:[%s178 + $0x178] sm:$0xff]
        %v254 = vld [vmem:[%s178 + $0x180] sm:$0xff]
        %v255 = vld [vmem:[%s178 + $0x188] sm:$0xff]
        %v256 = vld [vmem:[%s178 + $0x190] sm:$0xff]
        %v257 = vld [vmem:[%s178 + $0x198] sm:$0xff]
        %v258 = vld [vmem:[%s178 + $0x1a0] sm:$0xff]
        %v259 = vld [vmem:[%s178 + $0x1a8] sm:$0xff]
        %v260 = vld [vmem:[%s178 + $0x1b0] sm:$0xff]
        %v261 = vld [vmem:[%s178 + $0x1b8] sm:$0xff]
        %v262 = vld [vmem:[%s178 + $0x1c0] sm:$0xff]
        %v263 = vld [vmem:[%s178 + $0x1c8] sm:$0xff]
        %v264 = vld [vmem:[%s178 + $0x1d0] sm:$0xff]
        %v265 = vld [vmem:[%s178 + $0x1d8] sm:$0xff]
        %v266 = vld [vmem:[%s178 + $0x1e0] sm:$0xff]
        %v267 = vld [vmem:[%s178 + $0x1e8] sm:$0xff]
        %v268 = vld [vmem:[%s178 + $0x1f0] sm:$0xff]
        %v269 = vld [vmem:[%s178 + $0x1f8] sm:$0xff]
        %v270 = vld [vmem:[%s178 + $0x200] sm:$0xff]
        %v271 = vld [vmem:[%s178 + $0x208] sm:$0xff]
        %v272 = vld [vmem:[%s178 + $0x210] sm:$0xff]
        %v273 = vld [vmem:[%s178 + $0x218] sm:$0xff]
        %v274 = vld [vmem:[%s178 + $0x220] sm:$0xff]
        %v275 = vld [vmem:[%s178 + $0x228] sm:$0xff]
        %v276 = vld [vmem:[%s178 + $0x230] sm:$0xff]
        %v277 = vld [vmem:[%s178 + $0x238] sm:$0xff]
        %v278 = vld [vmem:[%s178 + $0x240] sm:$0xff]
        %v279 = vld [vmem:[%s178 + $0x248] sm:$0xff]
        %v280 = vld [vmem:[%s178 + $0x250] sm:$0xff]
        %v281 = vld [vmem:[%s178 + $0x258] sm:$0xff]
        %v282 = vld [vmem:[%s178 + $0x260] sm:$0xff]
        %v283 = vld [vmem:[%s178 + $0x268] sm:$0xff]
        %v284 = vld [vmem:[%s178 + $0x270] sm:$0xff]
        %v285 = vld [vmem:[%s178 + $0x278] sm:$0xff]
        %v286 = vunpack.c.l.bf16 %v206
        %v287 = vunpack.c.h.bf16 %v206
        %v288 = vunpack.c.l.bf16 %v207
        %v289 = vunpack.c.h.bf16 %v207
        %v290 = vunpack.c.l.bf16 %v208
        %v291 = vunpack.c.h.bf16 %v208
        %v292 = vunpack.c.l.bf16 %v209
        %v293 = vunpack.c.h.bf16 %v209
        %v294 = vunpack.c.l.bf16 %v210
        %v295 = vunpack.c.h.bf16 %v210
        %v296 = vunpack.c.l.bf16 %v211
        %v297 = vunpack.c.h.bf16 %v211
        %v298 = vunpack.c.l.bf16 %v212
        %v299 = vunpack.c.h.bf16 %v212
        %v300 = vunpack.c.l.bf16 %v213
        %v301 = vunpack.c.h.bf16 %v213
        %v302 = vunpack.c.l.bf16 %v214
        %v303 = vunpack.c.h.bf16 %v214
        %v304 = vunpack.c.l.bf16 %v215
        %v305 = vunpack.c.h.bf16 %v215
        %v306 = vunpack.c.l.bf16 %v216
        %v307 = vunpack.c.h.bf16 %v216
        %v308 = vunpack.c.l.bf16 %v217
        %v309 = vunpack.c.h.bf16 %v217
        %v310 = vunpack.c.l.bf16 %v218
        %v311 = vunpack.c.h.bf16 %v218
        %v312 = vunpack.c.l.bf16 %v219
        %v313 = vunpack.c.h.bf16 %v219
        %v314 = vunpack.c.l.bf16 %v220
        %v315 = vunpack.c.h.bf16 %v220
        %v316 = vunpack.c.l.bf16 %v221
        %v317 = vunpack.c.h.bf16 %v221
        %v318 = vunpack.c.l.bf16 %v222
        %v319 = vunpack.c.h.bf16 %v222
        %v320 = vunpack.c.l.bf16 %v223
        %v321 = vunpack.c.h.bf16 %v223
        %v322 = vunpack.c.l.bf16 %v224
        %v323 = vunpack.c.h.bf16 %v224
        %v324 = vunpack.c.l.bf16 %v225
        %v325 = vunpack.c.h.bf16 %v225
        %v326 = vunpack.c.l.bf16 %v226
        %v327 = vunpack.c.h.bf16 %v226
        %v328 = vunpack.c.l.bf16 %v227
        %v329 = vunpack.c.h.bf16 %v227
        %v330 = vunpack.c.l.bf16 %v228
        %v331 = vunpack.c.h.bf16 %v228
        %v332 = vunpack.c.l.bf16 %v229
        %v333 = vunpack.c.h.bf16 %v229
        %v334 = vunpack.c.l.bf16 %v230
        %v335 = vunpack.c.h.bf16 %v230
        %v336 = vunpack.c.l.bf16 %v231
        %v337 = vunpack.c.h.bf16 %v231
        %v338 = vunpack.c.l.bf16 %v232
        %v339 = vunpack.c.h.bf16 %v232
        %v340 = vunpack.c.l.bf16 %v233
        %v341 = vunpack.c.h.bf16 %v233
        %v342 = vunpack.c.l.bf16 %v234
        %v343 = vunpack.c.h.bf16 %v234
        %v344 = vunpack.c.l.bf16 %v235
        %v345 = vunpack.c.h.bf16 %v235
        %v346 = vunpack.c.l.bf16 %v236
        %v347 = vunpack.c.h.bf16 %v236
        %v348 = vunpack.c.l.bf16 %v237
        %v349 = vunpack.c.h.bf16 %v237
        %v350 = vunpack.c.l.bf16 %v238
        %v351 = vunpack.c.h.bf16 %v238
        %v352 = vunpack.c.l.bf16 %v239
        %v353 = vunpack.c.h.bf16 %v239
        %v354 = vunpack.c.l.bf16 %v240
        %v355 = vunpack.c.h.bf16 %v240
        %v356 = vunpack.c.l.bf16 %v241
        %v357 = vunpack.c.h.bf16 %v241
        %v358 = vunpack.c.l.bf16 %v242
        %v359 = vunpack.c.h.bf16 %v242
        %v360 = vunpack.c.l.bf16 %v243
        %v361 = vunpack.c.h.bf16 %v243
        %v362 = vunpack.c.l.bf16 %v244
        %v363 = vunpack.c.h.bf16 %v244
        %v364 = vunpack.c.l.bf16 %v245
        %v365 = vunpack.c.h.bf16 %v245
        %v366 = vunpack.c.l.bf16 %v246
        %v367 = vunpack.c.h.bf16 %v246
        %v368 = vunpack.c.l.bf16 %v247
        %v369 = vunpack.c.h.bf16 %v247
        %v370 = vunpack.c.l.bf16 %v248
        %v371 = vunpack.c.h.bf16 %v248
        %v372 = vunpack.c.l.bf16 %v249
        %v373 = vunpack.c.h.bf16 %v249
        %v374 = vunpack.c.l.bf16 %v250
        %v375 = vunpack.c.h.bf16 %v250
        %v376 = vunpack.c.l.bf16 %v251
        %v377 = vunpack.c.h.bf16 %v251
        %v378 = vunpack.c.l.bf16 %v252
        %v379 = vunpack.c.h.bf16 %v252
        %v380 = vunpack.c.l.bf16 %v253
        %v381 = vunpack.c.h.bf16 %v253
        %v382 = vunpack.c.l.bf16 %v254
        %v383 = vunpack.c.h.bf16 %v254
        %v384 = vunpack.c.l.bf16 %v255
        %v385 = vunpack.c.h.bf16 %v255
        %v386 = vunpack.c.l.bf16 %v256
        %v387 = vunpack.c.h.bf16 %v256
        %v388 = vunpack.c.l.bf16 %v257
        %v389 = vunpack.c.h.bf16 %v257
        %v390 = vunpack.c.l.bf16 %v258
        %v391 = vunpack.c.h.bf16 %v258
        %v392 = vunpack.c.l.bf16 %v259
        %v393 = vunpack.c.h.bf16 %v259
        %v394 = vunpack.c.l.bf16 %v260
        %v395 = vunpack.c.h.bf16 %v260
        %v396 = vunpack.c.l.bf16 %v261
        %v397 = vunpack.c.h.bf16 %v261
        %v398 = vunpack.c.l.bf16 %v262
        %v399 = vunpack.c.h.bf16 %v262
        %v400 = vunpack.c.l.bf16 %v263
        %v401 = vunpack.c.h.bf16 %v263
        %v402 = vunpack.c.l.bf16 %v264
        %v403 = vunpack.c.h.bf16 %v264
        %v404 = vunpack.c.l.bf16 %v265
        %v405 = vunpack.c.h.bf16 %v265
        %v406 = vunpack.c.l.bf16 %v266
        %v407 = vunpack.c.h.bf16 %v266
        %v408 = vunpack.c.l.bf16 %v267
        %v409 = vunpack.c.h.bf16 %v267
        %v410 = vunpack.c.l.bf16 %v268
        %v411 = vunpack.c.h.bf16 %v268
        %v412 = vunpack.c.l.bf16 %v269
        %v413 = vunpack.c.h.bf16 %v269
        %v414 = vunpack.c.l.bf16 %v270
        %v415 = vunpack.c.h.bf16 %v270
        %v416 = vunpack.c.l.bf16 %v271
        %v417 = vunpack.c.h.bf16 %v271
        %v418 = vunpack.c.l.bf16 %v272
        %v419 = vunpack.c.h.bf16 %v272
        %v420 = vunpack.c.l.bf16 %v273
        %v421 = vunpack.c.h.bf16 %v273
        %v422 = vunpack.c.l.bf16 %v274
        %v423 = vunpack.c.h.bf16 %v274
        %v424 = vunpack.c.l.bf16 %v275
        %v425 = vunpack.c.h.bf16 %v275
        %v426 = vunpack.c.l.bf16 %v276
        %v427 = vunpack.c.h.bf16 %v276
        %v428 = vunpack.c.l.bf16 %v277
        %v429 = vunpack.c.h.bf16 %v277
        %v430 = vunpack.c.l.bf16 %v278
        %v431 = vunpack.c.h.bf16 %v278
        %v432 = vunpack.c.l.bf16 %v279
        %v433 = vunpack.c.h.bf16 %v279
        %v434 = vunpack.c.l.bf16 %v280
        %v435 = vunpack.c.h.bf16 %v280
        %v436 = vunpack.c.l.bf16 %v281
        %v437 = vunpack.c.h.bf16 %v281
        %v438 = vunpack.c.l.bf16 %v282
        %v439 = vunpack.c.h.bf16 %v282
        %v440 = vunpack.c.l.bf16 %v283
        %v441 = vunpack.c.h.bf16 %v283
        %v442 = vunpack.c.l.bf16 %v284
        %v443 = vunpack.c.h.bf16 %v284
        %v444 = vunpack.c.l.bf16 %v285
        %v445 = vunpack.c.h.bf16 %v285
        %v446 = vadd.f32 %v286, %v296
        %v447 = vrot.slane %v446, 4
        %v448 = vadd.f32 %v446, %v447
        %v449 = vrot.slane %v448, 2
        %v450 = vadd.f32 %v448, %v449
        %v451 = vrot.slane %v450, 1
        %v452 = vadd.f32 %v450, %v451
        %v453 = vadd.f32 %v287, %v297
        %v454 = vrot.slane %v453, 4
        %v455 = vadd.f32 %v453, %v454
        %v456 = vrot.slane %v455, 2
        %v457 = vadd.f32 %v455, %v456
        %v458 = vrot.slane %v457, 1
        %v459 = vadd.f32 %v457, %v458
        %v460 = vadd.f32 %v288, %v298
        %v461 = vrot.slane %v460, 4
        %v462 = vadd.f32 %v460, %v461
        %v463 = vrot.slane %v462, 2
        %v464 = vadd.f32 %v462, %v463
        %v465 = vrot.slane %v464, 1
        %v466 = vadd.f32 %v464, %v465
        %v467 = vadd.f32 %v289, %v299
        %v468 = vrot.slane %v467, 4
        %v469 = vadd.f32 %v467, %v468
        %v470 = vrot.slane %v469, 2
        %v471 = vadd.f32 %v469, %v470
        %v472 = vrot.slane %v471, 1
        %v473 = vadd.f32 %v471, %v472
        %v474 = vadd.f32 %v290, %v300
        %v475 = vrot.slane %v474, 4
        %v476 = vadd.f32 %v474, %v475
        %v477 = vrot.slane %v476, 2
        %v478 = vadd.f32 %v476, %v477
        %v479 = vrot.slane %v478, 1
        %v480 = vadd.f32 %v478, %v479
        %v481 = vadd.f32 %v291, %v301
        %v482 = vrot.slane %v481, 4
        %v483 = vadd.f32 %v481, %v482
        %v484 = vrot.slane %v483, 2
        %v485 = vadd.f32 %v483, %v484
        %v486 = vrot.slane %v485, 1
        %v487 = vadd.f32 %v485, %v486
        %v488 = vadd.f32 %v292, %v302
        %v489 = vrot.slane %v488, 4
        %v490 = vadd.f32 %v488, %v489
        %v491 = vrot.slane %v490, 2
        %v492 = vadd.f32 %v490, %v491
        %v493 = vrot.slane %v492, 1
        %v494 = vadd.f32 %v492, %v493
        %v495 = vadd.f32 %v293, %v303
        %v496 = vrot.slane %v495, 4
        %v497 = vadd.f32 %v495, %v496
        %v498 = vrot.slane %v497, 2
        %v499 = vadd.f32 %v497, %v498
        %v500 = vrot.slane %v499, 1
        %v501 = vadd.f32 %v499, %v500
        %v502 = vadd.f32 %v294, %v304
        %v503 = vrot.slane %v502, 4
        %v504 = vadd.f32 %v502, %v503
        %v505 = vrot.slane %v504, 2
        %v506 = vadd.f32 %v504, %v505
        %v507 = vrot.slane %v506, 1
        %v508 = vadd.f32 %v506, %v507
        %v509 = vadd.f32 %v295, %v305
        %v510 = vrot.slane %v509, 4
        %v511 = vadd.f32 %v509, %v510
        %v512 = vrot.slane %v511, 2
        %v513 = vadd.f32 %v511, %v512
        %v514 = vrot.slane %v513, 1
        %v515 = vadd.f32 %v513, %v514
        %v516 = vadd.f32 %v306, %v316
        %v517 = vrot.slane %v516, 4
        %v518 = vadd.f32 %v516, %v517
        %v519 = vrot.slane %v518, 2
        %v520 = vadd.f32 %v518, %v519
        %v521 = vrot.slane %v520, 1
        %v522 = vadd.f32 %v520, %v521
        %v523 = vadd.f32 %v307, %v317
        %v524 = vrot.slane %v523, 4
        %v525 = vadd.f32 %v523, %v524
        %v526 = vrot.slane %v525, 2
        %v527 = vadd.f32 %v525, %v526
        %v528 = vrot.slane %v527, 1
        %v529 = vadd.f32 %v527, %v528
        %v530 = vadd.f32 %v308, %v318
        %v531 = vrot.slane %v530, 4
        %v532 = vadd.f32 %v530, %v531
        %v533 = vrot.slane %v532, 2
        %v534 = vadd.f32 %v532, %v533
        %v535 = vrot.slane %v534, 1
        %v536 = vadd.f32 %v534, %v535
        %v537 = vadd.f32 %v309, %v319
        %v538 = vrot.slane %v537, 4
        %v539 = vadd.f32 %v537, %v538
        %v540 = vrot.slane %v539, 2
        %v541 = vadd.f32 %v539, %v540
        %v542 = vrot.slane %v541, 1
        %v543 = vadd.f32 %v541, %v542
        %v544 = vadd.f32 %v310, %v320
        %v545 = vrot.slane %v544, 4
        %v546 = vadd.f32 %v544, %v545
        %v547 = vrot.slane %v546, 2
        %v548 = vadd.f32 %v546, %v547
        %v549 = vrot.slane %v548, 1
        %v550 = vadd.f32 %v548, %v549
        %v551 = vadd.f32 %v311, %v321
        %v552 = vrot.slane %v551, 4
        %v553 = vadd.f32 %v551, %v552
        %v554 = vrot.slane %v553, 2
        %v555 = vadd.f32 %v553, %v554
        %v556 = vrot.slane %v555, 1
        %v557 = vadd.f32 %v555, %v556
        %v558 = vadd.f32 %v312, %v322
        %v559 = vrot.slane %v558, 4
        %v560 = vadd.f32 %v558, %v559
        %v561 = vrot.slane %v560, 2
        %v562 = vadd.f32 %v560, %v561
        %v563 = vrot.slane %v562, 1
        %v564 = vadd.f32 %v562, %v563
        %v565 = vadd.f32 %v313, %v323
        %v566 = vrot.slane %v565, 4
        %v567 = vadd.f32 %v565, %v566
        %v568 = vrot.slane %v567, 2
        %v569 = vadd.f32 %v567, %v568
        %v570 = vrot.slane %v569, 1
        %v571 = vadd.f32 %v569, %v570
        %v572 = vadd.f32 %v314, %v324
        %v573 = vrot.slane %v572, 4
        %v574 = vadd.f32 %v572, %v573
        %v575 = vrot.slane %v574, 2
        %v576 = vadd.f32 %v574, %v575
        %v577 = vrot.slane %v576, 1
        %v578 = vadd.f32 %v576, %v577
        %v579 = vadd.f32 %v315, %v325
        %v580 = vrot.slane %v579, 4
        %v581 = vadd.f32 %v579, %v580
        %v582 = vrot.slane %v581, 2
        %v583 = vadd.f32 %v581, %v582
        %v584 = vrot.slane %v583, 1
        %v585 = vadd.f32 %v583, %v584
        %v586 = vadd.f32 %v326, %v336
        %v587 = vrot.slane %v586, 4
        %v588 = vadd.f32 %v586, %v587
        %v589 = vrot.slane %v588, 2
        %v590 = vadd.f32 %v588, %v589
        %v591 = vrot.slane %v590, 1
        %v592 = vadd.f32 %v590, %v591
        %v593 = vadd.f32 %v327, %v337
        %v594 = vrot.slane %v593, 4
        %v595 = vadd.f32 %v593, %v594
        %v596 = vrot.slane %v595, 2
        %v597 = vadd.f32 %v595, %v596
        %v598 = vrot.slane %v597, 1
        %v599 = vadd.f32 %v597, %v598
        %v600 = vadd.f32 %v328, %v338
        %v601 = vrot.slane %v600, 4
        %v602 = vadd.f32 %v600, %v601
        %v603 = vrot.slane %v602, 2
        %v604 = vadd.f32 %v602, %v603
        %v605 = vrot.slane %v604, 1
        %v606 = vadd.f32 %v604, %v605
        %v607 = vadd.f32 %v329, %v339
        %v608 = vrot.slane %v607, 4
        %v609 = vadd.f32 %v607, %v608
        %v610 = vrot.slane %v609, 2
        %v611 = vadd.f32 %v609, %v610
        %v612 = vrot.slane %v611, 1
        %v613 = vadd.f32 %v611, %v612
        %v614 = vadd.f32 %v330, %v340
        %v615 = vrot.slane %v614, 4
        %v616 = vadd.f32 %v614, %v615
        %v617 = vrot.slane %v616, 2
        %v618 = vadd.f32 %v616, %v617
        %v619 = vrot.slane %v618, 1
        %v620 = vadd.f32 %v618, %v619
        %v621 = vadd.f32 %v331, %v341
        %v622 = vrot.slane %v621, 4
        %v623 = vadd.f32 %v621, %v622
        %v624 = vrot.slane %v623, 2
        %v625 = vadd.f32 %v623, %v624
        %v626 = vrot.slane %v625, 1
        %v627 = vadd.f32 %v625, %v626
        %v628 = vadd.f32 %v332, %v342
        %v629 = vrot.slane %v628, 4
        %v630 = vadd.f32 %v628, %v629
        %v631 = vrot.slane %v630, 2
        %v632 = vadd.f32 %v630, %v631
        %v633 = vrot.slane %v632, 1
        %v634 = vadd.f32 %v632, %v633
        %v635 = vadd.f32 %v333, %v343
        %v636 = vrot.slane %v635, 4
        %v637 = vadd.f32 %v635, %v636
        %v638 = vrot.slane %v637, 2
        %v639 = vadd.f32 %v637, %v638
        %v640 = vrot.slane %v639, 1
        %v641 = vadd.f32 %v639, %v640
        %v642 = vadd.f32 %v334, %v344
        %v643 = vrot.slane %v642, 4
        %v644 = vadd.f32 %v642, %v643
        %v645 = vrot.slane %v644, 2
        %v646 = vadd.f32 %v644, %v645
        %v647 = vrot.slane %v646, 1
        %v648 = vadd.f32 %v646, %v647
        %v649 = vadd.f32 %v335, %v345
        %v650 = vrot.slane %v649, 4
        %v651 = vadd.f32 %v649, %v650
        %v652 = vrot.slane %v651, 2
        %v653 = vadd.f32 %v651, %v652
        %v654 = vrot.slane %v653, 1
        %v655 = vadd.f32 %v653, %v654
        %v656 = vadd.f32 %v346, %v356
        %v657 = vrot.slane %v656, 4
        %v658 = vadd.f32 %v656, %v657
        %v659 = vrot.slane %v658, 2
        %v660 = vadd.f32 %v658, %v659
        %v661 = vrot.slane %v660, 1
        %v662 = vadd.f32 %v660, %v661
        %v663 = vadd.f32 %v347, %v357
        %v664 = vrot.slane %v663, 4
        %v665 = vadd.f32 %v663, %v664
        %v666 = vrot.slane %v665, 2
        %v667 = vadd.f32 %v665, %v666
        %v668 = vrot.slane %v667, 1
        %v669 = vadd.f32 %v667, %v668
        %v670 = vadd.f32 %v348, %v358
        %v671 = vrot.slane %v670, 4
        %v672 = vadd.f32 %v670, %v671
        %v673 = vrot.slane %v672, 2
        %v674 = vadd.f32 %v672, %v673
        %v675 = vrot.slane %v674, 1
        %v676 = vadd.f32 %v674, %v675
        %v677 = vadd.f32 %v349, %v359
        %v678 = vrot.slane %v677, 4
        %v679 = vadd.f32 %v677, %v678
        %v680 = vrot.slane %v679, 2
        %v681 = vadd.f32 %v679, %v680
        %v682 = vrot.slane %v681, 1
        %v683 = vadd.f32 %v681, %v682
        %v684 = vadd.f32 %v350, %v360
        %v685 = vrot.slane %v684, 4
        %v686 = vadd.f32 %v684, %v685
        %v687 = vrot.slane %v686, 2
        %v688 = vadd.f32 %v686, %v687
        %v689 = vrot.slane %v688, 1
        %v690 = vadd.f32 %v688, %v689
        %v691 = vadd.f32 %v351, %v361
        %v692 = vrot.slane %v691, 4
        %v693 = vadd.f32 %v691, %v692
        %v694 = vrot.slane %v693, 2
        %v695 = vadd.f32 %v693, %v694
        %v696 = vrot.slane %v695, 1
        %v697 = vadd.f32 %v695, %v696
        %v698 = vadd.f32 %v352, %v362
        %v699 = vrot.slane %v698, 4
        %v700 = vadd.f32 %v698, %v699
        %v701 = vrot.slane %v700, 2
        %v702 = vadd.f32 %v700, %v701
        %v703 = vrot.slane %v702, 1
        %v704 = vadd.f32 %v702, %v703
        %v705 = vadd.f32 %v353, %v363
        %v706 = vrot.slane %v705, 4
        %v707 = vadd.f32 %v705, %v706
        %v708 = vrot.slane %v707, 2
        %v709 = vadd.f32 %v707, %v708
        %v710 = vrot.slane %v709, 1
        %v711 = vadd.f32 %v709, %v710
        %v712 = vadd.f32 %v354, %v364
        %v713 = vrot.slane %v712, 4
        %v714 = vadd.f32 %v712, %v713
        %v715 = vrot.slane %v714, 2
        %v716 = vadd.f32 %v714, %v715
        %v717 = vrot.slane %v716, 1
        %v718 = vadd.f32 %v716, %v717
        %v719 = vadd.f32 %v355, %v365
        %v720 = vrot.slane %v719, 4
        %v721 = vadd.f32 %v719, %v720
        %v722 = vrot.slane %v721, 2
        %v723 = vadd.f32 %v721, %v722
        %v724 = vrot.slane %v723, 1
        %v725 = vadd.f32 %v723, %v724
        %v726 = vadd.f32 %v366, %v376
        %v727 = vrot.slane %v726, 4
        %v728 = vadd.f32 %v726, %v727
        %v729 = vrot.slane %v728, 2
        %v730 = vadd.f32 %v728, %v729
        %v731 = vrot.slane %v730, 1
        %v732 = vadd.f32 %v730, %v731
        %v733 = vadd.f32 %v367, %v377
        %v734 = vrot.slane %v733, 4
        %v735 = vadd.f32 %v733, %v734
        %v736 = vrot.slane %v735, 2
        %v737 = vadd.f32 %v735, %v736
        %v738 = vrot.slane %v737, 1
        %v739 = vadd.f32 %v737, %v738
        %v740 = vadd.f32 %v368, %v378
        %v741 = vrot.slane %v740, 4
        %v742 = vadd.f32 %v740, %v741
        %v743 = vrot.slane %v742, 2
        %v744 = vadd.f32 %v742, %v743
        %v745 = vrot.slane %v744, 1
        %v746 = vadd.f32 %v744, %v745
        %v747 = vadd.f32 %v369, %v379
        %v748 = vrot.slane %v747, 4
        %v749 = vadd.f32 %v747, %v748
        %v750 = vrot.slane %v749, 2
        %v751 = vadd.f32 %v749, %v750
        %v752 = vrot.slane %v751, 1
        %v753 = vadd.f32 %v751, %v752
        %v754 = vadd.f32 %v370, %v380
        %v755 = vrot.slane %v754, 4
        %v756 = vadd.f32 %v754, %v755
        %v757 = vrot.slane %v756, 2
        %v758 = vadd.f32 %v756, %v757
        %v759 = vrot.slane %v758, 1
        %v760 = vadd.f32 %v758, %v759
        %v761 = vadd.f32 %v371, %v381
        %v762 = vrot.slane %v761, 4
        %v763 = vadd.f32 %v761, %v762
        %v764 = vrot.slane %v763, 2
        %v765 = vadd.f32 %v763, %v764
        %v766 = vrot.slane %v765, 1
        %v767 = vadd.f32 %v765, %v766
        %v768 = vadd.f32 %v372, %v382
        %v769 = vrot.slane %v768, 4
        %v770 = vadd.f32 %v768, %v769
        %v771 = vrot.slane %v770, 2
        %v772 = vadd.f32 %v770, %v771
        %v773 = vrot.slane %v772, 1
        %v774 = vadd.f32 %v772, %v773
        %v775 = vadd.f32 %v373, %v383
        %v776 = vrot.slane %v775, 4
        %v777 = vadd.f32 %v775, %v776
        %v778 = vrot.slane %v777, 2
        %v779 = vadd.f32 %v777, %v778
        %v780 = vrot.slane %v779, 1
        %v781 = vadd.f32 %v779, %v780
        %v782 = vadd.f32 %v374, %v384
        %v783 = vrot.slane %v782, 4
        %v784 = vadd.f32 %v782, %v783
        %v785 = vrot.slane %v784, 2
        %v786 = vadd.f32 %v784, %v785
        %v787 = vrot.slane %v786, 1
        %v788 = vadd.f32 %v786, %v787
        %v789 = vadd.f32 %v375, %v385
        %v790 = vrot.slane %v789, 4
        %v791 = vadd.f32 %v789, %v790
        %v792 = vrot.slane %v791, 2
        %v793 = vadd.f32 %v791, %v792
        %v794 = vrot.slane %v793, 1
        %v795 = vadd.f32 %v793, %v794
        %v796 = vadd.f32 %v386, %v396
        %v797 = vrot.slane %v796, 4
        %v798 = vadd.f32 %v796, %v797
        %v799 = vrot.slane %v798, 2
        %v800 = vadd.f32 %v798, %v799
        %v801 = vrot.slane %v800, 1
        %v802 = vadd.f32 %v800, %v801
        %v803 = vadd.f32 %v387, %v397
        %v804 = vrot.slane %v803, 4
        %v805 = vadd.f32 %v803, %v804
        %v806 = vrot.slane %v805, 2
        %v807 = vadd.f32 %v805, %v806
        %v808 = vrot.slane %v807, 1
        %v809 = vadd.f32 %v807, %v808
        %v810 = vadd.f32 %v388, %v398
        %v811 = vrot.slane %v810, 4
        %v812 = vadd.f32 %v810, %v811
        %v813 = vrot.slane %v812, 2
        %v814 = vadd.f32 %v812, %v813
        %v815 = vrot.slane %v814, 1
        %v816 = vadd.f32 %v814, %v815
        %v817 = vadd.f32 %v389, %v399
        %v818 = vrot.slane %v817, 4
        %v819 = vadd.f32 %v817, %v818
        %v820 = vrot.slane %v819, 2
        %v821 = vadd.f32 %v819, %v820
        %v822 = vrot.slane %v821, 1
        %v823 = vadd.f32 %v821, %v822
        %v824 = vadd.f32 %v390, %v400
        %v825 = vrot.slane %v824, 4
        %v826 = vadd.f32 %v824, %v825
        %v827 = vrot.slane %v826, 2
        %v828 = vadd.f32 %v826, %v827
        %v829 = vrot.slane %v828, 1
        %v830 = vadd.f32 %v828, %v829
        %v831 = vadd.f32 %v391, %v401
        %v832 = vrot.slane %v831, 4
        %v833 = vadd.f32 %v831, %v832
        %v834 = vrot.slane %v833, 2
        %v835 = vadd.f32 %v833, %v834
        %v836 = vrot.slane %v835, 1
        %v837 = vadd.f32 %v835, %v836
        %v838 = vadd.f32 %v392, %v402
        %v839 = vrot.slane %v838, 4
        %v840 = vadd.f32 %v838, %v839
        %v841 = vrot.slane %v840, 2
        %v842 = vadd.f32 %v840, %v841
        %v843 = vrot.slane %v842, 1
        %v844 = vadd.f32 %v842, %v843
        %v845 = vadd.f32 %v393, %v403
        %v846 = vrot.slane %v845, 4
        %v847 = vadd.f32 %v845, %v846
        %v848 = vrot.slane %v847, 2
        %v849 = vadd.f32 %v847, %v848
        %v850 = vrot.slane %v849, 1
        %v851 = vadd.f32 %v849, %v850
        %v852 = vadd.f32 %v394, %v404
        %v853 = vrot.slane %v852, 4
        %v854 = vadd.f32 %v852, %v853
        %v855 = vrot.slane %v854, 2
        %v856 = vadd.f32 %v854, %v855
        %v857 = vrot.slane %v856, 1
        %v858 = vadd.f32 %v856, %v857
        %v859 = vadd.f32 %v395, %v405
        %v860 = vrot.slane %v859, 4
        %v861 = vadd.f32 %v859, %v860
        %v862 = vrot.slane %v861, 2
        %v863 = vadd.f32 %v861, %v862
        %v864 = vrot.slane %v863, 1
        %v865 = vadd.f32 %v863, %v864
        %v866 = vadd.f32 %v406, %v416
        %v867 = vrot.slane %v866, 4
        %v868 = vadd.f32 %v866, %v867
        %v869 = vrot.slane %v868, 2
        %v870 = vadd.f32 %v868, %v869
        %v871 = vrot.slane %v870, 1
        %v872 = vadd.f32 %v870, %v871
        %v873 = vadd.f32 %v407, %v417
        %v874 = vrot.slane %v873, 4
        %v875 = vadd.f32 %v873, %v874
        %v876 = vrot.slane %v875, 2
        %v877 = vadd.f32 %v875, %v876
        %v878 = vrot.slane %v877, 1
        %v879 = vadd.f32 %v877, %v878
        %v880 = vadd.f32 %v408, %v418
        %v881 = vrot.slane %v880, 4
        %v882 = vadd.f32 %v880, %v881
        %v883 = vrot.slane %v882, 2
        %v884 = vadd.f32 %v882, %v883
        %v885 = vrot.slane %v884, 1
        %v886 = vadd.f32 %v884, %v885
        %v887 = vadd.f32 %v409, %v419
        %v888 = vrot.slane %v887, 4
        %v889 = vadd.f32 %v887, %v888
        %v890 = vrot.slane %v889, 2
        %v891 = vadd.f32 %v889, %v890
        %v892 = vrot.slane %v891, 1
        %v893 = vadd.f32 %v891, %v892
        %v894 = vadd.f32 %v410, %v420
        %v895 = vrot.slane %v894, 4
        %v896 = vadd.f32 %v894, %v895
        %v897 = vrot.slane %v896, 2
        %v898 = vadd.f32 %v896, %v897
        %v899 = vrot.slane %v898, 1
        %v900 = vadd.f32 %v898, %v899
        %v901 = vadd.f32 %v411, %v421
        %v902 = vrot.slane %v901, 4
        %v903 = vadd.f32 %v901, %v902
        %v904 = vrot.slane %v903, 2
        %v905 = vadd.f32 %v903, %v904
        %v906 = vrot.slane %v905, 1
        %v907 = vadd.f32 %v905, %v906
        %v908 = vadd.f32 %v412, %v422
        %v909 = vrot.slane %v908, 4
        %v910 = vadd.f32 %v908, %v909
        %v911 = vrot.slane %v910, 2
        %v912 = vadd.f32 %v910, %v911
        %v913 = vrot.slane %v912, 1
        %v914 = vadd.f32 %v912, %v913
        %v915 = vadd.f32 %v413, %v423
        %v916 = vrot.slane %v915, 4
        %v917 = vadd.f32 %v915, %v916
        %v918 = vrot.slane %v917, 2
        %v919 = vadd.f32 %v917, %v918
        %v920 = vrot.slane %v919, 1
        %v921 = vadd.f32 %v919, %v920
        %v922 = vadd.f32 %v414, %v424
        %v923 = vrot.slane %v922, 4
        %v924 = vadd.f32 %v922, %v923
        %v925 = vrot.slane %v924, 2
        %v926 = vadd.f32 %v924, %v925
        %v927 = vrot.slane %v926, 1
        %v928 = vadd.f32 %v926, %v927
        %v929 = vadd.f32 %v415, %v425
        %v930 = vrot.slane %v929, 4
        %v931 = vadd.f32 %v929, %v930
        %v932 = vrot.slane %v931, 2
        %v933 = vadd.f32 %v931, %v932
        %v934 = vrot.slane %v933, 1
        %v935 = vadd.f32 %v933, %v934
        %v936 = vadd.f32 %v426, %v436
        %v937 = vrot.slane %v936, 4
        %v938 = vadd.f32 %v936, %v937
        %v939 = vrot.slane %v938, 2
        %v940 = vadd.f32 %v938, %v939
        %v941 = vrot.slane %v940, 1
        %v942 = vadd.f32 %v940, %v941
        %v943 = vadd.f32 %v427, %v437
        %v944 = vrot.slane %v943, 4
        %v945 = vadd.f32 %v943, %v944
        %v946 = vrot.slane %v945, 2
        %v947 = vadd.f32 %v945, %v946
        %v948 = vrot.slane %v947, 1
        %v949 = vadd.f32 %v947, %v948
        %v950 = vadd.f32 %v428, %v438
        %v951 = vrot.slane %v950, 4
        %v952 = vadd.f32 %v950, %v951
        %v953 = vrot.slane %v952, 2
        %v954 = vadd.f32 %v952, %v953
        %v955 = vrot.slane %v954, 1
        %v956 = vadd.f32 %v954, %v955
        %v957 = vadd.f32 %v429, %v439
        %v958 = vrot.slane %v957, 4
        %v959 = vadd.f32 %v957, %v958
        %v960 = vrot.slane %v959, 2
        %v961 = vadd.f32 %v959, %v960
        %v962 = vrot.slane %v961, 1
        %v963 = vadd.f32 %v961, %v962
        %v964 = vadd.f32 %v430, %v440
        %v965 = vrot.slane %v964, 4
        %v966 = vadd.f32 %v964, %v965
        %v967 = vrot.slane %v966, 2
        %v968 = vadd.f32 %v966, %v967
        %v969 = vrot.slane %v968, 1
        %v970 = vadd.f32 %v968, %v969
        %v971 = vadd.f32 %v431, %v441
        %v972 = vrot.slane %v971, 4
        %v973 = vadd.f32 %v971, %v972
        %v974 = vrot.slane %v973, 2
        %v975 = vadd.f32 %v973, %v974
        %v976 = vrot.slane %v975, 1
        %v977 = vadd.f32 %v975, %v976
        %v978 = vadd.f32 %v432, %v442
        %v979 = vrot.slane %v978, 4
        %v980 = vadd.f32 %v978, %v979
        %v981 = vrot.slane %v980, 2
        %v982 = vadd.f32 %v980, %v981
        %v983 = vrot.slane %v982, 1
        %v984 = vadd.f32 %v982, %v983
        %v985 = vadd.f32 %v433, %v443
        %v986 = vrot.slane %v985, 4
        %v987 = vadd.f32 %v985, %v986
        %v988 = vrot.slane %v987, 2
        %v989 = vadd.f32 %v987, %v988
        %v990 = vrot.slane %v989, 1
        %v991 = vadd.f32 %v989, %v990
        %v992 = vadd.f32 %v434, %v444
        %v993 = vrot.slane %v992, 4
        %v994 = vadd.f32 %v992, %v993
        %v995 = vrot.slane %v994, 2
        %v996 = vadd.f32 %v994, %v995
        %v997 = vrot.slane %v996, 1
        %v998 = vadd.f32 %v996, %v997
        %v999 = vadd.f32 %v435, %v445
        %v1000 = vrot.slane %v999, 4
        %v1001 = vadd.f32 %v999, %v1000
        %v1002 = vrot.slane %v1001, 2
        %v1003 = vadd.f32 %v1001, %v1002
        %v1004 = vrot.slane %v1003, 1
        %v1005 = vadd.f32 %v1003, %v1004
        %v1006 = vrcp.pop 16.0
        %v1007 = vmul.f32 %v452, %v1006
        %v1008 = vmul.f32 %v459, %v1006
        %v1009 = vmul.f32 %v466, %v1006
        %v1010 = vmul.f32 %v473, %v1006
        %v1011 = vmul.f32 %v480, %v1006
        %v1012 = vmul.f32 %v487, %v1006
        %v1013 = vmul.f32 %v494, %v1006
        %v1014 = vmul.f32 %v501, %v1006
        %v1015 = vmul.f32 %v508, %v1006
        %v1016 = vmul.f32 %v515, %v1006
        %v1017 = vmul.f32 %v522, %v1006
        %v1018 = vmul.f32 %v529, %v1006
        %v1019 = vmul.f32 %v536, %v1006
        %v1020 = vmul.f32 %v543, %v1006
        %v1021 = vmul.f32 %v550, %v1006
        %v1022 = vmul.f32 %v557, %v1006
        %v1023 = vmul.f32 %v564, %v1006
        %v1024 = vmul.f32 %v571, %v1006
        %v1025 = vmul.f32 %v578, %v1006
        %v1026 = vmul.f32 %v585, %v1006
        %v1027 = vmul.f32 %v592, %v1006
        %v1028 = vmul.f32 %v599, %v1006
        %v1029 = vmul.f32 %v606, %v1006
        %v1030 = vmul.f32 %v613, %v1006
        %v1031 = vmul.f32 %v620, %v1006
        %v1032 = vmul.f32 %v627, %v1006
        %v1033 = vmul.f32 %v634, %v1006
        %v1034 = vmul.f32 %v641, %v1006
        %v1035 = vmul.f32 %v648, %v1006
        %v1036 = vmul.f32 %v655, %v1006
        %v1037 = vmul.f32 %v662, %v1006
        %v1038 = vmul.f32 %v669, %v1006
        %v1039 = vmul.f32 %v676, %v1006
        %v1040 = vmul.f32 %v683, %v1006
        %v1041 = vmul.f32 %v690, %v1006
        %v1042 = vmul.f32 %v697, %v1006
        %v1043 = vmul.f32 %v704, %v1006
        %v1044 = vmul.f32 %v711, %v1006
        %v1045 = vmul.f32 %v718, %v1006
        %v1046 = vmul.f32 %v725, %v1006
        %v1047 = vmul.f32 %v732, %v1006
        %v1048 = vmul.f32 %v739, %v1006
        %v1049 = vmul.f32 %v746, %v1006
        %v1050 = vmul.f32 %v753, %v1006
        %v1051 = vmul.f32 %v760, %v1006
        %v1052 = vmul.f32 %v767, %v1006
        %v1053 = vmul.f32 %v774, %v1006
        %v1054 = vmul.f32 %v781, %v1006
        %v1055 = vmul.f32 %v788, %v1006
        %v1056 = vmul.f32 %v795, %v1006
        %v1057 = vmul.f32 %v802, %v1006
        %v1058 = vmul.f32 %v809, %v1006
        %v1059 = vmul.f32 %v816, %v1006
        %v1060 = vmul.f32 %v823, %v1006
        %v1061 = vmul.f32 %v830, %v1006
        %v1062 = vmul.f32 %v837, %v1006
        %v1063 = vmul.f32 %v844, %v1006
        %v1064 = vmul.f32 %v851, %v1006
        %v1065 = vmul.f32 %v858, %v1006
        %v1066 = vmul.f32 %v865, %v1006
        %v1067 = vmul.f32 %v872, %v1006
        %v1068 = vmul.f32 %v879, %v1006
        %v1069 = vmul.f32 %v886, %v1006
        %v1070 = vmul.f32 %v893, %v1006
        %v1071 = vmul.f32 %v900, %v1006
        %v1072 = vmul.f32 %v907, %v1006
        %v1073 = vmul.f32 %v914, %v1006
        %v1074 = vmul.f32 %v921, %v1006
        %v1075 = vmul.f32 %v928, %v1006
        %v1076 = vmul.f32 %v935, %v1006
        %v1077 = vmul.f32 %v942, %v1006
        %v1078 = vmul.f32 %v949, %v1006
        %v1079 = vmul.f32 %v956, %v1006
        %v1080 = vmul.f32 %v963, %v1006
        %v1081 = vmul.f32 %v970, %v1006
        %v1082 = vmul.f32 %v977, %v1006
        %v1083 = vmul.f32 %v984, %v1006
        %v1084 = vmul.f32 %v991, %v1006
        %v1085 = vmul.f32 %v998, %v1006
        %v1086 = vmul.f32 %v1005, %v1006
        %v1087 = vld [vmem:[#allocation5] sm:$0xff]
        %v1088 = vld [vmem:[#allocation5 + $0x8] sm:$0xff]
        %v1089 = vld [vmem:[#allocation5 + $0x10] sm:$0xff]
        %v1090 = vld [vmem:[#allocation5 + $0x18] sm:$0xff]
        %v1091 = vld [vmem:[#allocation5 + $0x20] sm:$0xff]
        %v1092 = vld [vmem:[#allocation5 + $0x28] sm:$0xff]
        %v1093 = vld [vmem:[#allocation5 + $0x30] sm:$0xff]
        %v1094 = vld [vmem:[#allocation5 + $0x38] sm:$0xff]
        %v1095 = vld [vmem:[#allocation5 + $0x40] sm:$0xff]
        %v1096 = vld [vmem:[#allocation5 + $0x48] sm:$0xff]
        %v1097 = vld [vmem:[#allocation5 + $0x50] sm:$0xff]
        %v1098 = vld [vmem:[#allocation5 + $0x58] sm:$0xff]
        %v1099 = vld [vmem:[#allocation5 + $0x60] sm:$0xff]
        %v1100 = vld [vmem:[#allocation5 + $0x68] sm:$0xff]
        %v1101 = vld [vmem:[#allocation5 + $0x70] sm:$0xff]
        %v1102 = vld [vmem:[#allocation5 + $0x78] sm:$0xff]
        %v1103 = vld [vmem:[#allocation5 + $0x80] sm:$0xff]
        %v1104 = vld [vmem:[#allocation5 + $0x88] sm:$0xff]
        %v1105 = vld [vmem:[#allocation5 + $0x90] sm:$0xff]
        %v1106 = vld [vmem:[#allocation5 + $0x98] sm:$0xff]
        %v1107 = vld [vmem:[#allocation5 + $0xa0] sm:$0xff]
        %v1108 = vld [vmem:[#allocation5 + $0xa8] sm:$0xff]
        %v1109 = vld [vmem:[#allocation5 + $0xb0] sm:$0xff]
        %v1110 = vld [vmem:[#allocation5 + $0xb8] sm:$0xff]
        %v1111 = vld [vmem:[#allocation5 + $0xc0] sm:$0xff]
        %v1112 = vld [vmem:[#allocation5 + $0xc8] sm:$0xff]
        %v1113 = vld [vmem:[#allocation5 + $0xd0] sm:$0xff]
        %v1114 = vld [vmem:[#allocation5 + $0xd8] sm:$0xff]
        %v1115 = vld [vmem:[#allocation5 + $0xe0] sm:$0xff]
        %v1116 = vld [vmem:[#allocation5 + $0xe8] sm:$0xff]
        %v1117 = vld [vmem:[#allocation5 + $0xf0] sm:$0xff]
        %v1118 = vld [vmem:[#allocation5 + $0xf8] sm:$0xff]
        %v1119 = vld [vmem:[#allocation5 + $0x100] sm:$0xff]
        %v1120 = vld [vmem:[#allocation5 + $0x108] sm:$0xff]
        %v1121 = vld [vmem:[#allocation5 + $0x110] sm:$0xff]
        %v1122 = vld [vmem:[#allocation5 + $0x118] sm:$0xff]
        %v1123 = vld [vmem:[#allocation5 + $0x120] sm:$0xff]
        %v1124 = vld [vmem:[#allocation5 + $0x128] sm:$0xff]
        %v1125 = vld [vmem:[#allocation5 + $0x130] sm:$0xff]
        %v1126 = vld [vmem:[#allocation5 + $0x138] sm:$0xff]
        %v1127 = vld [vmem:[#allocation5 + $0x140] sm:$0xff]
        %v1128 = vld [vmem:[#allocation5 + $0x148] sm:$0xff]
        %v1129 = vld [vmem:[#allocation5 + $0x150] sm:$0xff]
        %v1130 = vld [vmem:[#allocation5 + $0x158] sm:$0xff]
        %v1131 = vld [vmem:[#allocation5 + $0x160] sm:$0xff]
        %v1132 = vld [vmem:[#allocation5 + $0x168] sm:$0xff]
        %v1133 = vld [vmem:[#allocation5 + $0x170] sm:$0xff]
        %v1134 = vld [vmem:[#allocation5 + $0x178] sm:$0xff]
        %v1135 = vld [vmem:[#allocation5 + $0x180] sm:$0xff]
        %v1136 = vld [vmem:[#allocation5 + $0x188] sm:$0xff]
        %v1137 = vld [vmem:[#allocation5 + $0x190] sm:$0xff]
        %v1138 = vld [vmem:[#allocation5 + $0x198] sm:$0xff]
        %v1139 = vld [vmem:[#allocation5 + $0x1a0] sm:$0xff]
        %v1140 = vld [vmem:[#allocation5 + $0x1a8] sm:$0xff]
        %v1141 = vld [vmem:[#allocation5 + $0x1b0] sm:$0xff]
        %v1142 = vld [vmem:[#allocation5 + $0x1b8] sm:$0xff]
        %v1143 = vld [vmem:[#allocation5 + $0x1c0] sm:$0xff]
        %v1144 = vld [vmem:[#allocation5 + $0x1c8] sm:$0xff]
        %v1145 = vld [vmem:[#allocation5 + $0x1d0] sm:$0xff]
        %v1146 = vld [vmem:[#allocation5 + $0x1d8] sm:$0xff]
        %v1147 = vld [vmem:[#allocation5 + $0x1e0] sm:$0xff]
        %v1148 = vld [vmem:[#allocation5 + $0x1e8] sm:$0xff]
        %v1149 = vld [vmem:[#allocation5 + $0x1f0] sm:$0xff]
        %v1150 = vld [vmem:[#allocation5 + $0x1f8] sm:$0xff]
        %v1151 = vld [vmem:[#allocation5 + $0x200] sm:$0xff]
        %v1152 = vld [vmem:[#allocation5 + $0x208] sm:$0xff]
        %v1153 = vld [vmem:[#allocation5 + $0x210] sm:$0xff]
        %v1154 = vld [vmem:[#allocation5 + $0x218] sm:$0xff]
        %v1155 = vld [vmem:[#allocation5 + $0x220] sm:$0xff]
        %v1156 = vld [vmem:[#allocation5 + $0x228] sm:$0xff]
        %v1157 = vld [vmem:[#allocation5 + $0x230] sm:$0xff]
        %v1158 = vld [vmem:[#allocation5 + $0x238] sm:$0xff]
        %v1159 = vld [vmem:[#allocation5 + $0x240] sm:$0xff]
        %v1160 = vld [vmem:[#allocation5 + $0x248] sm:$0xff]
        %v1161 = vld [vmem:[#allocation5 + $0x250] sm:$0xff]
        %v1162 = vld [vmem:[#allocation5 + $0x258] sm:$0xff]
        %v1163 = vld [vmem:[#allocation5 + $0x260] sm:$0xff]
        %v1164 = vld [vmem:[#allocation5 + $0x268] sm:$0xff]
        %v1165 = vld [vmem:[#allocation5 + $0x270] sm:$0xff]
        %v1166 = vld [vmem:[#allocation5 + $0x278] sm:$0xff]
        %v1167 = vld [vmem:[#allocation5 + $0x280] sm:$0xff]
        %v1168 = vld [vmem:[#allocation5 + $0x288] sm:$0xff]
        %v1169 = vld [vmem:[#allocation5 + $0x290] sm:$0xff]
        %v1170 = vld [vmem:[#allocation5 + $0x298] sm:$0xff]
        %v1171 = vld [vmem:[#allocation5 + $0x2a0] sm:$0xff]
        %v1172 = vld [vmem:[#allocation5 + $0x2a8] sm:$0xff]
        %v1173 = vld [vmem:[#allocation5 + $0x2b0] sm:$0xff]
        %v1174 = vld [vmem:[#allocation5 + $0x2b8] sm:$0xff]
        %v1175 = vld [vmem:[#allocation5 + $0x2c0] sm:$0xff]
        %v1176 = vld [vmem:[#allocation5 + $0x2c8] sm:$0xff]
        %v1177 = vld [vmem:[#allocation5 + $0x2d0] sm:$0xff]
        %v1178 = vld [vmem:[#allocation5 + $0x2d8] sm:$0xff]
        %v1179 = vld [vmem:[#allocation5 + $0x2e0] sm:$0xff]
        %v1180 = vld [vmem:[#allocation5 + $0x2e8] sm:$0xff]
        %v1181 = vld [vmem:[#allocation5 + $0x2f0] sm:$0xff]
        %v1182 = vld [vmem:[#allocation5 + $0x2f8] sm:$0xff]
        %v1183 = vld [vmem:[#allocation5 + $0x300] sm:$0xff]
        %v1184 = vld [vmem:[#allocation5 + $0x308] sm:$0xff]
        %v1185 = vld [vmem:[#allocation5 + $0x310] sm:$0xff]
        %v1186 = vld [vmem:[#allocation5 + $0x318] sm:$0xff]
        %v1187 = vld [vmem:[#allocation5 + $0x320] sm:$0xff]
        %v1188 = vld [vmem:[#allocation5 + $0x328] sm:$0xff]
        %v1189 = vld [vmem:[#allocation5 + $0x330] sm:$0xff]
        %v1190 = vld [vmem:[#allocation5 + $0x338] sm:$0xff]
        %v1191 = vld [vmem:[#allocation5 + $0x340] sm:$0xff]
        %v1192 = vld [vmem:[#allocation5 + $0x348] sm:$0xff]
        %v1193 = vld [vmem:[#allocation5 + $0x350] sm:$0xff]
        %v1194 = vld [vmem:[#allocation5 + $0x358] sm:$0xff]
        %v1195 = vld [vmem:[#allocation5 + $0x360] sm:$0xff]
        %v1196 = vld [vmem:[#allocation5 + $0x368] sm:$0xff]
        %v1197 = vld [vmem:[#allocation5 + $0x370] sm:$0xff]
        %v1198 = vld [vmem:[#allocation5 + $0x378] sm:$0xff]
        %v1199 = vld [vmem:[#allocation5 + $0x380] sm:$0xff]
        %v1200 = vld [vmem:[#allocation5 + $0x388] sm:$0xff]
        %v1201 = vld [vmem:[#allocation5 + $0x390] sm:$0xff]
        %v1202 = vld [vmem:[#allocation5 + $0x398] sm:$0xff]
        %v1203 = vld [vmem:[#allocation5 + $0x3a0] sm:$0xff]
        %v1204 = vld [vmem:[#allocation5 + $0x3a8] sm:$0xff]
        %v1205 = vld [vmem:[#allocation5 + $0x3b0] sm:$0xff]
        %v1206 = vld [vmem:[#allocation5 + $0x3b8] sm:$0xff]
        %v1207 = vld [vmem:[#allocation5 + $0x3c0] sm:$0xff]
        %v1208 = vld [vmem:[#allocation5 + $0x3c8] sm:$0xff]
        %v1209 = vld [vmem:[#allocation5 + $0x3d0] sm:$0xff]
        %v1210 = vld [vmem:[#allocation5 + $0x3d8] sm:$0xff]
        %v1211 = vld [vmem:[#allocation5 + $0x3e0] sm:$0xff]
        %v1212 = vld [vmem:[#allocation5 + $0x3e8] sm:$0xff]
        %v1213 = vld [vmem:[#allocation5 + $0x3f0] sm:$0xff]
        %v1214 = vld [vmem:[#allocation5 + $0x3f8] sm:$0xff]
        %v1215 = vld [vmem:[#allocation5 + $0x400] sm:$0xff]
        %v1216 = vld [vmem:[#allocation5 + $0x408] sm:$0xff]
        %v1217 = vld [vmem:[#allocation5 + $0x410] sm:$0xff]
        %v1218 = vld [vmem:[#allocation5 + $0x418] sm:$0xff]
        %v1219 = vld [vmem:[#allocation5 + $0x420] sm:$0xff]
        %v1220 = vld [vmem:[#allocation5 + $0x428] sm:$0xff]
        %v1221 = vld [vmem:[#allocation5 + $0x430] sm:$0xff]
        %v1222 = vld [vmem:[#allocation5 + $0x438] sm:$0xff]
        %v1223 = vld [vmem:[#allocation5 + $0x440] sm:$0xff]
        %v1224 = vld [vmem:[#allocation5 + $0x448] sm:$0xff]
        %v1225 = vld [vmem:[#allocation5 + $0x450] sm:$0xff]
        %v1226 = vld [vmem:[#allocation5 + $0x458] sm:$0xff]
        %v1227 = vld [vmem:[#allocation5 + $0x460] sm:$0xff]
        %v1228 = vld [vmem:[#allocation5 + $0x468] sm:$0xff]
        %v1229 = vld [vmem:[#allocation5 + $0x470] sm:$0xff]
        %v1230 = vld [vmem:[#allocation5 + $0x478] sm:$0xff]
        %v1231 = vld [vmem:[#allocation5 + $0x480] sm:$0xff]
        %v1232 = vld [vmem:[#allocation5 + $0x488] sm:$0xff]
        %v1233 = vld [vmem:[#allocation5 + $0x490] sm:$0xff]
        %v1234 = vld [vmem:[#allocation5 + $0x498] sm:$0xff]
        %v1235 = vld [vmem:[#allocation5 + $0x4a0] sm:$0xff]
        %v1236 = vld [vmem:[#allocation5 + $0x4a8] sm:$0xff]
        %v1237 = vld [vmem:[#allocation5 + $0x4b0] sm:$0xff]
        %v1238 = vld [vmem:[#allocation5 + $0x4b8] sm:$0xff]
        %v1239 = vld [vmem:[#allocation5 + $0x4c0] sm:$0xff]
        %v1240 = vld [vmem:[#allocation5 + $0x4c8] sm:$0xff]
        %v1241 = vld [vmem:[#allocation5 + $0x4d0] sm:$0xff]
        %v1242 = vld [vmem:[#allocation5 + $0x4d8] sm:$0xff]
        %v1243 = vld [vmem:[#allocation5 + $0x4e0] sm:$0xff]
        %v1244 = vld [vmem:[#allocation5 + $0x4e8] sm:$0xff]
        %v1245 = vld [vmem:[#allocation5 + $0x4f0] sm:$0xff]
        %v1246 = vld [vmem:[#allocation5 + $0x4f8] sm:$0xff]
        %v1247 = vld [vmem:[%s2] sm:$0x1]
        %v1249 = vlaneseq
        %v1250 = vshrl.u32 %v1249, 7
        %v1251 = vsub.s32 0, %v1250
        %v1252 = vrot.slane %v1247, %v1251
        %vm1334 = vcmask 1041409
        %v1335 = vsel %vm1334, %v1017, %v1007
        %vm1336 = vcmask 1042434
        %v1337 = vsel %vm1336, %v1027, %v1335
        %vm1338 = vcmask 1043459
        %v1339 = vsel %vm1338, %v1037, %v1337
        %vm1340 = vcmask 1044484
        %v1341 = vsel %vm1340, %v1047, %v1339
        %vm1342 = vcmask 1045509
        %v1343 = vsel %vm1342, %v1057, %v1341
        %vm1344 = vcmask 1046534
        %v1345 = vsel %vm1344, %v1067, %v1343
        %vm1346 = vcmask 1047559
        %v1347 = vsel %vm1346, %v1077, %v1345
        %v1348 = vsel %vm1334, %v1018, %v1008
        %v1349 = vsel %vm1336, %v1028, %v1348
        %v1350 = vsel %vm1338, %v1038, %v1349
        %v1351 = vsel %vm1340, %v1048, %v1350
        %v1352 = vsel %vm1342, %v1058, %v1351
        %v1353 = vsel %vm1344, %v1068, %v1352
        %v1354 = vsel %vm1346, %v1078, %v1353
        %v1355 = vsel %vm1334, %v1019, %v1009
        %v1356 = vsel %vm1336, %v1029, %v1355
        %v1357 = vsel %vm1338, %v1039, %v1356
        %v1358 = vsel %vm1340, %v1049, %v1357
        %v1359 = vsel %vm1342, %v1059, %v1358
        %v1360 = vsel %vm1344, %v1069, %v1359
        %v1361 = vsel %vm1346, %v1079, %v1360
        %v1362 = vsel %vm1334, %v1020, %v1010
        %v1363 = vsel %vm1336, %v1030, %v1362
        %v1364 = vsel %vm1338, %v1040, %v1363
        %v1365 = vsel %vm1340, %v1050, %v1364
        %v1366 = vsel %vm1342, %v1060, %v1365
        %v1367 = vsel %vm1344, %v1070, %v1366
        %v1368 = vsel %vm1346, %v1080, %v1367
        %v1369 = vsel %vm1334, %v1021, %v1011
        %v1370 = vsel %vm1336, %v1031, %v1369
        %v1371 = vsel %vm1338, %v1041, %v1370
        %v1372 = vsel %vm1340, %v1051, %v1371
        %v1373 = vsel %vm1342, %v1061, %v1372
        %v1374 = vsel %vm1344, %v1071, %v1373
        %v1375 = vsel %vm1346, %v1081, %v1374
        %v1376 = vsel %vm1334, %v1022, %v1012
        %v1377 = vsel %vm1336, %v1032, %v1376
        %v1378 = vsel %vm1338, %v1042, %v1377
        %v1379 = vsel %vm1340, %v1052, %v1378
        %v1380 = vsel %vm1342, %v1062, %v1379
        %v1381 = vsel %vm1344, %v1072, %v1380
        %v1382 = vsel %vm1346, %v1082, %v1381
        %v1383 = vsel %vm1334, %v1023, %v1013
        %v1384 = vsel %vm1336, %v1033, %v1383
        %v1385 = vsel %vm1338, %v1043, %v1384
        %v1386 = vsel %vm1340, %v1053, %v1385
        %v1387 = vsel %vm1342, %v1063, %v1386
        %v1388 = vsel %vm1344, %v1073, %v1387
        %v1389 = vsel %vm1346, %v1083, %v1388
        %v1390 = vsel %vm1334, %v1024, %v1014
        %v1391 = vsel %vm1336, %v1034, %v1390
        %v1392 = vsel %vm1338, %v1044, %v1391
        %v1393 = vsel %vm1340, %v1054, %v1392
        %v1394 = vsel %vm1342, %v1064, %v1393
        %v1395 = vsel %vm1344, %v1074, %v1394
        %v1396 = vsel %vm1346, %v1084, %v1395
        %v1397 = vsel %vm1334, %v1025, %v1015
        %v1398 = vsel %vm1336, %v1035, %v1397
        %v1399 = vsel %vm1338, %v1045, %v1398
        %v1400 = vsel %vm1340, %v1055, %v1399
        %v1401 = vsel %vm1342, %v1065, %v1400
        %v1402 = vsel %vm1344, %v1075, %v1401
        %v1403 = vsel %vm1346, %v1085, %v1402
        %v1404 = vsel %vm1334, %v1026, %v1016
        %v1405 = vsel %vm1336, %v1036, %v1404
        %v1406 = vsel %vm1338, %v1046, %v1405
        %v1407 = vsel %vm1340, %v1056, %v1406
        %v1408 = vsel %vm1342, %v1066, %v1407
        %v1409 = vsel %vm1344, %v1076, %v1408
        %v1410 = vsel %vm1346, %v1086, %v1409
        %1421 = vmatprep.subr.mxu0 0.0
        %v1422 = vand.u32 %v1087, 4294901760
        %1423 = vmatpush1.msra.mxu0 %v1422
        %1424 = vmatprep.subr.mxu0 0.0
        %v1425 = vand.u32 %v1088, 4294901760
        %1426 = vmatpush1.msra.mxu0 %v1425
        %1427 = vmatprep.subr.mxu0 0.0
        %v1428 = vand.u32 %v1089, 4294901760
        %1429 = vmatpush1.msra.mxu0 %v1428
        %1430 = vmatprep.subr.mxu0 0.0
        %v1431 = vand.u32 %v1090, 4294901760
        %1432 = vmatpush1.msra.mxu0 %v1431
        %1433 = vmatprep.subr.mxu0 0.0
        %v1434 = vand.u32 %v1091, 4294901760
        %1435 = vmatpush1.msra.mxu0 %v1434
        %1436 = vmatprep.subr.mxu0 0.0
        %v1437 = vand.u32 %v1092, 4294901760
        %1438 = vmatpush1.msra.mxu0 %v1437
        %1439 = vmatprep.subr.mxu0 0.0
        %v1440 = vand.u32 %v1093, 4294901760
        %1441 = vmatpush1.msra.mxu0 %v1440
        %1442 = vmatprep.subr.mxu0 0.0
        %v1443 = vand.u32 %v1094, 4294901760
        %1444 = vmatpush1.msra.mxu0 %v1443
        %1445 = vmatprep.subr.mxu0 0.0
        %v1446 = vand.u32 %v1095, 4294901760
        %1447 = vmatpush1.msra.mxu0 %v1446
        %1448 = vmatprep.subr.mxu0 0.0
        %v1449 = vand.u32 %v1096, 4294901760
        %1450 = vmatpush1.msra.mxu0 %v1449
        %1451 = vmatprep.subr.mxu0 0.0
        %v1452 = vand.u32 %v1097, 4294901760
        %1453 = vmatpush1.msra.mxu0 %v1452
        %1454 = vmatprep.subr.mxu0 0.0
        %v1455 = vand.u32 %v1098, 4294901760
        %1456 = vmatpush1.msra.mxu0 %v1455
        %1457 = vmatprep.subr.mxu0 0.0
        %v1458 = vand.u32 %v1099, 4294901760
        %1459 = vmatpush1.msra.mxu0 %v1458
        %1460 = vmatprep.subr.mxu0 0.0
        %v1461 = vand.u32 %v1100, 4294901760
        %1462 = vmatpush1.msra.mxu0 %v1461
        %1463 = vmatprep.subr.mxu0 0.0
        %v1464 = vand.u32 %v1101, 4294901760
        %1465 = vmatpush1.msra.mxu0 %v1464
        %1466 = vmatprep.subr.mxu0 0.0
        %v1467 = vand.u32 %v1102, 4294901760
        %1468 = vmatpush1.msra.mxu0 %v1467
        %1469 = vmatprep.subr.mxu0 0.0
        %v1470 = vand.u32 %v1103, 4294901760
        %1471 = vmatpush1.msra.mxu0 %v1470
        %1472 = vmatprep.subr.mxu0 0.0
        %v1473 = vand.u32 %v1104, 4294901760
        %1474 = vmatpush1.msra.mxu0 %v1473
        %1475 = vmatprep.subr.mxu0 0.0
        %v1476 = vand.u32 %v1105, 4294901760
        %1477 = vmatpush1.msra.mxu0 %v1476
        %1478 = vmatprep.subr.mxu0 0.0
        %v1479 = vand.u32 %v1106, 4294901760
        %1480 = vmatpush1.msra.mxu0 %v1479
        %1481 = vmatprep.subr.mxu0 0.0
        %v1482 = vand.u32 %v1107, 4294901760
        %1483 = vmatpush1.msra.mxu0 %v1482
        %1484 = vmatprep.subr.mxu0 0.0
        %v1485 = vand.u32 %v1108, 4294901760
        %1486 = vmatpush1.msra.mxu0 %v1485
        %1487 = vmatprep.subr.mxu0 0.0
        %v1488 = vand.u32 %v1109, 4294901760
        %1489 = vmatpush1.msra.mxu0 %v1488
        %1490 = vmatprep.subr.mxu0 0.0
        %v1491 = vand.u32 %v1110, 4294901760
        %1492 = vmatpush1.msra.mxu0 %v1491
        %1493 = vmatprep.subr.mxu0 0.0
        %v1494 = vand.u32 %v1111, 4294901760
        %1495 = vmatpush1.msra.mxu0 %v1494
        %1496 = vmatprep.subr.mxu0 0.0
        %v1497 = vand.u32 %v1112, 4294901760
        %1498 = vmatpush1.msra.mxu0 %v1497
        %1499 = vmatprep.subr.mxu0 0.0
        %v1500 = vand.u32 %v1113, 4294901760
        %1501 = vmatpush1.msra.mxu0 %v1500
        %1502 = vmatprep.subr.mxu0 0.0
        %v1503 = vand.u32 %v1114, 4294901760
        %1504 = vmatpush1.msra.mxu0 %v1503
        %1505 = vmatprep.subr.mxu0 0.0
        %v1506 = vand.u32 %v1115, 4294901760
        %1507 = vmatpush1.msra.mxu0 %v1506
        %1508 = vmatprep.subr.mxu0 0.0
        %v1509 = vand.u32 %v1116, 4294901760
        %1510 = vmatpush1.msra.mxu0 %v1509
        %1511 = vmatprep.subr.mxu0 0.0
        %v1512 = vand.u32 %v1117, 4294901760
        %1513 = vmatpush1.msra.mxu0 %v1512
        %1514 = vmatprep.subr.mxu0 0.0
        %v1515 = vand.u32 %v1118, 4294901760
        %1516 = vmatpush1.msra.mxu0 %v1515
        %v1517 = vand.u32 %v1354, 4294901760
        %v1518 = vsub.f32 %v1354, %v1517
        %v1519 = vand.u32 %v1518, 4294901760
        %v1520 = vsub.f32 %v1518, %v1519
        %v1521 = vand.u32 %v1520, 4294901760
        %1522 = vmatprep.mubr.f32.mxu0 %v1521
        %v1523 = vand.u32 %v1347, 4294901760
        %v1524 = vsub.f32 %v1347, %v1523
        %v1525 = vand.u32 %v1524, 4294901760
        %v1526 = vsub.f32 %v1524, %v1525
        %v1527 = vand.u32 %v1526, 4294901760
        %1528 = vmatmul.mubr.f32.gmra.mrb[0].mxu0 %v1527
        %v1529 = vpop.f32.mrb[0].mxu0
        %v1530 = vadd.f32 %v1252, %v1529
        %v1531 = vpop.f32.mrb[0].mxu0
        %1532 = vdwg.mxu0
        %1533 = vmatprep.subr.mxu0 0.0
        %v1534 = vand.u32 %v1087, 4294901760
        %v1535 = vsub.f32 %v1087, %v1534
        %v1536 = vand.u32 %v1535, 4294901760
        %v1537 = vsub.f32 %v1535, %v1536
        %v1538 = vand.u32 %v1537, 4294901760
        %1539 = vmatpush1.msra.mxu0 %v1538
        %1540 = vmatprep.subr.mxu0 0.0
        %v1541 = vand.u32 %v1088, 4294901760
        %v1542 = vsub.f32 %v1088, %v1541
        %v1543 = vand.u32 %v1542, 4294901760
        %v1544 = vsub.f32 %v1542, %v1543
        %v1545 = vand.u32 %v1544, 4294901760
        %1546 = vmatpush1.msra.mxu0 %v1545
        %1547 = vmatprep.subr.mxu0 0.0
        %v1548 = vand.u32 %v1089, 4294901760
        %v1549 = vsub.f32 %v1089, %v1548
        %v1550 = vand.u32 %v1549, 4294901760
        %v1551 = vsub.f32 %v1549, %v1550
        %v1552 = vand.u32 %v1551, 4294901760
        %1553 = vmatpush1.msra.mxu0 %v1552
        %1554 = vmatprep.subr.mxu0 0.0
        %v1555 = vand.u32 %v1090, 4294901760
        %v1556 = vsub.f32 %v1090, %v1555
        %v1557 = vand.u32 %v1556, 4294901760
        %v1558 = vsub.f32 %v1556, %v1557
        %v1559 = vand.u32 %v1558, 4294901760
        %1560 = vmatpush1.msra.mxu0 %v1559
        %1561 = vmatprep.subr.mxu0 0.0
        %v1562 = vand.u32 %v1091, 4294901760
        %v1563 = vsub.f32 %v1091, %v1562
        %v1564 = vand.u32 %v1563, 4294901760
        %v1565 = vsub.f32 %v1563, %v1564
        %v1566 = vand.u32 %v1565, 4294901760
        %1567 = vmatpush1.msra.mxu0 %v1566
        %1568 = vmatprep.subr.mxu0 0.0
        %v1569 = vand.u32 %v1092, 4294901760
        %v1570 = vsub.f32 %v1092, %v1569
        %v1571 = vand.u32 %v1570, 4294901760
        %v1572 = vsub.f32 %v1570, %v1571
        %v1573 = vand.u32 %v1572, 4294901760
        %1574 = vmatpush1.msra.mxu0 %v1573
        %1575 = vmatprep.subr.mxu0 0.0
        %v1576 = vand.u32 %v1093, 4294901760
        %v1577 = vsub.f32 %v1093, %v1576
        %v1578 = vand.u32 %v1577, 4294901760
        %v1579 = vsub.f32 %v1577, %v1578
        %v1580 = vand.u32 %v1579, 4294901760
        %1581 = vmatpush1.msra.mxu0 %v1580
        %1582 = vmatprep.subr.mxu0 0.0
        %v1583 = vand.u32 %v1094, 4294901760
        %v1584 = vsub.f32 %v1094, %v1583
        %v1585 = vand.u32 %v1584, 4294901760
        %v1586 = vsub.f32 %v1584, %v1585
        %v1587 = vand.u32 %v1586, 4294901760
        %1588 = vmatpush1.msra.mxu0 %v1587
        %1589 = vmatprep.subr.mxu0 0.0
        %v1590 = vand.u32 %v1095, 4294901760
        %v1591 = vsub.f32 %v1095, %v1590
        %v1592 = vand.u32 %v1591, 4294901760
        %v1593 = vsub.f32 %v1591, %v1592
        %v1594 = vand.u32 %v1593, 4294901760
        %1595 = vmatpush1.msra.mxu0 %v1594
        %1596 = vmatprep.subr.mxu0 0.0
        %v1597 = vand.u32 %v1096, 4294901760
        %v1598 = vsub.f32 %v1096, %v1597
        %v1599 = vand.u32 %v1598, 4294901760
        %v1600 = vsub.f32 %v1598, %v1599
        %v1601 = vand.u32 %v1600, 4294901760
        %1602 = vmatpush1.msra.mxu0 %v1601
        %1603 = vmatprep.subr.mxu0 0.0
        %v1604 = vand.u32 %v1097, 4294901760
        %v1605 = vsub.f32 %v1097, %v1604
        %v1606 = vand.u32 %v1605, 4294901760
        %v1607 = vsub.f32 %v1605, %v1606
        %v1608 = vand.u32 %v1607, 4294901760
        %1609 = vmatpush1.msra.mxu0 %v1608
        %1610 = vmatprep.subr.mxu0 0.0
        %v1611 = vand.u32 %v1098, 4294901760
        %v1612 = vsub.f32 %v1098, %v1611
        %v1613 = vand.u32 %v1612, 4294901760
        %v1614 = vsub.f32 %v1612, %v1613
        %v1615 = vand.u32 %v1614, 4294901760
        %1616 = vmatpush1.msra.mxu0 %v1615
        %1617 = vmatprep.subr.mxu0 0.0
        %v1618 = vand.u32 %v1099, 4294901760
        %v1619 = vsub.f32 %v1099, %v1618
        %v1620 = vand.u32 %v1619, 4294901760
        %v1621 = vsub.f32 %v1619, %v1620
        %v1622 = vand.u32 %v1621, 4294901760
        %1623 = vmatpush1.msra.mxu0 %v1622
        %1624 = vmatprep.subr.mxu0 0.0
        %v1625 = vand.u32 %v1100, 4294901760
        %v1626 = vsub.f32 %v1100, %v1625
        %v1627 = vand.u32 %v1626, 4294901760
        %v1628 = vsub.f32 %v1626, %v1627
        %v1629 = vand.u32 %v1628, 4294901760
        %1630 = vmatpush1.msra.mxu0 %v1629
        %1631 = vmatprep.subr.mxu0 0.0
        %v1632 = vand.u32 %v1101, 4294901760
        %v1633 = vsub.f32 %v1101, %v1632
        %v1634 = vand.u32 %v1633, 4294901760
        %v1635 = vsub.f32 %v1633, %v1634
        %v1636 = vand.u32 %v1635, 4294901760
        %1637 = vmatpush1.msra.mxu0 %v1636
        %1638 = vmatprep.subr.mxu0 0.0
        %v1639 = vand.u32 %v1102, 4294901760
        %v1640 = vsub.f32 %v1102, %v1639
        %v1641 = vand.u32 %v1640, 4294901760
        %v1642 = vsub.f32 %v1640, %v1641
        %v1643 = vand.u32 %v1642, 4294901760
        %1644 = vmatpush1.msra.mxu0 %v1643
        %1645 = vmatprep.subr.mxu0 0.0
        %v1646 = vand.u32 %v1103, 4294901760
        %v1647 = vsub.f32 %v1103, %v1646
        %v1648 = vand.u32 %v1647, 4294901760
        %v1649 = vsub.f32 %v1647, %v1648
        %v1650 = vand.u32 %v1649, 4294901760
        %1651 = vmatpush1.msra.mxu0 %v1650
        %1652 = vmatprep.subr.mxu0 0.0
        %v1653 = vand.u32 %v1104, 4294901760
        %v1654 = vsub.f32 %v1104, %v1653
        %v1655 = vand.u32 %v1654, 4294901760
        %v1656 = vsub.f32 %v1654, %v1655
        %v1657 = vand.u32 %v1656, 4294901760
        %1658 = vmatpush1.msra.mxu0 %v1657
        %1659 = vmatprep.subr.mxu0 0.0
        %v1660 = vand.u32 %v1105, 4294901760
        %v1661 = vsub.f32 %v1105, %v1660
        %v1662 = vand.u32 %v1661, 4294901760
        %v1663 = vsub.f32 %v1661, %v1662
        %v1664 = vand.u32 %v1663, 4294901760
        %1665 = vmatpush1.msra.mxu0 %v1664
        %1666 = vmatprep.subr.mxu0 0.0
        %v1667 = vand.u32 %v1106, 4294901760
        %v1668 = vsub.f32 %v1106, %v1667
        %v1669 = vand.u32 %v1668, 4294901760
        %v1670 = vsub.f32 %v1668, %v1669
        %v1671 = vand.u32 %v1670, 4294901760
        %1672 = vmatpush1.msra.mxu0 %v1671
        %1673 = vmatprep.subr.mxu0 0.0
        %v1674 = vand.u32 %v1107, 4294901760
        %v1675 = vsub.f32 %v1107, %v1674
        %v1676 = vand.u32 %v1675, 4294901760
        %v1677 = vsub.f32 %v1675, %v1676
        %v1678 = vand.u32 %v1677, 4294901760
        %1679 = vmatpush1.msra.mxu0 %v1678
        %1680 = vmatprep.subr.mxu0 0.0
        %v1681 = vand.u32 %v1108, 4294901760
        %v1682 = vsub.f32 %v1108, %v1681
        %v1683 = vand.u32 %v1682, 4294901760
        %v1684 = vsub.f32 %v1682, %v1683
        %v1685 = vand.u32 %v1684, 4294901760
        %1686 = vmatpush1.msra.mxu0 %v1685
        %1687 = vmatprep.subr.mxu0 0.0
        %v1688 = vand.u32 %v1109, 4294901760
        %v1689 = vsub.f32 %v1109, %v1688
        %v1690 = vand.u32 %v1689, 4294901760
        %v1691 = vsub.f32 %v1689, %v1690
        %v1692 = vand.u32 %v1691, 4294901760
        %1693 = vmatpush1.msra.mxu0 %v1692
        %1694 = vmatprep.subr.mxu0 0.0
        %v1695 = vand.u32 %v1110, 4294901760
        %v1696 = vsub.f32 %v1110, %v1695
        %v1697 = vand.u32 %v1696, 4294901760
        %v1698 = vsub.f32 %v1696, %v1697
        %v1699 = vand.u32 %v1698, 4294901760
        %1700 = vmatpush1.msra.mxu0 %v1699
        %1701 = vmatprep.subr.mxu0 0.0
        %v1702 = vand.u32 %v1111, 4294901760
        %v1703 = vsub.f32 %v1111, %v1702
        %v1704 = vand.u32 %v1703, 4294901760
        %v1705 = vsub.f32 %v1703, %v1704
        %v1706 = vand.u32 %v1705, 4294901760
        %1707 = vmatpush1.msra.mxu0 %v1706
        %1708 = vmatprep.subr.mxu0 0.0
        %v1709 = vand.u32 %v1112, 4294901760
        %v1710 = vsub.f32 %v1112, %v1709
        %v1711 = vand.u32 %v1710, 4294901760
        %v1712 = vsub.f32 %v1710, %v1711
        %v1713 = vand.u32 %v1712, 4294901760
        %1714 = vmatpush1.msra.mxu0 %v1713
        %1715 = vmatprep.subr.mxu0 0.0
        %v1716 = vand.u32 %v1113, 4294901760
        %v1717 = vsub.f32 %v1113, %v1716
        %v1718 = vand.u32 %v1717, 4294901760
        %v1719 = vsub.f32 %v1717, %v1718
        %v1720 = vand.u32 %v1719, 4294901760
        %1721 = vmatpush1.msra.mxu0 %v1720
        %1722 = vmatprep.subr.mxu0 0.0
        %v1723 = vand.u32 %v1114, 4294901760
        %v1724 = vsub.f32 %v1114, %v1723
        %v1725 = vand.u32 %v1724, 4294901760
        %v1726 = vsub.f32 %v1724, %v1725
        %v1727 = vand.u32 %v1726, 4294901760
        %1728 = vmatpush1.msra.mxu0 %v1727
        %1729 = vmatprep.subr.mxu0 0.0
        %v1730 = vand.u32 %v1115, 4294901760
        %v1731 = vsub.f32 %v1115, %v1730
        %v1732 = vand.u32 %v1731, 4294901760
        %v1733 = vsub.f32 %v1731, %v1732
        %v1734 = vand.u32 %v1733, 4294901760
        %1735 = vmatpush1.msra.mxu0 %v1734
        %1736 = vmatprep.subr.mxu0 0.0
        %v1737 = vand.u32 %v1116, 4294901760
        %v1738 = vsub.f32 %v1116, %v1737
        %v1739 = vand.u32 %v1738, 4294901760
        %v1740 = vsub.f32 %v1738, %v1739
        %v1741 = vand.u32 %v1740, 4294901760
        %1742 = vmatpush1.msra.mxu0 %v1741
        %1743 = vmatprep.subr.mxu0 0.0
        %v1744 = vand.u32 %v1117, 4294901760
        %v1745 = vsub.f32 %v1117, %v1744
        %v1746 = vand.u32 %v1745, 4294901760
        %v1747 = vsub.f32 %v1745, %v1746
        %v1748 = vand.u32 %v1747, 4294901760
        %1749 = vmatpush1.msra.mxu0 %v1748
        %1750 = vmatprep.subr.mxu0 0.0
        %v1751 = vand.u32 %v1118, 4294901760
        %v1752 = vsub.f32 %v1118, %v1751
        %v1753 = vand.u32 %v1752, 4294901760
        %v1754 = vsub.f32 %v1752, %v1753
        %v1755 = vand.u32 %v1754, 4294901760
        %1756 = vmatpush1.msra.mxu0 %v1755
        %v1757 = vand.u32 %v1354, 4294901760
        %1758 = vmatprep.mubr.f32.mxu0 %v1757
        %v1759 = vand.u32 %v1347, 4294901760
        %1760 = vmatmul.mubr.f32.gmra.mrb[0].mxu0 %v1759
        %v1761 = vpop.f32.mrb[0].mxu0
        %v1762 = vadd.f32 %v1530, %v1761
        %v1763 = vpop.f32.mrb[0].mxu0
        %1764 = vdwg.mxu0
        %1765 = vmatprep.subr.mxu0 0.0
        %v1766 = vand.u32 %v1087, 4294901760
        %v1767 = vsub.f32 %v1087, %v1766
        %1768 = vmatpush1.msra.mxu0 %v1767
        %1769 = vmatprep.subr.mxu0 0.0
        %v1770 = vand.u32 %v1088, 4294901760
        %v1771 = vsub.f32 %v1088, %v1770
        %1772 = vmatpush1.msra.mxu0 %v1771
        %1773 = vmatprep.subr.mxu0 0.0
        %v1774 = vand.u32 %v1089, 4294901760
        %v1775 = vsub.f32 %v1089, %v1774
        %1776 = vmatpush1.msra.mxu0 %v1775
        %1777 = vmatprep.subr.mxu0 0.0
        %v1778 = vand.u32 %v1090, 4294901760
        %v1779 = vsub.f32 %v1090, %v1778
        %1780 = vmatpush1.msra.mxu0 %v1779
        %1781 = vmatprep.subr.mxu0 0.0
        %v1782 = vand.u32 %v1091, 4294901760
        %v1783 = vsub.f32 %v1091, %v1782
        %1784 = vmatpush1.msra.mxu0 %v1783
        %1785 = vmatprep.subr.mxu0 0.0
        %v1786 = vand.u32 %v1092, 4294901760
        %v1787 = vsub.f32 %v1092, %v1786
        %1788 = vmatpush1.msra.mxu0 %v1787
        %1789 = vmatprep.subr.mxu0 0.0
        %v1790 = vand.u32 %v1093, 4294901760
        %v1791 = vsub.f32 %v1093, %v1790
        %1792 = vmatpush1.msra.mxu0 %v1791
        %1793 = vmatprep.subr.mxu0 0.0
        %v1794 = vand.u32 %v1094, 4294901760
        %v1795 = vsub.f32 %v1094, %v1794
        %1796 = vmatpush1.msra.mxu0 %v1795
        %1797 = vmatprep.subr.mxu0 0.0
        %v1798 = vand.u32 %v1095, 4294901760
        %v1799 = vsub.f32 %v1095, %v1798
        %1800 = vmatpush1.msra.mxu0 %v1799
        %1801 = vmatprep.subr.mxu0 0.0
        %v1802 = vand.u32 %v1096, 4294901760
        %v1803 = vsub.f32 %v1096, %v1802
        %1804 = vmatpush1.msra.mxu0 %v1803
        %1805 = vmatprep.subr.mxu0 0.0
        %v1806 = vand.u32 %v1097, 4294901760
        %v1807 = vsub.f32 %v1097, %v1806
        %1808 = vmatpush1.msra.mxu0 %v1807
        %1809 = vmatprep.subr.mxu0 0.0
        %v1810 = vand.u32 %v1098, 4294901760
        %v1811 = vsub.f32 %v1098, %v1810
        %1812 = vmatpush1.msra.mxu0 %v1811
        %1813 = vmatprep.subr.mxu0 0.0
        %v1814 = vand.u32 %v1099, 4294901760
        %v1815 = vsub.f32 %v1099, %v1814
        %1816 = vmatpush1.msra.mxu0 %v1815
        %1817 = vmatprep.subr.mxu0 0.0
        %v1818 = vand.u32 %v1100, 4294901760
        %v1819 = vsub.f32 %v1100, %v1818
        %1820 = vmatpush1.msra.mxu0 %v1819
        %1821 = vmatprep.subr.mxu0 0.0
        %v1822 = vand.u32 %v1101, 4294901760
        %v1823 = vsub.f32 %v1101, %v1822
        %1824 = vmatpush1.msra.mxu0 %v1823
        %1825 = vmatprep.subr.mxu0 0.0
        %v1826 = vand.u32 %v1102, 4294901760
        %v1827 = vsub.f32 %v1102, %v1826
        %1828 = vmatpush1.msra.mxu0 %v1827
        %1829 = vmatprep.subr.mxu0 0.0
        %v1830 = vand.u32 %v1103, 4294901760
        %v1831 = vsub.f32 %v1103, %v1830
        %1832 = vmatpush1.msra.mxu0 %v1831
        %1833 = vmatprep.subr.mxu0 0.0
        %v1834 = vand.u32 %v1104, 4294901760
        %v1835 = vsub.f32 %v1104, %v1834
        %1836 = vmatpush1.msra.mxu0 %v1835
        %1837 = vmatprep.subr.mxu0 0.0
        %v1838 = vand.u32 %v1105, 4294901760
        %v1839 = vsub.f32 %v1105, %v1838
        %1840 = vmatpush1.msra.mxu0 %v1839
        %1841 = vmatprep.subr.mxu0 0.0
        %v1842 = vand.u32 %v1106, 4294901760
        %v1843 = vsub.f32 %v1106, %v1842
        %1844 = vmatpush1.msra.mxu0 %v1843
        %1845 = vmatprep.subr.mxu0 0.0
        %v1846 = vand.u32 %v1107, 4294901760
        %v1847 = vsub.f32 %v1107, %v1846
        %1848 = vmatpush1.msra.mxu0 %v1847
        %1849 = vmatprep.subr.mxu0 0.0
        %v1850 = vand.u32 %v1108, 4294901760
        %v1851 = vsub.f32 %v1108, %v1850
        %1852 = vmatpush1.msra.mxu0 %v1851
        %1853 = vmatprep.subr.mxu0 0.0
        %v1854 = vand.u32 %v1109, 4294901760
        %v1855 = vsub.f32 %v1109, %v1854
        %1856 = vmatpush1.msra.mxu0 %v1855
        %1857 = vmatprep.subr.mxu0 0.0
        %v1858 = vand.u32 %v1110, 4294901760
        %v1859 = vsub.f32 %v1110, %v1858
        %1860 = vmatpush1.msra.mxu0 %v1859
        %1861 = vmatprep.subr.mxu0 0.0
        %v1862 = vand.u32 %v1111, 4294901760
        %v1863 = vsub.f32 %v1111, %v1862
        %1864 = vmatpush1.msra.mxu0 %v1863
        %1865 = vmatprep.subr.mxu0 0.0
        %v1866 = vand.u32 %v1112, 4294901760
        %v1867 = vsub.f32 %v1112, %v1866
        %1868 = vmatpush1.msra.mxu0 %v1867
        %1869 = vmatprep.subr.mxu0 0.0
        %v1870 = vand.u32 %v1113, 4294901760
        %v1871 = vsub.f32 %v1113, %v1870
        %1872 = vmatpush1.msra.mxu0 %v1871
        %1873 = vmatprep.subr.mxu0 0.0
        %v1874 = vand.u32 %v1114, 4294901760
        %v1875 = vsub.f32 %v1114, %v1874
        %1876 = vmatpush1.msra.mxu0 %v1875
        %1877 = vmatprep.subr.mxu0 0.0
        %v1878 = vand.u32 %v1115, 4294901760
        %v1879 = vsub.f32 %v1115, %v1878
        %1880 = vmatpush1.msra.mxu0 %v1879
        %1881 = vmatprep.subr.mxu0 0.0
        %v1882 = vand.u32 %v1116, 4294901760
        %v1883 = vsub.f32 %v1116, %v1882
        %1884 = vmatpush1.msra.mxu0 %v1883
        %1885 = vmatprep.subr.mxu0 0.0
        %v1886 = vand.u32 %v1117, 4294901760
        %v1887 = vsub.f32 %v1117, %v1886
        %1888 = vmatpush1.msra.mxu0 %v1887
        %1889 = vmatprep.subr.mxu0 0.0
        %v1890 = vand.u32 %v1118, 4294901760
        %v1891 = vsub.f32 %v1118, %v1890
        %1892 = vmatpush1.msra.mxu0 %v1891
        %v1893 = vand.u32 %v1354, 4294901760
        %v1894 = vsub.f32 %v1354, %v1893
        %1895 = vmatprep.mubr.f32.mxu0 %v1894
        %v1896 = vand.u32 %v1347, 4294901760
        %v1897 = vsub.f32 %v1347, %v1896
        %1898 = vmatmul.mubr.f32.gmra.mrb[0].mxu0 %v1897
        %v1899 = vpop.f32.mrb[0].mxu0
        %v1900 = vadd.f32 %v1762, %v1899
        %v1901 = vpop.f32.mrb[0].mxu0
        %1902 = vdwg.mxu0
        %1903 = vmatprep.subr.mxu0 0.0
        %v1904 = vand.u32 %v1087, 4294901760
        %1905 = vmatpush1.msra.mxu0 %v1904
        %1906 = vmatprep.subr.mxu0 0.0
        %v1907 = vand.u32 %v1088, 4294901760
        %1908 = vmatpush1.msra.mxu0 %v1907
        %1909 = vmatprep.subr.mxu0 0.0
        %v1910 = vand.u32 %v1089, 4294901760
        %1911 = vmatpush1.msra.mxu0 %v1910
        %1912 = vmatprep.subr.mxu0 0.0
        %v1913 = vand.u32 %v1090, 4294901760
        %1914 = vmatpush1.msra.mxu0 %v1913
        %1915 = vmatprep.subr.mxu0 0.0
        %v1916 = vand.u32 %v1091, 4294901760
        %1917 = vmatpush1.msra.mxu0 %v1916
        %1918 = vmatprep.subr.mxu0 0.0
        %v1919 = vand.u32 %v1092, 4294901760
        %1920 = vmatpush1.msra.mxu0 %v1919
        %1921 = vmatprep.subr.mxu0 0.0
        %v1922 = vand.u32 %v1093, 4294901760
        %1923 = vmatpush1.msra.mxu0 %v1922
        %1924 = vmatprep.subr.mxu0 0.0
        %v1925 = vand.u32 %v1094, 4294901760
        %1926 = vmatpush1.msra.mxu0 %v1925
        %1927 = vmatprep.subr.mxu0 0.0
        %v1928 = vand.u32 %v1095, 4294901760
        %1929 = vmatpush1.msra.mxu0 %v1928
        %1930 = vmatprep.subr.mxu0 0.0
        %v1931 = vand.u32 %v1096, 4294901760
        %1932 = vmatpush1.msra.mxu0 %v1931
        %1933 = vmatprep.subr.mxu0 0.0
        %v1934 = vand.u32 %v1097, 4294901760
        %1935 = vmatpush1.msra.mxu0 %v1934
        %1936 = vmatprep.subr.mxu0 0.0
        %v1937 = vand.u32 %v1098, 4294901760
        %1938 = vmatpush1.msra.mxu0 %v1937
        %1939 = vmatprep.subr.mxu0 0.0
        %v1940 = vand.u32 %v1099, 4294901760
        %1941 = vmatpush1.msra.mxu0 %v1940
        %1942 = vmatprep.subr.mxu0 0.0
        %v1943 = vand.u32 %v1100, 4294901760
        %1944 = vmatpush1.msra.mxu0 %v1943
        %1945 = vmatprep.subr.mxu0 0.0
        %v1946 = vand.u32 %v1101, 4294901760
        %1947 = vmatpush1.msra.mxu0 %v1946
        %1948 = vmatprep.subr.mxu0 0.0
        %v1949 = vand.u32 %v1102, 4294901760
        %1950 = vmatpush1.msra.mxu0 %v1949
        %1951 = vmatprep.subr.mxu0 0.0
        %v1952 = vand.u32 %v1103, 4294901760
        %1953 = vmatpush1.msra.mxu0 %v1952
        %1954 = vmatprep.subr.mxu0 0.0
        %v1955 = vand.u32 %v1104, 4294901760
        %1956 = vmatpush1.msra.mxu0 %v1955
        %1957 = vmatprep.subr.mxu0 0.0
        %v1958 = vand.u32 %v1105, 4294901760
        %1959 = vmatpush1.msra.mxu0 %v1958
        %1960 = vmatprep.subr.mxu0 0.0
        %v1961 = vand.u32 %v1106, 4294901760
        %1962 = vmatpush1.msra.mxu0 %v1961
        %1963 = vmatprep.subr.mxu0 0.0
        %v1964 = vand.u32 %v1107, 4294901760
        %1965 = vmatpush1.msra.mxu0 %v1964
        %1966 = vmatprep.subr.mxu0 0.0
        %v1967 = vand.u32 %v1108, 4294901760
        %1968 = vmatpush1.msra.mxu0 %v1967
        %1969 = vmatprep.subr.mxu0 0.0
        %v1970 = vand.u32 %v1109, 4294901760
        %1971 = vmatpush1.msra.mxu0 %v1970
        %1972 = vmatprep.subr.mxu0 0.0
        %v1973 = vand.u32 %v1110, 4294901760
        %1974 = vmatpush1.msra.mxu0 %v1973
        %1975 = vmatprep.subr.mxu0 0.0
        %v1976 = vand.u32 %v1111, 4294901760
        %1977 = vmatpush1.msra.mxu0 %v1976
        %1978 = vmatprep.subr.mxu0 0.0
        %v1979 = vand.u32 %v1112, 4294901760
        %1980 = vmatpush1.msra.mxu0 %v1979
        %1981 = vmatprep.subr.mxu0 0.0
        %v1982 = vand.u32 %v1113, 4294901760
        %1983 = vmatpush1.msra.mxu0 %v1982
        %1984 = vmatprep.subr.mxu0 0.0
        %v1985 = vand.u32 %v1114, 4294901760
        %1986 = vmatpush1.msra.mxu0 %v1985
        %1987 = vmatprep.subr.mxu0 0.0
        %v1988 = vand.u32 %v1115, 4294901760
        %1989 = vmatpush1.msra.mxu0 %v1988
        %1990 = vmatprep.subr.mxu0 0.0
        %v1991 = vand.u32 %v1116, 4294901760
        %1992 = vmatpush1.msra.mxu0 %v1991
        %1993 = vmatprep.subr.mxu0 0.0
        %v1994 = vand.u32 %v1117, 4294901760
        %1995 = vmatpush1.msra.mxu0 %v1994
        %1996 = vmatprep.subr.mxu0 0.0
        %v1997 = vand.u32 %v1118, 4294901760
        %1998 = vmatpush1.msra.mxu0 %v1997
        %v1999 = vand.u32 %v1354, 4294901760
        %v2000 = vsub.f32 %v1354, %v1999
        %v2001 = vand.u32 %v2000, 4294901760
        %2002 = vmatprep.mubr.f32.mxu0 %v2001
        %v2003 = vand.u32 %v1347, 4294901760
        %v2004 = vsub.f32 %v1347, %v2003
        %v2005 = vand.u32 %v2004, 4294901760
        %2006 = vmatmul.mubr.f32.gmra.mrb[0].mxu0 %v2005
        %v2007 = vpop.f32.mrb[0].mxu0
        %v2008 = vadd.f32 %v1900, %v2007
        %v2009 = vpop.f32.mrb[0].mxu0
        %2010 = vdwg.mxu0
        %2011 = vmatprep.subr.mxu0 0.0
        %v2012 = vand.u32 %v1087, 4294901760
        %v2013 = vsub.f32 %v1087, %v2012
        %v2014 = vand.u32 %v2013, 4294901760
        %2015 = vmatpush1.msra.mxu0 %v2014
        %2016 = vmatprep.subr.mxu0 0.0
        %v2017 = vand.u32 %v1088, 4294901760
        %v2018 = vsub.f32 %v1088, %v2017
        %v2019 = vand.u32 %v2018, 4294901760
        %2020 = vmatpush1.msra.mxu0 %v2019
        %2021 = vmatprep.subr.mxu0 0.0
        %v2022 = vand.u32 %v1089, 4294901760
        %v2023 = vsub.f32 %v1089, %v2022
        %v2024 = vand.u32 %v2023, 4294901760
        %2025 = vmatpush1.msra.mxu0 %v2024
        %2026 = vmatprep.subr.mxu0 0.0
        %v2027 = vand.u32 %v1090, 4294901760
        %v2028 = vsub.f32 %v1090, %v2027
        %v2029 = vand.u32 %v2028, 4294901760
        %2030 = vmatpush1.msra.mxu0 %v2029
        %2031 = vmatprep.subr.mxu0 0.0
        %v2032 = vand.u32 %v1091, 4294901760
        %v2033 = vsub.f32 %v1091, %v2032
        %v2034 = vand.u32 %v2033, 4294901760
        %2035 = vmatpush1.msra.mxu0 %v2034
        %2036 = vmatprep.subr.mxu0 0.0
        %v2037 = vand.u32 %v1092, 4294901760
        %v2038 = vsub.f32 %v1092, %v2037
        %v2039 = vand.u32 %v2038, 4294901760
        %2040 = vmatpush1.msra.mxu0 %v2039
        %2041 = vmatprep.subr.mxu0 0.0
        %v2042 = vand.u32 %v1093, 4294901760
        %v2043 = vsub.f32 %v1093, %v2042
        %v2044 = vand.u32 %v2043, 4294901760
        %2045 = vmatpush1.msra.mxu0 %v2044
        %2046 = vmatprep.subr.mxu0 0.0
        %v2047 = vand.u32 %v1094, 4294901760
        %v2048 = vsub.f32 %v1094, %v2047
        %v2049 = vand.u32 %v2048, 4294901760
        %2050 = vmatpush1.msra.mxu0 %v2049
        %2051 = vmatprep.subr.mxu0 0.0
        %v2052 = vand.u32 %v1095, 4294901760
        %v2053 = vsub.f32 %v1095, %v2052
        %v2054 = vand.u32 %v2053, 4294901760
        %2055 = vmatpush1.msra.mxu0 %v2054
        %2056 = vmatprep.subr.mxu0 0.0
        %v2057 = vand.u32 %v1096, 4294901760
        %v2058 = vsub.f32 %v1096, %v2057
        %v2059 = vand.u32 %v2058, 4294901760
        %2060 = vmatpush1.msra.mxu0 %v2059
        %2061 = vmatprep.subr.mxu0 0.0
        %v2062 = vand.u32 %v1097, 4294901760
        %v2063 = vsub.f32 %v1097, %v2062
        %v2064 = vand.u32 %v2063, 4294901760
        %2065 = vmatpush1.msra.mxu0 %v2064
        %2066 = vmatprep.subr.mxu0 0.0
        %v2067 = vand.u32 %v1098, 4294901760
        %v2068 = vsub.f32 %v1098, %v2067
        %v2069 = vand.u32 %v2068, 4294901760
        %2070 = vmatpush1.msra.mxu0 %v2069
        %2071 = vmatprep.subr.mxu0 0.0
        %v2072 = vand.u32 %v1099, 4294901760
        %v2073 = vsub.f32 %v1099, %v2072
        %v2074 = vand.u32 %v2073, 4294901760
        %2075 = vmatpush1.msra.mxu0 %v2074
        %2076 = vmatprep.subr.mxu0 0.0
        %v2077 = vand.u32 %v1100, 4294901760
        %v2078 = vsub.f32 %v1100, %v2077
        %v2079 = vand.u32 %v2078, 4294901760
        %2080 = vmatpush1.msra.mxu0 %v2079
        %2081 = vmatprep.subr.mxu0 0.0
        %v2082 = vand.u32 %v1101, 4294901760
        %v2083 = vsub.f32 %v1101, %v2082
        %v2084 = vand.u32 %v2083, 4294901760
        %2085 = vmatpush1.msra.mxu0 %v2084
        %2086 = vmatprep.subr.mxu0 0.0
        %v2087 = vand.u32 %v1102, 4294901760
        %v2088 = vsub.f32 %v1102, %v2087
        %v2089 = vand.u32 %v2088, 4294901760
        %2090 = vmatpush1.msra.mxu0 %v2089
        %2091 = vmatprep.subr.mxu0 0.0
        %v2092 = vand.u32 %v1103, 4294901760
        %v2093 = vsub.f32 %v1103, %v2092
        %v2094 = vand.u32 %v2093, 4294901760
        %2095 = vmatpush1.msra.mxu0 %v2094
        %2096 = vmatprep.subr.mxu0 0.0
        %v2097 = vand.u32 %v1104, 4294901760
        %v2098 = vsub.f32 %v1104, %v2097
        %v2099 = vand.u32 %v2098, 4294901760
        %2100 = vmatpush1.msra.mxu0 %v2099
        %2101 = vmatprep.subr.mxu0 0.0
        %v2102 = vand.u32 %v1105, 4294901760
        %v2103 = vsub.f32 %v1105, %v2102
        %v2104 = vand.u32 %v2103, 4294901760
        %2105 = vmatpush1.msra.mxu0 %v2104
        %2106 = vmatprep.subr.mxu0 0.0
        %v2107 = vand.u32 %v1106, 4294901760
        %v2108 = vsub.f32 %v1106, %v2107
        %v2109 = vand.u32 %v2108, 4294901760
        %2110 = vmatpush1.msra.mxu0 %v2109
        %2111 = vmatprep.subr.mxu0 0.0
        %v2112 = vand.u32 %v1107, 4294901760
        %v2113 = vsub.f32 %v1107, %v2112
        %v2114 = vand.u32 %v2113, 4294901760
        %2115 = vmatpush1.msra.mxu0 %v2114
        %2116 = vmatprep.subr.mxu0 0.0
        %v2117 = vand.u32 %v1108, 4294901760
        %v2118 = vsub.f32 %v1108, %v2117
        %v2119 = vand.u32 %v2118, 4294901760
        %2120 = vmatpush1.msra.mxu0 %v2119
        %2121 = vmatprep.subr.mxu0 0.0
        %v2122 = vand.u32 %v1109, 4294901760
        %v2123 = vsub.f32 %v1109, %v2122
        %v2124 = vand.u32 %v2123, 4294901760
        %2125 = vmatpush1.msra.mxu0 %v2124
        %2126 = vmatprep.subr.mxu0 0.0
        %v2127 = vand.u32 %v1110, 4294901760
        %v2128 = vsub.f32 %v1110, %v2127
        %v2129 = vand.u32 %v2128, 4294901760
        %2130 = vmatpush1.msra.mxu0 %v2129
        %2131 = vmatprep.subr.mxu0 0.0
        %v2132 = vand.u32 %v1111, 4294901760
        %v2133 = vsub.f32 %v1111, %v2132
        %v2134 = vand.u32 %v2133, 4294901760
        %2135 = vmatpush1.msra.mxu0 %v2134
        %2136 = vmatprep.subr.mxu0 0.0
        %v2137 = vand.u32 %v1112, 4294901760
        %v2138 = vsub.f32 %v1112, %v2137
        %v2139 = vand.u32 %v2138, 4294901760
        %2140 = vmatpush1.msra.mxu0 %v2139
        %2141 = vmatprep.subr.mxu0 0.0
        %v2142 = vand.u32 %v1113, 4294901760
        %v2143 = vsub.f32 %v1113, %v2142
        %v2144 = vand.u32 %v2143, 4294901760
        %2145 = vmatpush1.msra.mxu0 %v2144
        %2146 = vmatprep.subr.mxu0 0.0
        %v2147 = vand.u32 %v1114, 4294901760
        %v2148 = vsub.f32 %v1114, %v2147
        %v2149 = vand.u32 %v2148, 4294901760
        %2150 = vmatpush1.msra.mxu0 %v2149
        %2151 = vmatprep.subr.mxu0 0.0
        %v2152 = vand.u32 %v1115, 4294901760
        %v2153 = vsub.f32 %v1115, %v2152
        %v2154 = vand.u32 %v2153, 4294901760
        %2155 = vmatpush1.msra.mxu0 %v2154
        %2156 = vmatprep.subr.mxu0 0.0
        %v2157 = vand.u32 %v1116, 4294901760
        %v2158 = vsub.f32 %v1116, %v2157
        %v2159 = vand.u32 %v2158, 4294901760
        %2160 = vmatpush1.msra.mxu0 %v2159
        %2161 = vmatprep.subr.mxu0 0.0
        %v2162 = vand.u32 %v1117, 4294901760
        %v2163 = vsub.f32 %v1117, %v2162
        %v2164 = vand.u32 %v2163, 4294901760
        %2165 = vmatpush1.msra.mxu0 %v2164
        %2166 = vmatprep.subr.mxu0 0.0
        %v2167 = vand.u32 %v1118, 4294901760
        %v2168 = vsub.f32 %v1118, %v2167
        %v2169 = vand.u32 %v2168, 4294901760
        %2170 = vmatpush1.msra.mxu0 %v2169
        %v2171 = vand.u32 %v1354, 4294901760
        %2172 = vmatprep.mubr.f32.mxu0 %v2171
        %v2173 = vand.u32 %v1347, 4294901760
        %2174 = vmatmul.mubr.f32.gmra.mrb[0].mxu0 %v2173
        %v2175 = vpop.f32.mrb[0].mxu0
        %v2176 = vadd.f32 %v2008, %v2175
        %v2177 = vpop.f32.mrb[0].mxu0
        %2178 = vdwg.mxu0
        %2179 = vmatprep.subr.mxu0 0.0
        %v2180 = vand.u32 %v1087, 4294901760
        %2181 = vmatpush1.msra.mxu0 %v2180
        %2182 = vmatprep.subr.mxu0 0.0
        %v2183 = vand.u32 %v1088, 4294901760
        %2184 = vmatpush1.msra.mxu0 %v2183
        %2185 = vmatprep.subr.mxu0 0.0
        %v2186 = vand.u32 %v1089, 4294901760
        %2187 = vmatpush1.msra.mxu0 %v2186
        %2188 = vmatprep.subr.mxu0 0.0
        %v2189 = vand.u32 %v1090, 4294901760
        %2190 = vmatpush1.msra.mxu0 %v2189
        %2191 = vmatprep.subr.mxu0 0.0
        %v2192 = vand.u32 %v1091, 4294901760
        %2193 = vmatpush1.msra.mxu0 %v2192
        %2194 = vmatprep.subr.mxu0 0.0
        %v2195 = vand.u32 %v1092, 4294901760
        %2196 = vmatpush1.msra.mxu0 %v2195
        %2197 = vmatprep.subr.mxu0 0.0
        %v2198 = vand.u32 %v1093, 4294901760
        %2199 = vmatpush1.msra.mxu0 %v2198
        %2200 = vmatprep.subr.mxu0 0.0
        %v2201 = vand.u32 %v1094, 4294901760
        %2202 = vmatpush1.msra.mxu0 %v2201
        %2203 = vmatprep.subr.mxu0 0.0
        %v2204 = vand.u32 %v1095, 4294901760
        %2205 = vmatpush1.msra.mxu0 %v2204
        %2206 = vmatprep.subr.mxu0 0.0
        %v2207 = vand.u32 %v1096, 4294901760
        %2208 = vmatpush1.msra.mxu0 %v2207
        %2209 = vmatprep.subr.mxu0 0.0
        %v2210 = vand.u32 %v1097, 4294901760
        %2211 = vmatpush1.msra.mxu0 %v2210
        %2212 = vmatprep.subr.mxu0 0.0
        %v2213 = vand.u32 %v1098, 4294901760
        %2214 = vmatpush1.msra.mxu0 %v2213
        %2215 = vmatprep.subr.mxu0 0.0
        %v2216 = vand.u32 %v1099, 4294901760
        %2217 = vmatpush1.msra.mxu0 %v2216
        %2218 = vmatprep.subr.mxu0 0.0
        %v2219 = vand.u32 %v1100, 4294901760
        %2220 = vmatpush1.msra.mxu0 %v2219
        %2221 = vmatprep.subr.mxu0 0.0
        %v2222 = vand.u32 %v1101, 4294901760
        %2223 = vmatpush1.msra.mxu0 %v2222
        %2224 = vmatprep.subr.mxu0 0.0
        %v2225 = vand.u32 %v1102, 4294901760
        %2226 = vmatpush1.msra.mxu0 %v2225
        %2227 = vmatprep.subr.mxu0 0.0
        %v2228 = vand.u32 %v1103, 4294901760
        %2229 = vmatpush1.msra.mxu0 %v2228
        %2230 = vmatprep.subr.mxu0 0.0
        %v2231 = vand.u32 %v1104, 4294901760
        %2232 = vmatpush1.msra.mxu0 %v2231
        %2233 = vmatprep.subr.mxu0 0.0
        %v2234 = vand.u32 %v1105, 4294901760
        %2235 = vmatpush1.msra.mxu0 %v2234
        %2236 = vmatprep.subr.mxu0 0.0
        %v2237 = vand.u32 %v1106, 4294901760
        %2238 = vmatpush1.msra.mxu0 %v2237
        %2239 = vmatprep.subr.mxu0 0.0
        %v2240 = vand.u32 %v1107, 4294901760
        %2241 = vmatpush1.msra.mxu0 %v2240
        %2242 = vmatprep.subr.mxu0 0.0
        %v2243 = vand.u32 %v1108, 4294901760
        %2244 = vmatpush1.msra.mxu0 %v2243
        %2245 = vmatprep.subr.mxu0 0.0
        %v2246 = vand.u32 %v1109, 4294901760
        %2247 = vmatpush1.msra.mxu0 %v2246
        %2248 = vmatprep.subr.mxu0 0.0
        %v2249 = vand.u32 %v1110, 4294901760
        %2250 = vmatpush1.msra.mxu0 %v2249
        %2251 = vmatprep.subr.mxu0 0.0
        %v2252 = vand.u32 %v1111, 4294901760
        %2253 = vmatpush1.msra.mxu0 %v2252
        %2254 = vmatprep.subr.mxu0 0.0
        %v2255 = vand.u32 %v1112, 4294901760
        %2256 = vmatpush1.msra.mxu0 %v2255
        %2257 = vmatprep.subr.mxu0 0.0
        %v2258 = vand.u32 %v1113, 4294901760
        %2259 = vmatpush1.msra.mxu0 %v2258
        %2260 = vmatprep.subr.mxu0 0.0
        %v2261 = vand.u32 %v1114, 4294901760
        %2262 = vmatpush1.msra.mxu0 %v2261
        %2263 = vmatprep.subr.mxu0 0.0
        %v2264 = vand.u32 %v1115, 4294901760
        %2265 = vmatpush1.msra.mxu0 %v2264
        %2266 = vmatprep.subr.mxu0 0.0
        %v2267 = vand.u32 %v1116, 4294901760
        %2268 = vmatpush1.msra.mxu0 %v2267
        %2269 = vmatprep.subr.mxu0 0.0
        %v2270 = vand.u32 %v1117, 4294901760
        %2271 = vmatpush1.msra.mxu0 %v2270
        %2272 = vmatprep.subr.mxu0 0.0
        %v2273 = vand.u32 %v1118, 4294901760
        %2274 = vmatpush1.msra.mxu0 %v2273
        %v2275 = vand.u32 %v1354, 4294901760
        %2276 = vmatprep.mubr.f32.mxu0 %v2275
        %v2277 = vand.u32 %v1347, 4294901760
        %2278 = vmatmul.mubr.f32.gmra.mrb[0].mxu0 %v2277
        %v2279 = vpop.f32.mrb[0].mxu0
        %v2280 = vadd.f32 %v2176, %v2279
        %v2281 = vpop.f32.mrb[0].mxu0
        %2282 = vdwg.mxu0
        %2283 = vmatprep.subr.mxu0 0.0
        %v2284 = vand.u32 %v1119, 4294901760
        %2285 = vmatpush1.msra.mxu0 %v2284
        %2286 = vmatprep.subr.mxu0 0.0
        %v2287 = vand.u32 %v1120, 4294901760
        %2288 = vmatpush1.msra.mxu0 %v2287
        %2289 = vmatprep.subr.mxu0 0.0
        %v2290 = vand.u32 %v1121, 4294901760
        %2291 = vmatpush1.msra.mxu0 %v2290
        %2292 = vmatprep.subr.mxu0 0.0
        %v2293 = vand.u32 %v1122, 4294901760
        %2294 = vmatpush1.msra.mxu0 %v2293
        %2295 = vmatprep.subr.mxu0 0.0
        %v2296 = vand.u32 %v1123, 4294901760
        %2297 = vmatpush1.msra.mxu0 %v2296
        %2298 = vmatprep.subr.mxu0 0.0
        %v2299 = vand.u32 %v1124, 4294901760
        %2300 = vmatpush1.msra.mxu0 %v2299
        %2301 = vmatprep.subr.mxu0 0.0
        %v2302 = vand.u32 %v1125, 4294901760
        %2303 = vmatpush1.msra.mxu0 %v2302
        %2304 = vmatprep.subr.mxu0 0.0
        %v2305 = vand.u32 %v1126, 4294901760
        %2306 = vmatpush1.msra.mxu0 %v2305
        %2307 = vmatprep.subr.mxu0 0.0
        %v2308 = vand.u32 %v1127, 4294901760
        %2309 = vmatpush1.msra.mxu0 %v2308
        %2310 = vmatprep.subr.mxu0 0.0
        %v2311 = vand.u32 %v1128, 4294901760
        %2312 = vmatpush1.msra.mxu0 %v2311
        %2313 = vmatprep.subr.mxu0 0.0
        %v2314 = vand.u32 %v1129, 4294901760
        %2315 = vmatpush1.msra.mxu0 %v2314
        %2316 = vmatprep.subr.mxu0 0.0
        %v2317 = vand.u32 %v1130, 4294901760
        %2318 = vmatpush1.msra.mxu0 %v2317
        %2319 = vmatprep.subr.mxu0 0.0
        %v2320 = vand.u32 %v1131, 4294901760
        %2321 = vmatpush1.msra.mxu0 %v2320
        %2322 = vmatprep.subr.mxu0 0.0
        %v2323 = vand.u32 %v1132, 4294901760
        %2324 = vmatpush1.msra.mxu0 %v2323
        %2325 = vmatprep.subr.mxu0 0.0
        %v2326 = vand.u32 %v1133, 4294901760
        %2327 = vmatpush1.msra.mxu0 %v2326
        %2328 = vmatprep.subr.mxu0 0.0
        %v2329 = vand.u32 %v1134, 4294901760
        %2330 = vmatpush1.msra.mxu0 %v2329
        %2331 = vmatprep.subr.mxu0 0.0
        %v2332 = vand.u32 %v1135, 4294901760
        %2333 = vmatpush1.msra.mxu0 %v2332
        %2334 = vmatprep.subr.mxu0 0.0
        %v2335 = vand.u32 %v1136, 4294901760
        %2336 = vmatpush1.msra.mxu0 %v2335
        %2337 = vmatprep.subr.mxu0 0.0
        %v2338 = vand.u32 %v1137, 4294901760
        %2339 = vmatpush1.msra.mxu0 %v2338
        %2340 = vmatprep.subr.mxu0 0.0
        %v2341 = vand.u32 %v1138, 4294901760
        %2342 = vmatpush1.msra.mxu0 %v2341
        %2343 = vmatprep.subr.mxu0 0.0
        %v2344 = vand.u32 %v1139, 4294901760
        %2345 = vmatpush1.msra.mxu0 %v2344
        %2346 = vmatprep.subr.mxu0 0.0
        %v2347 = vand.u32 %v1140, 4294901760
        %2348 = vmatpush1.msra.mxu0 %v2347
        %2349 = vmatprep.subr.mxu0 0.0
        %v2350 = vand.u32 %v1141, 4294901760
        %2351 = vmatpush1.msra.mxu0 %v2350
        %2352 = vmatprep.subr.mxu0 0.0
        %v2353 = vand.u32 %v1142, 4294901760
        %2354 = vmatpush1.msra.mxu0 %v2353
        %2355 = vmatprep.subr.mxu0 0.0
        %v2356 = vand.u32 %v1143, 4294901760
        %2357 = vmatpush1.msra.mxu0 %v2356
        %2358 = vmatprep.subr.mxu0 0.0
        %v2359 = vand.u32 %v1144, 4294901760
        %2360 = vmatpush1.msra.mxu0 %v2359
        %2361 = vmatprep.subr.mxu0 0.0
        %v2362 = vand.u32 %v1145, 4294901760
        %2363 = vmatpush1.msra.mxu0 %v2362
        %2364 = vmatprep.subr.mxu0 0.0
        %v2365 = vand.u32 %v1146, 4294901760
        %2366 = vmatpush1.msra.mxu0 %v2365
        %2367 = vmatprep.subr.mxu0 0.0
        %v2368 = vand.u32 %v1147, 4294901760
        %2369 = vmatpush1.msra.mxu0 %v2368
        %2370 = vmatprep.subr.mxu0 0.0
        %v2371 = vand.u32 %v1148, 4294901760
        %2372 = vmatpush1.msra.mxu0 %v2371
        %2373 = vmatprep.subr.mxu0 0.0
        %v2374 = vand.u32 %v1149, 4294901760
        %2375 = vmatpush1.msra.mxu0 %v2374
        %2376 = vmatprep.subr.mxu0 0.0
        %v2377 = vand.u32 %v1150, 4294901760
        %2378 = vmatpush1.msra.mxu0 %v2377
        %v2379 = vand.u32 %v1368, 4294901760
        %v2380 = vsub.f32 %v1368, %v2379
        %v2381 = vand.u32 %v2380, 4294901760
        %v2382 = vsub.f32 %v2380, %v2381
        %v2383 = vand.u32 %v2382, 4294901760
        %2384 = vmatprep.mubr.f32.mxu0 %v2383
        %v2385 = vand.u32 %v1361, 4294901760
        %v2386 = vsub.f32 %v1361, %v2385
        %v2387 = vand.u32 %v2386, 4294901760
        %v2388 = vsub.f32 %v2386, %v2387
        %v2389 = vand.u32 %v2388, 4294901760
        %2390 = vmatmul.mubr.f32.gmra.mrb[0].mxu0 %v2389
        %v2391 = vpop.f32.mrb[0].mxu0
        %v2392 = vadd.f32 %v2280, %v2391
        %v2393 = vpop.f32.mrb[0].mxu0
        %2394 = vdwg.mxu0
        %2395 = vmatprep.subr.mxu0 0.0
        %v2396 = vand.u32 %v1119, 4294901760
        %v2397 = vsub.f32 %v1119, %v2396
        %v2398 = vand.u32 %v2397, 4294901760
        %v2399 = vsub.f32 %v2397, %v2398
        %v2400 = vand.u32 %v2399, 4294901760
        %2401 = vmatpush1.msra.mxu0 %v2400
        %2402 = vmatprep.subr.mxu0 0.0
        %v2403 = vand.u32 %v1120, 4294901760
        %v2404 = vsub.f32 %v1120, %v2403
        %v2405 = vand.u32 %v2404, 4294901760
        %v2406 = vsub.f32 %v2404, %v2405
        %v2407 = vand.u32 %v2406, 4294901760
        %2408 = vmatpush1.msra.mxu0 %v2407
        %2409 = vmatprep.subr.mxu0 0.0
        %v2410 = vand.u32 %v1121, 4294901760
        %v2411 = vsub.f32 %v1121, %v2410
        %v2412 = vand.u32 %v2411, 4294901760
        %v2413 = vsub.f32 %v2411, %v2412
        %v2414 = vand.u32 %v2413, 4294901760
        %2415 = vmatpush1.msra.mxu0 %v2414
        %2416 = vmatprep.subr.mxu0 0.0
        %v2417 = vand.u32 %v1122, 4294901760
        %v2418 = vsub.f32 %v1122, %v2417
        %v2419 = vand.u32 %v2418, 4294901760
        %v2420 = vsub.f32 %v2418, %v2419
        %v2421 = vand.u32 %v2420, 4294901760
        %2422 = vmatpush1.msra.mxu0 %v2421
        %2423 = vmatprep.subr.mxu0 0.0
        %v2424 = vand.u32 %v1123, 4294901760
        %v2425 = vsub.f32 %v1123, %v2424
        %v2426 = vand.u32 %v2425, 4294901760
        %v2427 = vsub.f32 %v2425, %v2426
        %v2428 = vand.u32 %v2427, 4294901760
        %2429 = vmatpush1.msra.mxu0 %v2428
        %2430 = vmatprep.subr.mxu0 0.0
        %v2431 = vand.u32 %v1124, 4294901760
        %v2432 = vsub.f32 %v1124, %v2431
        %v2433 = vand.u32 %v2432, 4294901760
        %v2434 = vsub.f32 %v2432, %v2433
        %v2435 = vand.u32 %v2434, 4294901760
        %2436 = vmatpush1.msra.mxu0 %v2435
        %2437 = vmatprep.subr.mxu0 0.0
        %v2438 = vand.u32 %v1125, 4294901760
        %v2439 = vsub.f32 %v1125, %v2438
        %v2440 = vand.u32 %v2439, 4294901760
        %v2441 = vsub.f32 %v2439, %v2440
        %v2442 = vand.u32 %v2441, 4294901760
        %2443 = vmatpush1.msra.mxu0 %v2442
        %2444 = vmatprep.subr.mxu0 0.0
        %v2445 = vand.u32 %v1126, 4294901760
        %v2446 = vsub.f32 %v1126, %v2445
        %v2447 = vand.u32 %v2446, 4294901760
        %v2448 = vsub.f32 %v2446, %v2447
        %v2449 = vand.u32 %v2448, 4294901760
        %2450 = vmatpush1.msra.mxu0 %v2449
        %2451 = vmatprep.subr.mxu0 0.0
        %v2452 = vand.u32 %v1127, 4294901760
        %v2453 = vsub.f32 %v1127, %v2452
        %v2454 = vand.u32 %v2453, 4294901760
        %v2455 = vsub.f32 %v2453, %v2454
        %v2456 = vand.u32 %v2455, 4294901760
        %2457 = vmatpush1.msra.mxu0 %v2456
        %2458 = vmatprep.subr.mxu0 0.0
        %v2459 = vand.u32 %v1128, 4294901760
        %v2460 = vsub.f32 %v1128, %v2459
        %v2461 = vand.u32 %v2460, 4294901760
        %v2462 = vsub.f32 %v2460, %v2461
        %v2463 = vand.u32 %v2462, 4294901760
        %2464 = vmatpush1.msra.mxu0 %v2463
        %2465 = vmatprep.subr.mxu0 0.0
        %v2466 = vand.u32 %v1129, 4294901760
        %v2467 = vsub.f32 %v1129, %v2466
        %v2468 = vand.u32 %v2467, 4294901760
        %v2469 = vsub.f32 %v2467, %v2468
        %v2470 = vand.u32 %v2469, 4294901760
        %2471 = vmatpush1.msra.mxu0 %v2470
        %2472 = vmatprep.subr.mxu0 0.0
        %v2473 = vand.u32 %v1130, 4294901760
        %v2474 = vsub.f32 %v1130, %v2473
        %v2475 = vand.u32 %v2474, 4294901760
        %v2476 = vsub.f32 %v2474, %v2475
        %v2477 = vand.u32 %v2476, 4294901760
        %2478 = vmatpush1.msra.mxu0 %v2477
        %2479 = vmatprep.subr.mxu0 0.0
        %v2480 = vand.u32 %v1131, 4294901760
        %v2481 = vsub.f32 %v1131, %v2480
        %v2482 = vand.u32 %v2481, 4294901760
        %v2483 = vsub.f32 %v2481, %v2482
        %v2484 = vand.u32 %v2483, 4294901760
        %2485 = vmatpush1.msra.mxu0 %v2484
        %2486 = vmatprep.subr.mxu0 0.0
        %v2487 = vand.u32 %v1132, 4294901760
        %v2488 = vsub.f32 %v1132, %v2487
        %v2489 = vand.u32 %v2488, 4294901760
        %v2490 = vsub.f32 %v2488, %v2489
        %v2491 = vand.u32 %v2490, 4294901760
        %2492 = vmatpush1.msra.mxu0 %v2491
        %2493 = vmatprep.subr.mxu0 0.0
        %v2494 = vand.u32 %v1133, 4294901760
        %v2495 = vsub.f32 %v1133, %v2494
        %v2496 = vand.u32 %v2495, 4294901760
        %v2497 = vsub.f32 %v2495, %v2496
        %v2498 = vand.u32 %v2497, 4294901760
        %2499 = vmatpush1.msra.mxu0 %v2498
        %2500 = vmatprep.subr.mxu0 0.0
        %v2501 = vand.u32 %v1134, 4294901760
        %v2502 = vsub.f32 %v1134, %v2501
        %v2503 = vand.u32 %v2502, 4294901760
        %v2504 = vsub.f32 %v2502, %v2503
        %v2505 = vand.u32 %v2504, 4294901760
        %2506 = vmatpush1.msra.mxu0 %v2505
        %2507 = vmatprep.subr.mxu0 0.0
        %v2508 = vand.u32 %v1135, 4294901760
        %v2509 = vsub.f32 %v1135, %v2508
        %v2510 = vand.u32 %v2509, 4294901760
        %v2511 = vsub.f32 %v2509, %v2510
        %v2512 = vand.u32 %v2511, 4294901760
        %2513 = vmatpush1.msra.mxu0 %v2512
        %2514 = vmatprep.subr.mxu0 0.0
        %v2515 = vand.u32 %v1136, 4294901760
        %v2516 = vsub.f32 %v1136, %v2515
        %v2517 = vand.u32 %v2516, 4294901760
        %v2518 = vsub.f32 %v2516, %v2517
        %v2519 = vand.u32 %v2518, 4294901760
        %2520 = vmatpush1.msra.mxu0 %v2519
        %2521 = vmatprep.subr.mxu0 0.0
        %v2522 = vand.u32 %v1137, 4294901760
        %v2523 = vsub.f32 %v1137, %v2522
        %v2524 = vand.u32 %v2523, 4294901760
        %v2525 = vsub.f32 %v2523, %v2524
        %v2526 = vand.u32 %v2525, 4294901760
        %2527 = vmatpush1.msra.mxu0 %v2526
        %2528 = vmatprep.subr.mxu0 0.0
        %v2529 = vand.u32 %v1138, 4294901760
        %v2530 = vsub.f32 %v1138, %v2529
        %v2531 = vand.u32 %v2530, 4294901760
        %v2532 = vsub.f32 %v2530, %v2531
        %v2533 = vand.u32 %v2532, 4294901760
        %2534 = vmatpush1.msra.mxu0 %v2533
        %2535 = vmatprep.subr.mxu0 0.0
        %v2536 = vand.u32 %v1139, 4294901760
        %v2537 = vsub.f32 %v1139, %v2536
        %v2538 = vand.u32 %v2537, 4294901760
        %v2539 = vsub.f32 %v2537, %v2538
        %v2540 = vand.u32 %v2539, 4294901760
        %2541 = vmatpush1.msra.mxu0 %v2540
        %2542 = vmatprep.subr.mxu0 0.0
        %v2543 = vand.u32 %v1140, 4294901760
        %v2544 = vsub.f32 %v1140, %v2543
        %v2545 = vand.u32 %v2544, 4294901760
        %v2546 = vsub.f32 %v2544, %v2545
        %v2547 = vand.u32 %v2546, 4294901760
        %2548 = vmatpush1.msra.mxu0 %v2547
        %2549 = vmatprep.subr.mxu0 0.0
        %v2550 = vand.u32 %v1141, 4294901760
        %v2551 = vsub.f32 %v1141, %v2550
        %v2552 = vand.u32 %v2551, 4294901760
        %v2553 = vsub.f32 %v2551, %v2552
        %v2554 = vand.u32 %v2553, 4294901760
        %2555 = vmatpush1.msra.mxu0 %v2554
        %2556 = vmatprep.subr.mxu0 0.0
        %v2557 = vand.u32 %v1142, 4294901760
        %v2558 = vsub.f32 %v1142, %v2557
        %v2559 = vand.u32 %v2558, 4294901760
        %v2560 = vsub.f32 %v2558, %v2559
        %v2561 = vand.u32 %v2560, 4294901760
        %2562 = vmatpush1.msra.mxu0 %v2561
        %2563 = vmatprep.subr.mxu0 0.0
        %v2564 = vand.u32 %v1143, 4294901760
        %v2565 = vsub.f32 %v1143, %v2564
        %v2566 = vand.u32 %v2565, 4294901760
        %v2567 = vsub.f32 %v2565, %v2566
        %v2568 = vand.u32 %v2567, 4294901760
        %2569 = vmatpush1.msra.mxu0 %v2568
        %2570 = vmatprep.subr.mxu0 0.0
        %v2571 = vand.u32 %v1144, 4294901760
        %v2572 = vsub.f32 %v1144, %v2571
        %v2573 = vand.u32 %v2572, 4294901760
        %v2574 = vsub.f32 %v2572, %v2573
        %v2575 = vand.u32 %v2574, 4294901760
        %2576 = vmatpush1.msra.mxu0 %v2575
        %2577 = vmatprep.subr.mxu0 0.0
        %v2578 = vand.u32 %v1145, 4294901760
        %v2579 = vsub.f32 %v1145, %v2578
        %v2580 = vand.u32 %v2579, 4294901760
        %v2581 = vsub.f32 %v2579, %v2580
        %v2582 = vand.u32 %v2581, 4294901760
        %2583 = vmatpush1.msra.mxu0 %v2582
        %2584 = vmatprep.subr.mxu0 0.0
        %v2585 = vand.u32 %v1146, 4294901760
        %v2586 = vsub.f32 %v1146, %v2585
        %v2587 = vand.u32 %v2586, 4294901760
        %v2588 = vsub.f32 %v2586, %v2587
        %v2589 = vand.u32 %v2588, 4294901760
        %2590 = vmatpush1.msra.mxu0 %v2589
        %2591 = vmatprep.subr.mxu0 0.0
        %v2592 = vand.u32 %v1147, 4294901760
        %v2593 = vsub.f32 %v1147, %v2592
        %v2594 = vand.u32 %v2593, 4294901760
        %v2595 = vsub.f32 %v2593, %v2594
        %v2596 = vand.u32 %v2595, 4294901760
        %2597 = vmatpush1.msra.mxu0 %v2596
        %2598 = vmatprep.subr.mxu0 0.0
        %v2599 = vand.u32 %v1148, 4294901760
        %v2600 = vsub.f32 %v1148, %v2599
        %v2601 = vand.u32 %v2600, 4294901760
        %v2602 = vsub.f32 %v2600, %v2601
        %v2603 = vand.u32 %v2602, 4294901760
        %2604 = vmatpush1.msra.mxu0 %v2603
        %2605 = vmatprep.subr.mxu0 0.0
        %v2606 = vand.u32 %v1149, 4294901760
        %v2607 = vsub.f32 %v1149, %v2606
        %v2608 = vand.u32 %v2607, 4294901760
        %v2609 = vsub.f32 %v2607, %v2608
        %v2610 = vand.u32 %v2609, 4294901760
        %2611 = vmatpush1.msra.mxu0 %v2610
        %2612 = vmatprep.subr.mxu0 0.0
        %v2613 = vand.u32 %v1150, 4294901760
        %v2614 = vsub.f32 %v1150, %v2613
        %v2615 = vand.u32 %v2614, 4294901760
        %v2616 = vsub.f32 %v2614, %v2615
        %v2617 = vand.u32 %v2616, 4294901760
        %2618 = vmatpush1.msra.mxu0 %v2617
        %v2619 = vand.u32 %v1368, 4294901760
        %2620 = vmatprep.mubr.f32.mxu0 %v2619
        %v2621 = vand.u32 %v1361, 4294901760
        %2622 = vmatmul.mubr.f32.gmra.mrb[0].mxu0 %v2621
        %v2623 = vpop.f32.mrb[0].mxu0
        %v2624 = vadd.f32 %v2392, %v2623
        %v2625 = vpop.f32.mrb[0].mxu0
        %2626 = vdwg.mxu0
        %2627 = vmatprep.subr.mxu0 0.0
        %v2628 = vand.u32 %v1119, 4294901760
        %v2629 = vsub.f32 %v1119, %v2628
        %2630 = vmatpush1.msra.mxu0 %v2629
        %2631 = vmatprep.subr.mxu0 0.0
        %v2632 = vand.u32 %v1120, 4294901760
        %v2633 = vsub.f32 %v1120, %v2632
        %2634 = vmatpush1.msra.mxu0 %v2633
        %2635 = vmatprep.subr.mxu0 0.0
        %v2636 = vand.u32 %v1121, 4294901760
        %v2637 = vsub.f32 %v1121, %v2636
        %2638 = vmatpush1.msra.mxu0 %v2637
        %2639 = vmatprep.subr.mxu0 0.0
        %v2640 = vand.u32 %v1122, 4294901760
        %v2641 = vsub.f32 %v1122, %v2640
        %2642 = vmatpush1.msra.mxu0 %v2641
        %2643 = vmatprep.subr.mxu0 0.0
        %v2644 = vand.u32 %v1123, 4294901760
        %v2645 = vsub.f32 %v1123, %v2644
        %2646 = vmatpush1.msra.mxu0 %v2645
        %2647 = vmatprep.subr.mxu0 0.0
        %v2648 = vand.u32 %v1124, 4294901760
        %v2649 = vsub.f32 %v1124, %v2648
        %2650 = vmatpush1.msra.mxu0 %v2649
        %2651 = vmatprep.subr.mxu0 0.0
        %v2652 = vand.u32 %v1125, 4294901760
        %v2653 = vsub.f32 %v1125, %v2652
        %2654 = vmatpush1.msra.mxu0 %v2653
        %2655 = vmatprep.subr.mxu0 0.0
        %v2656 = vand.u32 %v1126, 4294901760
        %v2657 = vsub.f32 %v1126, %v2656
        %2658 = vmatpush1.msra.mxu0 %v2657
        %2659 = vmatprep.subr.mxu0 0.0
        %v2660 = vand.u32 %v1127, 4294901760
        %v2661 = vsub.f32 %v1127, %v2660
        %2662 = vmatpush1.msra.mxu0 %v2661
        %2663 = vmatprep.subr.mxu0 0.0
        %v2664 = vand.u32 %v1128, 4294901760
        %v2665 = vsub.f32 %v1128, %v2664
        %2666 = vmatpush1.msra.mxu0 %v2665
        %2667 = vmatprep.subr.mxu0 0.0
        %v2668 = vand.u32 %v1129, 4294901760
        %v2669 = vsub.f32 %v1129, %v2668
        %2670 = vmatpush1.msra.mxu0 %v2669
        %2671 = vmatprep.subr.mxu0 0.0
        %v2672 = vand.u32 %v1130, 4294901760
        %v2673 = vsub.f32 %v1130, %v2672
        %2674 = vmatpush1.msra.mxu0 %v2673
        %2675 = vmatprep.subr.mxu0 0.0
        %v2676 = vand.u32 %v1131, 4294901760
        %v2677 = vsub.f32 %v1131, %v2676
        %2678 = vmatpush1.msra.mxu0 %v2677
        %2679 = vmatprep.subr.mxu0 0.0
        %v2680 = vand.u32 %v1132, 4294901760
        %v2681 = vsub.f32 %v1132, %v2680
        %2682 = vmatpush1.msra.mxu0 %v2681
        %2683 = vmatprep.subr.mxu0 0.0
        %v2684 = vand.u32 %v1133, 4294901760
        %v2685 = vsub.f32 %v1133, %v2684
        %2686 = vmatpush1.msra.mxu0 %v2685
        %2687 = vmatprep.subr.mxu0 0.0
        %v2688 = vand.u32 %v1134, 4294901760
        %v2689 = vsub.f32 %v1134, %v2688
        %2690 = vmatpush1.msra.mxu0 %v2689
        %2691 = vmatprep.subr.mxu0 0.0
        %v2692 = vand.u32 %v1135, 4294901760
        %v2693 = vsub.f32 %v1135, %v2692
        %2694 = vmatpush1.msra.mxu0 %v2693
        %2695 = vmatprep.subr.mxu0 0.0
        %v2696 = vand.u32 %v1136, 4294901760
        %v2697 = vsub.f32 %v1136, %v2696
        %2698 = vmatpush1.msra.mxu0 %v2697
        %2699 = vmatprep.subr.mxu0 0.0
        %v2700 = vand.u32 %v1137, 4294901760
        %v2701 = vsub.f32 %v1137, %v2700
        %2702 = vmatpush1.msra.mxu0 %v2701
        %2703 = vmatprep.subr.mxu0 0.0
        %v2704 = vand.u32 %v1138, 4294901760
        %v2705 = vsub.f32 %v1138, %v2704
        %2706 = vmatpush1.msra.mxu0 %v2705
        %2707 = vmatprep.subr.mxu0 0.0
        %v2708 = vand.u32 %v1139, 4294901760
        %v2709 = vsub.f32 %v1139, %v2708
        %2710 = vmatpush1.msra.mxu0 %v2709
        %2711 = vmatprep.subr.mxu0 0.0
        %v2712 = vand.u32 %v1140, 4294901760
        %v2713 = vsub.f32 %v1140, %v2712
        %2714 = vmatpush1.msra.mxu0 %v2713
        %2715 = vmatprep.subr.mxu0 0.0
        %v2716 = vand.u32 %v1141, 4294901760
        %v2717 = vsub.f32 %v1141, %v2716
        %2718 = vmatpush1.msra.mxu0 %v2717
        %2719 = vmatprep.subr.mxu0 0.0
        %v2720 = vand.u32 %v1142, 4294901760
        %v2721 = vsub.f32 %v1142, %v2720
        %2722 = vmatpush1.msra.mxu0 %v2721
        %2723 = vmatprep.subr.mxu0 0.0
        %v2724 = vand.u32 %v1143, 4294901760
        %v2725 = vsub.f32 %v1143, %v2724
        %2726 = vmatpush1.msra.mxu0 %v2725
        %2727 = vmatprep.subr.mxu0 0.0
        %v2728 = vand.u32 %v1144, 4294901760
        %v2729 = vsub.f32 %v1144, %v2728
        %2730 = vmatpush1.msra.mxu0 %v2729
        %2731 = vmatprep.subr.mxu0 0.0
        %v2732 = vand.u32 %v1145, 4294901760
        %v2733 = vsub.f32 %v1145, %v2732
        %2734 = vmatpush1.msra.mxu0 %v2733
        %2735 = vmatprep.subr.mxu0 0.0
        %v2736 = vand.u32 %v1146, 4294901760
        %v2737 = vsub.f32 %v1146, %v2736
        %2738 = vmatpush1.msra.mxu0 %v2737
        %2739 = vmatprep.subr.mxu0 0.0
        %v2740 = vand.u32 %v1147, 4294901760
        %v2741 = vsub.f32 %v1147, %v2740
        %2742 = vmatpush1.msra.mxu0 %v2741
        %2743 = vmatprep.subr.mxu0 0.0
        %v2744 = vand.u32 %v1148, 4294901760
        %v2745 = vsub.f32 %v1148, %v2744
        %2746 = vmatpush1.msra.mxu0 %v2745
        %2747 = vmatprep.subr.mxu0 0.0
        %v2748 = vand.u32 %v1149, 4294901760
        %v2749 = vsub.f32 %v1149, %v2748
        %2750 = vmatpush1.msra.mxu0 %v2749
        %2751 = vmatprep.subr.mxu0 0.0
        %v2752 = vand.u32 %v1150, 4294901760
        %v2753 = vsub.f32 %v1150, %v2752
        %2754 = vmatpush1.msra.mxu0 %v2753
        %v2755 = vand.u32 %v1368, 4294901760
        %v2756 = vsub.f32 %v1368, %v2755
        %2757 = vmatprep.mubr.f32.mxu0 %v2756
        %v2758 = vand.u32 %v1361, 4294901760
        %v2759 = vsub.f32 %v1361, %v2758
        %2760 = vmatmul.mubr.f32.gmra.mrb[0].mxu0 %v2759
        %v2761 = vpop.f32.mrb[0].mxu0
        %v2762 = vadd.f32 %v2624, %v2761
        %v2763 = vpop.f32.mrb[0].mxu0
        %2764 = vdwg.mxu0
        %2765 = vmatprep.subr.mxu0 0.0
        %v2766 = vand.u32 %v1119, 4294901760
        %2767 = vmatpush1.msra.mxu0 %v2766
        %2768 = vmatprep.subr.mxu0 0.0
        %v2769 = vand.u32 %v1120, 4294901760
        %2770 = vmatpush1.msra.mxu0 %v2769
        %2771 = vmatprep.subr.mxu0 0.0
        %v2772 = vand.u32 %v1121, 4294901760
        %2773 = vmatpush1.msra.mxu0 %v2772
        %2774 = vmatprep.subr.mxu0 0.0
        %v2775 = vand.u32 %v1122, 4294901760
        %2776 = vmatpush1.msra.mxu0 %v2775
        %2777 = vmatprep.subr.mxu0 0.0
        %v2778 = vand.u32 %v1123, 4294901760
        %2779 = vmatpush1.msra.mxu0 %v2778
        %2780 = vmatprep.subr.mxu0 0.0
        %v2781 = vand.u32 %v1124, 4294901760
        %2782 = vmatpush1.msra.mxu0 %v2781
        %2783 = vmatprep.subr.mxu0 0.0
        %v2784 = vand.u32 %v1125, 4294901760
        %2785 = vmatpush1.msra.mxu0 %v2784
        %2786 = vmatprep.subr.mxu0 0.0
        %v2787 = vand.u32 %v1126, 4294901760
        %2788 = vmatpush1.msra.mxu0 %v2787
        %2789 = vmatprep.subr.mxu0 0.0
        %v2790 = vand.u32 %v1127, 4294901760
        %2791 = vmatpush1.msra.mxu0 %v2790
        %2792 = vmatprep.subr.mxu0 0.0
        %v2793 = vand.u32 %v1128, 4294901760
        %2794 = vmatpush1.msra.mxu0 %v2793
        %2795 = vmatprep.subr.mxu0 0.0
        %v2796 = vand.u32 %v1129, 4294901760
        %2797 = vmatpush1.msra.mxu0 %v2796
        %2798 = vmatprep.subr.mxu0 0.0
        %v2799 = vand.u32 %v1130, 4294901760
        %2800 = vmatpush1.msra.mxu0 %v2799
        %2801 = vmatprep.subr.mxu0 0.0
        %v2802 = vand.u32 %v1131, 4294901760
        %2803 = vmatpush1.msra.mxu0 %v2802
        %2804 = vmatprep.subr.mxu0 0.0
        %v2805 = vand.u32 %v1132, 4294901760
        %2806 = vmatpush1.msra.mxu0 %v2805
        %2807 = vmatprep.subr.mxu0 0.0
        %v2808 = vand.u32 %v1133, 4294901760
        %2809 = vmatpush1.msra.mxu0 %v2808
        %2810 = vmatprep.subr.mxu0 0.0
        %v2811 = vand.u32 %v1134, 4294901760
        %2812 = vmatpush1.msra.mxu0 %v2811
        %2813 = vmatprep.subr.mxu0 0.0
        %v2814 = vand.u32 %v1135, 4294901760
        %2815 = vmatpush1.msra.mxu0 %v2814
        %2816 = vmatprep.subr.mxu0 0.0
        %v2817 = vand.u32 %v1136, 4294901760
        %2818 = vmatpush1.msra.mxu0 %v2817
        %2819 = vmatprep.subr.mxu0 0.0
        %v2820 = vand.u32 %v1137, 4294901760
        %2821 = vmatpush1.msra.mxu0 %v2820
        %2822 = vmatprep.subr.mxu0 0.0
        %v2823 = vand.u32 %v1138, 4294901760
        %2824 = vmatpush1.msra.mxu0 %v2823
        %2825 = vmatprep.subr.mxu0 0.0
        %v2826 = vand.u32 %v1139, 4294901760
        %2827 = vmatpush1.msra.mxu0 %v2826
        %2828 = vmatprep.subr.mxu0 0.0
        %v2829 = vand.u32 %v1140, 4294901760
        %2830 = vmatpush1.msra.mxu0 %v2829
        %2831 = vmatprep.subr.mxu0 0.0
        %v2832 = vand.u32 %v1141, 4294901760
        %2833 = vmatpush1.msra.mxu0 %v2832
        %2834 = vmatprep.subr.mxu0 0.0
        %v2835 = vand.u32 %v1142, 4294901760
        %2836 = vmatpush1.msra.mxu0 %v2835
        %2837 = vmatprep.subr.mxu0 0.0
        %v2838 = vand.u32 %v1143, 4294901760
        %2839 = vmatpush1.msra.mxu0 %v2838
        %2840 = vmatprep.subr.mxu0 0.0
        %v2841 = vand.u32 %v1144, 4294901760
        %2842 = vmatpush1.msra.mxu0 %v2841
        %2843 = vmatprep.subr.mxu0 0.0
        %v2844 = vand.u32 %v1145, 4294901760
        %2845 = vmatpush1.msra.mxu0 %v2844
        %2846 = vmatprep.subr.mxu0 0.0
        %v2847 = vand.u32 %v1146, 4294901760
        %2848 = vmatpush1.msra.mxu0 %v2847
        %2849 = vmatprep.subr.mxu0 0.0
        %v2850 = vand.u32 %v1147, 4294901760
        %2851 = vmatpush1.msra.mxu0 %v2850
        %2852 = vmatprep.subr.mxu0 0.0
        %v2853 = vand.u32 %v1148, 4294901760
        %2854 = vmatpush1.msra.mxu0 %v2853
        %2855 = vmatprep.subr.mxu0 0.0
        %v2856 = vand.u32 %v1149, 4294901760
        %2857 = vmatpush1.msra.mxu0 %v2856
        %2858 = vmatprep.subr.mxu0 0.0
        %v2859 = vand.u32 %v1150, 4294901760
        %2860 = vmatpush1.msra.mxu0 %v2859
        %v2861 = vand.u32 %v1368, 4294901760
        %v2862 = vsub.f32 %v1368, %v2861
        %v2863 = vand.u32 %v2862, 4294901760
        %2864 = vmatprep.mubr.f32.mxu0 %v2863
        %v2865 = vand.u32 %v1361, 4294901760
        %v2866 = vsub.f32 %v1361, %v2865
        %v2867 = vand.u32 %v2866, 4294901760
        %2868 = vmatmul.mubr.f32.gmra.mrb[0].mxu0 %v2867
        %v2869 = vpop.f32.mrb[0].mxu0
        %v2870 = vadd.f32 %v2762, %v2869
        %v2871 = vpop.f32.mrb[0].mxu0
        %2872 = vdwg.mxu0
        %2873 = vmatprep.subr.mxu0 0.0
        %v2874 = vand.u32 %v1119, 4294901760
        %v2875 = vsub.f32 %v1119, %v2874
        %v2876 = vand.u32 %v2875, 4294901760
        %2877 = vmatpush1.msra.mxu0 %v2876
        %2878 = vmatprep.subr.mxu0 0.0
        %v2879 = vand.u32 %v1120, 4294901760
        %v2880 = vsub.f32 %v1120, %v2879
        %v2881 = vand.u32 %v2880, 4294901760
        %2882 = vmatpush1.msra.mxu0 %v2881
        %2883 = vmatprep.subr.mxu0 0.0
        %v2884 = vand.u32 %v1121, 4294901760
        %v2885 = vsub.f32 %v1121, %v2884
        %v2886 = vand.u32 %v2885, 4294901760
        %2887 = vmatpush1.msra.mxu0 %v2886
        %2888 = vmatprep.subr.mxu0 0.0
        %v2889 = vand.u32 %v1122, 4294901760
        %v2890 = vsub.f32 %v1122, %v2889
        %v2891 = vand.u32 %v2890, 4294901760
        %2892 = vmatpush1.msra.mxu0 %v2891
        %2893 = vmatprep.subr.mxu0 0.0
        %v2894 = vand.u32 %v1123, 4294901760
        %v2895 = vsub.f32 %v1123, %v2894
        %v2896 = vand.u32 %v2895, 4294901760
        %2897 = vmatpush1.msra.mxu0 %v2896
        %2898 = vmatprep.subr.mxu0 0.0
        %v2899 = vand.u32 %v1124, 4294901760
        %v2900 = vsub.f32 %v1124, %v2899
        %v2901 = vand.u32 %v2900, 4294901760
        %2902 = vmatpush1.msra.mxu0 %v2901
        %2903 = vmatprep.subr.mxu0 0.0
        %v2904 = vand.u32 %v1125, 4294901760
        %v2905 = vsub.f32 %v1125, %v2904
        %v2906 = vand.u32 %v2905, 4294901760
        %2907 = vmatpush1.msra.mxu0 %v2906
        %2908 = vmatprep.subr.mxu0 0.0
        %v2909 = vand.u32 %v1126, 4294901760
        %v2910 = vsub.f32 %v1126, %v2909
        %v2911 = vand.u32 %v2910, 4294901760
        %2912 = vmatpush1.msra.mxu0 %v2911
        %2913 = vmatprep.subr.mxu0 0.0
        %v2914 = vand.u32 %v1127, 4294901760
        %v2915 = vsub.f32 %v1127, %v2914
        %v2916 = vand.u32 %v2915, 4294901760
        %2917 = vmatpush1.msra.mxu0 %v2916
        %2918 = vmatprep.subr.mxu0 0.0
        %v2919 = vand.u32 %v1128, 4294901760
        %v2920 = vsub.f32 %v1128, %v2919
        %v2921 = vand.u32 %v2920, 4294901760
        %2922 = vmatpush1.msra.mxu0 %v2921
        %2923 = vmatprep.subr.mxu0 0.0
        %v2924 = vand.u32 %v1129, 4294901760
        %v2925 = vsub.f32 %v1129, %v2924
        %v2926 = vand.u32 %v2925, 4294901760
        %2927 = vmatpush1.msra.mxu0 %v2926
        %2928 = vmatprep.subr.mxu0 0.0
        %v2929 = vand.u32 %v1130, 4294901760
        %v2930 = vsub.f32 %v1130, %v2929
        %v2931 = vand.u32 %v2930, 4294901760
        %2932 = vmatpush1.msra.mxu0 %v2931
        %2933 = vmatprep.subr.mxu0 0.0
        %v2934 = vand.u32 %v1131, 4294901760
        %v2935 = vsub.f32 %v1131, %v2934
        %v2936 = vand.u32 %v2935, 4294901760
        %2937 = vmatpush1.msra.mxu0 %v2936
        %2938 = vmatprep.subr.mxu0 0.0
        %v2939 = vand.u32 %v1132, 4294901760
        %v2940 = vsub.f32 %v1132, %v2939
        %v2941 = vand.u32 %v2940, 4294901760
        %2942 = vmatpush1.msra.mxu0 %v2941
        %2943 = vmatprep.subr.mxu0 0.0
        %v2944 = vand.u32 %v1133, 4294901760
        %v2945 = vsub.f32 %v1133, %v2944
        %v2946 = vand.u32 %v2945, 4294901760
        %2947 = vmatpush1.msra.mxu0 %v2946
        %2948 = vmatprep.subr.mxu0 0.0
        %v2949 = vand.u32 %v1134, 4294901760
        %v2950 = vsub.f32 %v1134, %v2949
        %v2951 = vand.u32 %v2950, 4294901760
        %2952 = vmatpush1.msra.mxu0 %v2951
        %2953 = vmatprep.subr.mxu0 0.0
        %v2954 = vand.u32 %v1135, 4294901760
        %v2955 = vsub.f32 %v1135, %v2954
        %v2956 = vand.u32 %v2955, 4294901760
        %2957 = vmatpush1.msra.mxu0 %v2956
        %2958 = vmatprep.subr.mxu0 0.0
        %v2959 = vand.u32 %v1136, 4294901760
        %v2960 = vsub.f32 %v1136, %v2959
        %v2961 = vand.u32 %v2960, 4294901760
        %2962 = vmatpush1.msra.mxu0 %v2961
        %2963 = vmatprep.subr.mxu0 0.0
        %v2964 = vand.u32 %v1137, 4294901760
        %v2965 = vsub.f32 %v1137, %v2964
        %v2966 = vand.u32 %v2965, 4294901760
        %2967 = vmatpush1.msra.mxu0 %v2966
        %2968 = vmatprep.subr.mxu0 0.0
        %v2969 = vand.u32 %v1138, 4294901760
        %v2970 = vsub.f32 %v1138, %v2969
        %v2971 = vand.u32 %v2970, 4294901760
        %2972 = vmatpush1.msra.mxu0 %v2971
        %2973 = vmatprep.subr.mxu0 0.0
        %v2974 = vand.u32 %v1139, 4294901760
        %v2975 = vsub.f32 %v1139, %v2974
        %v2976 = vand.u32 %v2975, 4294901760
        %2977 = vmatpush1.msra.mxu0 %v2976
        %2978 = vmatprep.subr.mxu0 0.0
        %v2979 = vand.u32 %v1140, 4294901760
        %v2980 = vsub.f32 %v1140, %v2979
        %v2981 = vand.u32 %v2980, 4294901760
        %2982 = vmatpush1.msra.mxu0 %v2981
        %2983 = vmatprep.subr.mxu0 0.0
        %v2984 = vand.u32 %v1141, 4294901760
        %v2985 = vsub.f32 %v1141, %v2984
        %v2986 = vand.u32 %v2985, 4294901760
        %2987 = vmatpush1.msra.mxu0 %v2986
        %2988 = vmatprep.subr.mxu0 0.0
        %v2989 = vand.u32 %v1142, 4294901760
        %v2990 = vsub.f32 %v1142, %v2989
        %v2991 = vand.u32 %v2990, 4294901760
        %2992 = vmatpush1.msra.mxu0 %v2991
        %2993 = vmatprep.subr.mxu0 0.0
        %v2994 = vand.u32 %v1143, 4294901760
        %v2995 = vsub.f32 %v1143, %v2994
        %v2996 = vand.u32 %v2995, 4294901760
        %2997 = vmatpush1.msra.mxu0 %v2996
        %2998 = vmatprep.subr.mxu0 0.0
        %v2999 = vand.u32 %v1144, 4294901760
        %v3000 = vsub.f32 %v1144, %v2999
        %v3001 = vand.u32 %v3000, 4294901760
        %3002 = vmatpush1.msra.mxu0 %v3001
        %3003 = vmatprep.subr.mxu0 0.0
        %v3004 = vand.u32 %v1145, 4294901760
        %v3005 = vsub.f32 %v1145, %v3004
        %v3006 = vand.u32 %v3005, 4294901760
        %3007 = vmatpush1.msra.mxu0 %v3006
        %3008 = vmatprep.subr.mxu0 0.0
        %v3009 = vand.u32 %v1146, 4294901760
        %v3010 = vsub.f32 %v1146, %v3009
        %v3011 = vand.u32 %v3010, 4294901760
        %3012 = vmatpush1.msra.mxu0 %v3011
        %3013 = vmatprep.subr.mxu0 0.0
        %v3014 = vand.u32 %v1147, 4294901760
        %v3015 = vsub.f32 %v1147, %v3014
        %v3016 = vand.u32 %v3015, 4294901760
        %3017 = vmatpush1.msra.mxu0 %v3016
        %3018 = vmatprep.subr.mxu0 0.0
        %v3019 = vand.u32 %v1148, 4294901760
        %v3020 = vsub.f32 %v1148, %v3019
        %v3021 = vand.u32 %v3020, 4294901760
        %3022 = vmatpush1.msra.mxu0 %v3021
        %3023 = vmatprep.subr.mxu0 0.0
        %v3024 = vand.u32 %v1149, 4294901760
        %v3025 = vsub.f32 %v1149, %v3024
        %v3026 = vand.u32 %v3025, 4294901760
        %3027 = vmatpush1.msra.mxu0 %v3026
        %3028 = vmatprep.subr.mxu0 0.0
        %v3029 = vand.u32 %v1150, 4294901760
        %v3030 = vsub.f32 %v1150, %v3029
        %v3031 = vand.u32 %v3030, 4294901760
        %3032 = vmatpush1.msra.mxu0 %v3031
        %v3033 = vand.u32 %v1368, 4294901760
        %3034 = vmatprep.mubr.f32.mxu0 %v3033
        %v3035 = vand.u32 %v1361, 4294901760
        %3036 = vmatmul.mubr.f32.gmra.mrb[0].mxu0 %v3035
        %v3037 = vpop.f32.mrb[0].mxu0
        %v3038 = vadd.f32 %v2870, %v3037
        %v3039 = vpop.f32.mrb[0].mxu0
        %3040 = vdwg.mxu0
        %3041 = vmatprep.subr.mxu0 0.0
        %v3042 = vand.u32 %v1119, 4294901760
        %3043 = vmatpush1.msra.mxu0 %v3042
        %3044 = vmatprep.subr.mxu0 0.0
        %v3045 = vand.u32 %v1120, 4294901760
        %3046 = vmatpush1.msra.mxu0 %v3045
        %3047 = vmatprep.subr.mxu0 0.0
        %v3048 = vand.u32 %v1121, 4294901760
        %3049 = vmatpush1.msra.mxu0 %v3048
        %3050 = vmatprep.subr.mxu0 0.0
        %v3051 = vand.u32 %v1122, 4294901760
        %3052 = vmatpush1.msra.mxu0 %v3051
        %3053 = vmatprep.subr.mxu0 0.0
        %v3054 = vand.u32 %v1123, 4294901760
        %3055 = vmatpush1.msra.mxu0 %v3054
        %3056 = vmatprep.subr.mxu0 0.0
        %v3057 = vand.u32 %v1124, 4294901760
        %3058 = vmatpush1.msra.mxu0 %v3057
        %3059 = vmatprep.subr.mxu0 0.0
        %v3060 = vand.u32 %v1125, 4294901760
        %3061 = vmatpush1.msra.mxu0 %v3060
        %3062 = vmatprep.subr.mxu0 0.0
        %v3063 = vand.u32 %v1126, 4294901760
        %3064 = vmatpush1.msra.mxu0 %v3063
        %3065 = vmatprep.subr.mxu0 0.0
        %v3066 = vand.u32 %v1127, 4294901760
        %3067 = vmatpush1.msra.mxu0 %v3066
        %3068 = vmatprep.subr.mxu0 0.0
        %v3069 = vand.u32 %v1128, 4294901760
        %3070 = vmatpush1.msra.mxu0 %v3069
        %3071 = vmatprep.subr.mxu0 0.0
        %v3072 = vand.u32 %v1129, 4294901760
        %3073 = vmatpush1.msra.mxu0 %v3072
        %3074 = vmatprep.subr.mxu0 0.0
        %v3075 = vand.u32 %v1130, 4294901760
        %3076 = vmatpush1.msra.mxu0 %v3075
        %3077 = vmatprep.subr.mxu0 0.0
        %v3078 = vand.u32 %v1131, 4294901760
        %3079 = vmatpush1.msra.mxu0 %v3078
        %3080 = vmatprep.subr.mxu0 0.0
        %v3081 = vand.u32 %v1132, 4294901760
        %3082 = vmatpush1.msra.mxu0 %v3081
        %3083 = vmatprep.subr.mxu0 0.0
        %v3084 = vand.u32 %v1133, 4294901760
        %3085 = vmatpush1.msra.mxu0 %v3084
        %3086 = vmatprep.subr.mxu0 0.0
        %v3087 = vand.u32 %v1134, 4294901760
        %3088 = vmatpush1.msra.mxu0 %v3087
        %3089 = vmatprep.subr.mxu0 0.0
        %v3090 = vand.u32 %v1135, 4294901760
        %3091 = vmatpush1.msra.mxu0 %v3090
        %3092 = vmatprep.subr.mxu0 0.0
        %v3093 = vand.u32 %v1136, 4294901760
        %3094 = vmatpush1.msra.mxu0 %v3093
        %3095 = vmatprep.subr.mxu0 0.0
        %v3096 = vand.u32 %v1137, 4294901760
        %3097 = vmatpush1.msra.mxu0 %v3096
        %3098 = vmatprep.subr.mxu0 0.0
        %v3099 = vand.u32 %v1138, 4294901760
        %3100 = vmatpush1.msra.mxu0 %v3099
        %3101 = vmatprep.subr.mxu0 0.0
        %v3102 = vand.u32 %v1139, 4294901760
        %3103 = vmatpush1.msra.mxu0 %v3102
        %3104 = vmatprep.subr.mxu0 0.0
        %v3105 = vand.u32 %v1140, 4294901760
        %3106 = vmatpush1.msra.mxu0 %v3105
        %3107 = vmatprep.subr.mxu0 0.0
        %v3108 = vand.u32 %v1141, 4294901760
        %3109 = vmatpush1.msra.mxu0 %v3108
        %3110 = vmatprep.subr.mxu0 0.0
        %v3111 = vand.u32 %v1142, 4294901760
        %3112 = vmatpush1.msra.mxu0 %v3111
        %3113 = vmatprep.subr.mxu0 0.0
        %v3114 = vand.u32 %v1143, 4294901760
        %3115 = vmatpush1.msra.mxu0 %v3114
        %3116 = vmatprep.subr.mxu0 0.0
        %v3117 = vand.u32 %v1144, 4294901760
        %3118 = vmatpush1.msra.mxu0 %v3117
        %3119 = vmatprep.subr.mxu0 0.0
        %v3120 = vand.u32 %v1145, 4294901760
        %3121 = vmatpush1.msra.mxu0 %v3120
        %3122 = vmatprep.subr.mxu0 0.0
        %v3123 = vand.u32 %v1146, 4294901760
        %3124 = vmatpush1.msra.mxu0 %v3123
        %3125 = vmatprep.subr.mxu0 0.0
        %v3126 = vand.u32 %v1147, 4294901760
        %3127 = vmatpush1.msra.mxu0 %v3126
        %3128 = vmatprep.subr.mxu0 0.0
        %v3129 = vand.u32 %v1148, 4294901760
        %3130 = vmatpush1.msra.mxu0 %v3129
        %3131 = vmatprep.subr.mxu0 0.0
        %v3132 = vand.u32 %v1149, 4294901760
        %3133 = vmatpush1.msra.mxu0 %v3132
        %3134 = vmatprep.subr.mxu0 0.0
        %v3135 = vand.u32 %v1150, 4294901760
        %3136 = vmatpush1.msra.mxu0 %v3135
        %v3137 = vand.u32 %v1368, 4294901760
        %3138 = vmatprep.mubr.f32.mxu0 %v3137
        %v3139 = vand.u32 %v1361, 4294901760
        %3140 = vmatmul.mubr.f32.gmra.mrb[0].mxu0 %v3139
        %v3141 = vpop.f32.mrb[0].mxu0
        %v3142 = vadd.f32 %v3038, %v3141
        %v3143 = vpop.f32.mrb[0].mxu0
        %3144 = vdwg.mxu0
        %3145 = vmatprep.subr.mxu0 0.0
        %v3146 = vand.u32 %v1151, 4294901760
        %3147 = vmatpush1.msra.mxu0 %v3146
        %3148 = vmatprep.subr.mxu0 0.0
        %v3149 = vand.u32 %v1152, 4294901760
        %3150 = vmatpush1.msra.mxu0 %v3149
        %3151 = vmatprep.subr.mxu0 0.0
        %v3152 = vand.u32 %v1153, 4294901760
        %3153 = vmatpush1.msra.mxu0 %v3152
        %3154 = vmatprep.subr.mxu0 0.0
        %v3155 = vand.u32 %v1154, 4294901760
        %3156 = vmatpush1.msra.mxu0 %v3155
        %3157 = vmatprep.subr.mxu0 0.0
        %v3158 = vand.u32 %v1155, 4294901760
        %3159 = vmatpush1.msra.mxu0 %v3158
        %3160 = vmatprep.subr.mxu0 0.0
        %v3161 = vand.u32 %v1156, 4294901760
        %3162 = vmatpush1.msra.mxu0 %v3161
        %3163 = vmatprep.subr.mxu0 0.0
        %v3164 = vand.u32 %v1157, 4294901760
        %3165 = vmatpush1.msra.mxu0 %v3164
        %3166 = vmatprep.subr.mxu0 0.0
        %v3167 = vand.u32 %v1158, 4294901760
        %3168 = vmatpush1.msra.mxu0 %v3167
        %3169 = vmatprep.subr.mxu0 0.0
        %v3170 = vand.u32 %v1159, 4294901760
        %3171 = vmatpush1.msra.mxu0 %v3170
        %3172 = vmatprep.subr.mxu0 0.0
        %v3173 = vand.u32 %v1160, 4294901760
        %3174 = vmatpush1.msra.mxu0 %v3173
        %3175 = vmatprep.subr.mxu0 0.0
        %v3176 = vand.u32 %v1161, 4294901760
        %3177 = vmatpush1.msra.mxu0 %v3176
        %3178 = vmatprep.subr.mxu0 0.0
        %v3179 = vand.u32 %v1162, 4294901760
        %3180 = vmatpush1.msra.mxu0 %v3179
        %3181 = vmatprep.subr.mxu0 0.0
        %v3182 = vand.u32 %v1163, 4294901760
        %3183 = vmatpush1.msra.mxu0 %v3182
        %3184 = vmatprep.subr.mxu0 0.0
        %v3185 = vand.u32 %v1164, 4294901760
        %3186 = vmatpush1.msra.mxu0 %v3185
        %3187 = vmatprep.subr.mxu0 0.0
        %v3188 = vand.u32 %v1165, 4294901760
        %3189 = vmatpush1.msra.mxu0 %v3188
        %3190 = vmatprep.subr.mxu0 0.0
        %v3191 = vand.u32 %v1166, 4294901760
        %3192 = vmatpush1.msra.mxu0 %v3191
        %3193 = vmatprep.subr.mxu0 0.0
        %v3194 = vand.u32 %v1167, 4294901760
        %3195 = vmatpush1.msra.mxu0 %v3194
        %3196 = vmatprep.subr.mxu0 0.0
        %v3197 = vand.u32 %v1168, 4294901760
        %3198 = vmatpush1.msra.mxu0 %v3197
        %3199 = vmatprep.subr.mxu0 0.0
        %v3200 = vand.u32 %v1169, 4294901760
        %3201 = vmatpush1.msra.mxu0 %v3200
        %3202 = vmatprep.subr.mxu0 0.0
        %v3203 = vand.u32 %v1170, 4294901760
        %3204 = vmatpush1.msra.mxu0 %v3203
        %3205 = vmatprep.subr.mxu0 0.0
        %v3206 = vand.u32 %v1171, 4294901760
        %3207 = vmatpush1.msra.mxu0 %v3206
        %3208 = vmatprep.subr.mxu0 0.0
        %v3209 = vand.u32 %v1172, 4294901760
        %3210 = vmatpush1.msra.mxu0 %v3209
        %3211 = vmatprep.subr.mxu0 0.0
        %v3212 = vand.u32 %v1173, 4294901760
        %3213 = vmatpush1.msra.mxu0 %v3212
        %3214 = vmatprep.subr.mxu0 0.0
        %v3215 = vand.u32 %v1174, 4294901760
        %3216 = vmatpush1.msra.mxu0 %v3215
        %3217 = vmatprep.subr.mxu0 0.0
        %v3218 = vand.u32 %v1175, 4294901760
        %3219 = vmatpush1.msra.mxu0 %v3218
        %3220 = vmatprep.subr.mxu0 0.0
        %v3221 = vand.u32 %v1176, 4294901760
        %3222 = vmatpush1.msra.mxu0 %v3221
        %3223 = vmatprep.subr.mxu0 0.0
        %v3224 = vand.u32 %v1177, 4294901760
        %3225 = vmatpush1.msra.mxu0 %v3224
        %3226 = vmatprep.subr.mxu0 0.0
        %v3227 = vand.u32 %v1178, 4294901760
        %3228 = vmatpush1.msra.mxu0 %v3227
        %3229 = vmatprep.subr.mxu0 0.0
        %v3230 = vand.u32 %v1179, 4294901760
        %3231 = vmatpush1.msra.mxu0 %v3230
        %3232 = vmatprep.subr.mxu0 0.0
        %v3233 = vand.u32 %v1180, 4294901760
        %3234 = vmatpush1.msra.mxu0 %v3233
        %3235 = vmatprep.subr.mxu0 0.0
        %v3236 = vand.u32 %v1181, 4294901760
        %3237 = vmatpush1.msra.mxu0 %v3236
        %3238 = vmatprep.subr.mxu0 0.0
        %v3239 = vand.u32 %v1182, 4294901760
        %3240 = vmatpush1.msra.mxu0 %v3239
        %v3241 = vand.u32 %v1382, 4294901760
        %v3242 = vsub.f32 %v1382, %v3241
        %v3243 = vand.u32 %v3242, 4294901760
        %v3244 = vsub.f32 %v3242, %v3243
        %v3245 = vand.u32 %v3244, 4294901760
        %3246 = vmatprep.mubr.f32.mxu0 %v3245
        %v3247 = vand.u32 %v1375, 4294901760
        %v3248 = vsub.f32 %v1375, %v3247
        %v3249 = vand.u32 %v3248, 4294901760
        %v3250 = vsub.f32 %v3248, %v3249
        %v3251 = vand.u32 %v3250, 4294901760
        %3252 = vmatmul.mubr.f32.gmra.mrb[0].mxu0 %v3251
        %v3253 = vpop.f32.mrb[0].mxu0
        %v3254 = vadd.f32 %v3142, %v3253
        %v3255 = vpop.f32.mrb[0].mxu0
        %3256 = vdwg.mxu0
        %3257 = vmatprep.subr.mxu0 0.0
        %v3258 = vand.u32 %v1151, 4294901760
        %v3259 = vsub.f32 %v1151, %v3258
        %v3260 = vand.u32 %v3259, 4294901760
        %v3261 = vsub.f32 %v3259, %v3260
        %v3262 = vand.u32 %v3261, 4294901760
        %3263 = vmatpush1.msra.mxu0 %v3262
        %3264 = vmatprep.subr.mxu0 0.0
        %v3265 = vand.u32 %v1152, 4294901760
        %v3266 = vsub.f32 %v1152, %v3265
        %v3267 = vand.u32 %v3266, 4294901760
        %v3268 = vsub.f32 %v3266, %v3267
        %v3269 = vand.u32 %v3268, 4294901760
        %3270 = vmatpush1.msra.mxu0 %v3269
        %3271 = vmatprep.subr.mxu0 0.0
        %v3272 = vand.u32 %v1153, 4294901760
        %v3273 = vsub.f32 %v1153, %v3272
        %v3274 = vand.u32 %v3273, 4294901760
        %v3275 = vsub.f32 %v3273, %v3274
        %v3276 = vand.u32 %v3275, 4294901760
        %3277 = vmatpush1.msra.mxu0 %v3276
        %3278 = vmatprep.subr.mxu0 0.0
        %v3279 = vand.u32 %v1154, 4294901760
        %v3280 = vsub.f32 %v1154, %v3279
        %v3281 = vand.u32 %v3280, 4294901760
        %v3282 = vsub.f32 %v3280, %v3281
        %v3283 = vand.u32 %v3282, 4294901760
        %3284 = vmatpush1.msra.mxu0 %v3283
        %3285 = vmatprep.subr.mxu0 0.0
        %v3286 = vand.u32 %v1155, 4294901760
        %v3287 = vsub.f32 %v1155, %v3286
        %v3288 = vand.u32 %v3287, 4294901760
        %v3289 = vsub.f32 %v3287, %v3288
        %v3290 = vand.u32 %v3289, 4294901760
        %3291 = vmatpush1.msra.mxu0 %v3290
        %3292 = vmatprep.subr.mxu0 0.0
        %v3293 = vand.u32 %v1156, 4294901760
        %v3294 = vsub.f32 %v1156, %v3293
        %v3295 = vand.u32 %v3294, 4294901760
        %v3296 = vsub.f32 %v3294, %v3295
        %v3297 = vand.u32 %v3296, 4294901760
        %3298 = vmatpush1.msra.mxu0 %v3297
        %3299 = vmatprep.subr.mxu0 0.0
        %v3300 = vand.u32 %v1157, 4294901760
        %v3301 = vsub.f32 %v1157, %v3300
        %v3302 = vand.u32 %v3301, 4294901760
        %v3303 = vsub.f32 %v3301, %v3302
        %v3304 = vand.u32 %v3303, 4294901760
        %3305 = vmatpush1.msra.mxu0 %v3304
        %3306 = vmatprep.subr.mxu0 0.0
        %v3307 = vand.u32 %v1158, 4294901760
        %v3308 = vsub.f32 %v1158, %v3307
        %v3309 = vand.u32 %v3308, 4294901760
        %v3310 = vsub.f32 %v3308, %v3309
        %v3311 = vand.u32 %v3310, 4294901760
        %3312 = vmatpush1.msra.mxu0 %v3311
        %3313 = vmatprep.subr.mxu0 0.0
        %v3314 = vand.u32 %v1159, 4294901760
        %v3315 = vsub.f32 %v1159, %v3314
        %v3316 = vand.u32 %v3315, 4294901760
        %v3317 = vsub.f32 %v3315, %v3316
        %v3318 = vand.u32 %v3317, 4294901760
        %3319 = vmatpush1.msra.mxu0 %v3318
        %3320 = vmatprep.subr.mxu0 0.0
        %v3321 = vand.u32 %v1160, 4294901760
        %v3322 = vsub.f32 %v1160, %v3321
        %v3323 = vand.u32 %v3322, 4294901760
        %v3324 = vsub.f32 %v3322, %v3323
        %v3325 = vand.u32 %v3324, 4294901760
        %3326 = vmatpush1.msra.mxu0 %v3325
        %3327 = vmatprep.subr.mxu0 0.0
        %v3328 = vand.u32 %v1161, 4294901760
        %v3329 = vsub.f32 %v1161, %v3328
        %v3330 = vand.u32 %v3329, 4294901760
        %v3331 = vsub.f32 %v3329, %v3330
        %v3332 = vand.u32 %v3331, 4294901760
        %3333 = vmatpush1.msra.mxu0 %v3332
        %3334 = vmatprep.subr.mxu0 0.0
        %v3335 = vand.u32 %v1162, 4294901760
        %v3336 = vsub.f32 %v1162, %v3335
        %v3337 = vand.u32 %v3336, 4294901760
        %v3338 = vsub.f32 %v3336, %v3337
        %v3339 = vand.u32 %v3338, 4294901760
        %3340 = vmatpush1.msra.mxu0 %v3339
        %3341 = vmatprep.subr.mxu0 0.0
        %v3342 = vand.u32 %v1163, 4294901760
        %v3343 = vsub.f32 %v1163, %v3342
        %v3344 = vand.u32 %v3343, 4294901760
        %v3345 = vsub.f32 %v3343, %v3344
        %v3346 = vand.u32 %v3345, 4294901760
        %3347 = vmatpush1.msra.mxu0 %v3346
        %3348 = vmatprep.subr.mxu0 0.0
        %v3349 = vand.u32 %v1164, 4294901760
        %v3350 = vsub.f32 %v1164, %v3349
        %v3351 = vand.u32 %v3350, 4294901760
        %v3352 = vsub.f32 %v3350, %v3351
        %v3353 = vand.u32 %v3352, 4294901760
        %3354 = vmatpush1.msra.mxu0 %v3353
        %3355 = vmatprep.subr.mxu0 0.0
        %v3356 = vand.u32 %v1165, 4294901760
        %v3357 = vsub.f32 %v1165, %v3356
        %v3358 = vand.u32 %v3357, 4294901760
        %v3359 = vsub.f32 %v3357, %v3358
        %v3360 = vand.u32 %v3359, 4294901760
        %3361 = vmatpush1.msra.mxu0 %v3360
        %3362 = vmatprep.subr.mxu0 0.0
        %v3363 = vand.u32 %v1166, 4294901760
        %v3364 = vsub.f32 %v1166, %v3363
        %v3365 = vand.u32 %v3364, 4294901760
        %v3366 = vsub.f32 %v3364, %v3365
        %v3367 = vand.u32 %v3366, 4294901760
        %3368 = vmatpush1.msra.mxu0 %v3367
        %3369 = vmatprep.subr.mxu0 0.0
        %v3370 = vand.u32 %v1167, 4294901760
        %v3371 = vsub.f32 %v1167, %v3370
        %v3372 = vand.u32 %v3371, 4294901760
        %v3373 = vsub.f32 %v3371, %v3372
        %v3374 = vand.u32 %v3373, 4294901760
        %3375 = vmatpush1.msra.mxu0 %v3374
        %3376 = vmatprep.subr.mxu0 0.0
        %v3377 = vand.u32 %v1168, 4294901760
        %v3378 = vsub.f32 %v1168, %v3377
        %v3379 = vand.u32 %v3378, 4294901760
        %v3380 = vsub.f32 %v3378, %v3379
        %v3381 = vand.u32 %v3380, 4294901760
        %3382 = vmatpush1.msra.mxu0 %v3381
        %3383 = vmatprep.subr.mxu0 0.0
        %v3384 = vand.u32 %v1169, 4294901760
        %v3385 = vsub.f32 %v1169, %v3384
        %v3386 = vand.u32 %v3385, 4294901760
        %v3387 = vsub.f32 %v3385, %v3386
        %v3388 = vand.u32 %v3387, 4294901760
        %3389 = vmatpush1.msra.mxu0 %v3388
        %3390 = vmatprep.subr.mxu0 0.0
        %v3391 = vand.u32 %v1170, 4294901760
        %v3392 = vsub.f32 %v1170, %v3391
        %v3393 = vand.u32 %v3392, 4294901760
        %v3394 = vsub.f32 %v3392, %v3393
        %v3395 = vand.u32 %v3394, 4294901760
        %3396 = vmatpush1.msra.mxu0 %v3395
        %3397 = vmatprep.subr.mxu0 0.0
        %v3398 = vand.u32 %v1171, 4294901760
        %v3399 = vsub.f32 %v1171, %v3398
        %v3400 = vand.u32 %v3399, 4294901760
        %v3401 = vsub.f32 %v3399, %v3400
        %v3402 = vand.u32 %v3401, 4294901760
        %3403 = vmatpush1.msra.mxu0 %v3402
        %3404 = vmatprep.subr.mxu0 0.0
        %v3405 = vand.u32 %v1172, 4294901760
        %v3406 = vsub.f32 %v1172, %v3405
        %v3407 = vand.u32 %v3406, 4294901760
        %v3408 = vsub.f32 %v3406, %v3407
        %v3409 = vand.u32 %v3408, 4294901760
        %3410 = vmatpush1.msra.mxu0 %v3409
        %3411 = vmatprep.subr.mxu0 0.0
        %v3412 = vand.u32 %v1173, 4294901760
        %v3413 = vsub.f32 %v1173, %v3412
        %v3414 = vand.u32 %v3413, 4294901760
        %v3415 = vsub.f32 %v3413, %v3414
        %v3416 = vand.u32 %v3415, 4294901760
        %3417 = vmatpush1.msra.mxu0 %v3416
        %3418 = vmatprep.subr.mxu0 0.0
        %v3419 = vand.u32 %v1174, 4294901760
        %v3420 = vsub.f32 %v1174, %v3419
        %v3421 = vand.u32 %v3420, 4294901760
        %v3422 = vsub.f32 %v3420, %v3421
        %v3423 = vand.u32 %v3422, 4294901760
        %3424 = vmatpush1.msra.mxu0 %v3423
        %3425 = vmatprep.subr.mxu0 0.0
        %v3426 = vand.u32 %v1175, 4294901760
        %v3427 = vsub.f32 %v1175, %v3426
        %v3428 = vand.u32 %v3427, 4294901760
        %v3429 = vsub.f32 %v3427, %v3428
        %v3430 = vand.u32 %v3429, 4294901760
        %3431 = vmatpush1.msra.mxu0 %v3430
        %3432 = vmatprep.subr.mxu0 0.0
        %v3433 = vand.u32 %v1176, 4294901760
        %v3434 = vsub.f32 %v1176, %v3433
        %v3435 = vand.u32 %v3434, 4294901760
        %v3436 = vsub.f32 %v3434, %v3435
        %v3437 = vand.u32 %v3436, 4294901760
        %3438 = vmatpush1.msra.mxu0 %v3437
        %3439 = vmatprep.subr.mxu0 0.0
        %v3440 = vand.u32 %v1177, 4294901760
        %v3441 = vsub.f32 %v1177, %v3440
        %v3442 = vand.u32 %v3441, 4294901760
        %v3443 = vsub.f32 %v3441, %v3442
        %v3444 = vand.u32 %v3443, 4294901760
        %3445 = vmatpush1.msra.mxu0 %v3444
        %3446 = vmatprep.subr.mxu0 0.0
        %v3447 = vand.u32 %v1178, 4294901760
        %v3448 = vsub.f32 %v1178, %v3447
        %v3449 = vand.u32 %v3448, 4294901760
        %v3450 = vsub.f32 %v3448, %v3449
        %v3451 = vand.u32 %v3450, 4294901760
        %3452 = vmatpush1.msra.mxu0 %v3451
        %3453 = vmatprep.subr.mxu0 0.0
        %v3454 = vand.u32 %v1179, 4294901760
        %v3455 = vsub.f32 %v1179, %v3454
        %v3456 = vand.u32 %v3455, 4294901760
        %v3457 = vsub.f32 %v3455, %v3456
        %v3458 = vand.u32 %v3457, 4294901760
        %3459 = vmatpush1.msra.mxu0 %v3458
        %3460 = vmatprep.subr.mxu0 0.0
        %v3461 = vand.u32 %v1180, 4294901760
        %v3462 = vsub.f32 %v1180, %v3461
        %v3463 = vand.u32 %v3462, 4294901760
        %v3464 = vsub.f32 %v3462, %v3463
        %v3465 = vand.u32 %v3464, 4294901760
        %3466 = vmatpush1.msra.mxu0 %v3465
        %3467 = vmatprep.subr.mxu0 0.0
        %v3468 = vand.u32 %v1181, 4294901760
        %v3469 = vsub.f32 %v1181, %v3468
        %v3470 = vand.u32 %v3469, 4294901760
        %v3471 = vsub.f32 %v3469, %v3470
        %v3472 = vand.u32 %v3471, 4294901760
        %3473 = vmatpush1.msra.mxu0 %v3472
        %3474 = vmatprep.subr.mxu0 0.0
        %v3475 = vand.u32 %v1182, 4294901760
        %v3476 = vsub.f32 %v1182, %v3475
        %v3477 = vand.u32 %v3476, 4294901760
        %v3478 = vsub.f32 %v3476, %v3477
        %v3479 = vand.u32 %v3478, 4294901760
        %3480 = vmatpush1.msra.mxu0 %v3479
        %v3481 = vand.u32 %v1382, 4294901760
        %3482 = vmatprep.mubr.f32.mxu0 %v3481
        %v3483 = vand.u32 %v1375, 4294901760
        %3484 = vmatmul.mubr.f32.gmra.mrb[0].mxu0 %v3483
        %v3485 = vpop.f32.mrb[0].mxu0
        %v3486 = vadd.f32 %v3254, %v3485
        %v3487 = vpop.f32.mrb[0].mxu0
        %3488 = vdwg.mxu0
        %3489 = vmatprep.subr.mxu0 0.0
        %v3490 = vand.u32 %v1151, 4294901760
        %v3491 = vsub.f32 %v1151, %v3490
        %3492 = vmatpush1.msra.mxu0 %v3491
        %3493 = vmatprep.subr.mxu0 0.0
        %v3494 = vand.u32 %v1152, 4294901760
        %v3495 = vsub.f32 %v1152, %v3494
        %3496 = vmatpush1.msra.mxu0 %v3495
        %3497 = vmatprep.subr.mxu0 0.0
        %v3498 = vand.u32 %v1153, 4294901760
        %v3499 = vsub.f32 %v1153, %v3498
        %3500 = vmatpush1.msra.mxu0 %v3499
        %3501 = vmatprep.subr.mxu0 0.0
        %v3502 = vand.u32 %v1154, 4294901760
        %v3503 = vsub.f32 %v1154, %v3502
        %3504 = vmatpush1.msra.mxu0 %v3503
        %3505 = vmatprep.subr.mxu0 0.0
        %v3506 = vand.u32 %v1155, 4294901760
        %v3507 = vsub.f32 %v1155, %v3506
        %3508 = vmatpush1.msra.mxu0 %v3507
        %3509 = vmatprep.subr.mxu0 0.0
        %v3510 = vand.u32 %v1156, 4294901760
        %v3511 = vsub.f32 %v1156, %v3510
        %3512 = vmatpush1.msra.mxu0 %v3511
        %3513 = vmatprep.subr.mxu0 0.0
        %v3514 = vand.u32 %v1157, 4294901760
        %v3515 = vsub.f32 %v1157, %v3514
        %3516 = vmatpush1.msra.mxu0 %v3515
        %3517 = vmatprep.subr.mxu0 0.0
        %v3518 = vand.u32 %v1158, 4294901760
        %v3519 = vsub.f32 %v1158, %v3518
        %3520 = vmatpush1.msra.mxu0 %v3519
        %3521 = vmatprep.subr.mxu0 0.0
        %v3522 = vand.u32 %v1159, 4294901760
        %v3523 = vsub.f32 %v1159, %v3522
        %3524 = vmatpush1.msra.mxu0 %v3523
        %3525 = vmatprep.subr.mxu0 0.0
        %v3526 = vand.u32 %v1160, 4294901760
        %v3527 = vsub.f32 %v1160, %v3526
        %3528 = vmatpush1.msra.mxu0 %v3527
        %3529 = vmatprep.subr.mxu0 0.0
        %v3530 = vand.u32 %v1161, 4294901760
        %v3531 = vsub.f32 %v1161, %v3530
        %3532 = vmatpush1.msra.mxu0 %v3531
        %3533 = vmatprep.subr.mxu0 0.0
        %v3534 = vand.u32 %v1162, 4294901760
        %v3535 = vsub.f32 %v1162, %v3534
        %3536 = vmatpush1.msra.mxu0 %v3535
        %3537 = vmatprep.subr.mxu0 0.0
        %v3538 = vand.u32 %v1163, 4294901760
        %v3539 = vsub.f32 %v1163, %v3538
        %3540 = vmatpush1.msra.mxu0 %v3539
        %3541 = vmatprep.subr.mxu0 0.0
        %v3542 = vand.u32 %v1164, 4294901760
        %v3543 = vsub.f32 %v1164, %v3542
        %3544 = vmatpush1.msra.mxu0 %v3543
        %3545 = vmatprep.subr.mxu0 0.0
        %v3546 = vand.u32 %v1165, 4294901760
        %v3547 = vsub.f32 %v1165, %v3546
        %3548 = vmatpush1.msra.mxu0 %v3547
        %3549 = vmatprep.subr.mxu0 0.0
        %v3550 = vand.u32 %v1166, 4294901760
        %v3551 = vsub.f32 %v1166, %v3550
        %3552 = vmatpush1.msra.mxu0 %v3551
        %3553 = vmatprep.subr.mxu0 0.0
        %v3554 = vand.u32 %v1167, 4294901760
        %v3555 = vsub.f32 %v1167, %v3554
        %3556 = vmatpush1.msra.mxu0 %v3555
        %3557 = vmatprep.subr.mxu0 0.0
        %v3558 = vand.u32 %v1168, 4294901760
        %v3559 = vsub.f32 %v1168, %v3558
        %3560 = vmatpush1.msra.mxu0 %v3559
        %3561 = vmatprep.subr.mxu0 0.0
        %v3562 = vand.u32 %v1169, 4294901760
        %v3563 = vsub.f32 %v1169, %v3562
        %3564 = vmatpush1.msra.mxu0 %v3563
        %3565 = vmatprep.subr.mxu0 0.0
        %v3566 = vand.u32 %v1170, 4294901760
        %v3567 = vsub.f32 %v1170, %v3566
        %3568 = vmatpush1.msra.mxu0 %v3567
        %3569 = vmatprep.subr.mxu0 0.0
        %v3570 = vand.u32 %v1171, 4294901760
        %v3571 = vsub.f32 %v1171, %v3570
        %3572 = vmatpush1.msra.mxu0 %v3571
        %3573 = vmatprep.subr.mxu0 0.0
        %v3574 = vand.u32 %v1172, 4294901760
        %v3575 = vsub.f32 %v1172, %v3574
        %3576 = vmatpush1.msra.mxu0 %v3575
        %3577 = vmatprep.subr.mxu0 0.0
        %v3578 = vand.u32 %v1173, 4294901760
        %v3579 = vsub.f32 %v1173, %v3578
        %3580 = vmatpush1.msra.mxu0 %v3579
        %3581 = vmatprep.subr.mxu0 0.0
        %v3582 = vand.u32 %v1174, 4294901760
        %v3583 = vsub.f32 %v1174, %v3582
        %3584 = vmatpush1.msra.mxu0 %v3583
        %3585 = vmatprep.subr.mxu0 0.0
        %v3586 = vand.u32 %v1175, 4294901760
        %v3587 = vsub.f32 %v1175, %v3586
        %3588 = vmatpush1.msra.mxu0 %v3587
        %3589 = vmatprep.subr.mxu0 0.0
        %v3590 = vand.u32 %v1176, 4294901760
        %v3591 = vsub.f32 %v1176, %v3590
        %3592 = vmatpush1.msra.mxu0 %v3591
        %3593 = vmatprep.subr.mxu0 0.0
        %v3594 = vand.u32 %v1177, 4294901760
        %v3595 = vsub.f32 %v1177, %v3594
        %3596 = vmatpush1.msra.mxu0 %v3595
        %3597 = vmatprep.subr.mxu0 0.0
        %v3598 = vand.u32 %v1178, 4294901760
        %v3599 = vsub.f32 %v1178, %v3598
        %3600 = vmatpush1.msra.mxu0 %v3599
        %3601 = vmatprep.subr.mxu0 0.0
        %v3602 = vand.u32 %v1179, 4294901760
        %v3603 = vsub.f32 %v1179, %v3602
        %3604 = vmatpush1.msra.mxu0 %v3603
        %3605 = vmatprep.subr.mxu0 0.0
        %v3606 = vand.u32 %v1180, 4294901760
        %v3607 = vsub.f32 %v1180, %v3606
        %3608 = vmatpush1.msra.mxu0 %v3607
        %3609 = vmatprep.subr.mxu0 0.0
        %v3610 = vand.u32 %v1181, 4294901760
        %v3611 = vsub.f32 %v1181, %v3610
        %3612 = vmatpush1.msra.mxu0 %v3611
        %3613 = vmatprep.subr.mxu0 0.0
        %v3614 = vand.u32 %v1182, 4294901760
        %v3615 = vsub.f32 %v1182, %v3614
        %3616 = vmatpush1.msra.mxu0 %v3615
        %v3617 = vand.u32 %v1382, 4294901760
        %v3618 = vsub.f32 %v1382, %v3617
        %3619 = vmatprep.mubr.f32.mxu0 %v3618
        %v3620 = vand.u32 %v1375, 4294901760
        %v3621 = vsub.f32 %v1375, %v3620
        %3622 = vmatmul.mubr.f32.gmra.mrb[0].mxu0 %v3621
        %v3623 = vpop.f32.mrb[0].mxu0
        %v3624 = vadd.f32 %v3486, %v3623
        %v3625 = vpop.f32.mrb[0].mxu0
        %3626 = vdwg.mxu0
        %3627 = vmatprep.subr.mxu0 0.0
        %v3628 = vand.u32 %v1151, 4294901760
        %3629 = vmatpush1.msra.mxu0 %v3628
        %3630 = vmatprep.subr.mxu0 0.0
        %v3631 = vand.u32 %v1152, 4294901760
        %3632 = vmatpush1.msra.mxu0 %v3631
        %3633 = vmatprep.subr.mxu0 0.0
        %v3634 = vand.u32 %v1153, 4294901760
        %3635 = vmatpush1.msra.mxu0 %v3634
        %3636 = vmatprep.subr.mxu0 0.0
        %v3637 = vand.u32 %v1154, 4294901760
        %3638 = vmatpush1.msra.mxu0 %v3637
        %3639 = vmatprep.subr.mxu0 0.0
        %v3640 = vand.u32 %v1155, 4294901760
        %3641 = vmatpush1.msra.mxu0 %v3640
        %3642 = vmatprep.subr.mxu0 0.0
        %v3643 = vand.u32 %v1156, 4294901760
        %3644 = vmatpush1.msra.mxu0 %v3643
        %3645 = vmatprep.subr.mxu0 0.0
        %v3646 = vand.u32 %v1157, 4294901760
        %3647 = vmatpush1.msra.mxu0 %v3646
        %3648 = vmatprep.subr.mxu0 0.0
        %v3649 = vand.u32 %v1158, 4294901760
        %3650 = vmatpush1.msra.mxu0 %v3649
        %3651 = vmatprep.subr.mxu0 0.0
        %v3652 = vand.u32 %v1159, 4294901760
        %3653 = vmatpush1.msra.mxu0 %v3652
        %3654 = vmatprep.subr.mxu0 0.0
        %v3655 = vand.u32 %v1160, 4294901760
        %3656 = vmatpush1.msra.mxu0 %v3655
        %3657 = vmatprep.subr.mxu0 0.0
        %v3658 = vand.u32 %v1161, 4294901760
        %3659 = vmatpush1.msra.mxu0 %v3658
        %3660 = vmatprep.subr.mxu0 0.0
        %v3661 = vand.u32 %v1162, 4294901760
        %3662 = vmatpush1.msra.mxu0 %v3661
        %3663 = vmatprep.subr.mxu0 0.0
        %v3664 = vand.u32 %v1163, 4294901760
        %3665 = vmatpush1.msra.mxu0 %v3664
        %3666 = vmatprep.subr.mxu0 0.0
        %v3667 = vand.u32 %v1164, 4294901760
        %3668 = vmatpush1.msra.mxu0 %v3667
        %3669 = vmatprep.subr.mxu0 0.0
        %v3670 = vand.u32 %v1165, 4294901760
        %3671 = vmatpush1.msra.mxu0 %v3670
        %3672 = vmatprep.subr.mxu0 0.0
        %v3673 = vand.u32 %v1166, 4294901760
        %3674 = vmatpush1.msra.mxu0 %v3673
        %3675 = vmatprep.subr.mxu0 0.0
        %v3676 = vand.u32 %v1167, 4294901760
        %3677 = vmatpush1.msra.mxu0 %v3676
        %3678 = vmatprep.subr.mxu0 0.0
        %v3679 = vand.u32 %v1168, 4294901760
        %3680 = vmatpush1.msra.mxu0 %v3679
        %3681 = vmatprep.subr.mxu0 0.0
        %v3682 = vand.u32 %v1169, 4294901760
        %3683 = vmatpush1.msra.mxu0 %v3682
        %3684 = vmatprep.subr.mxu0 0.0
        %v3685 = vand.u32 %v1170, 4294901760
        %3686 = vmatpush1.msra.mxu0 %v3685
        %3687 = vmatprep.subr.mxu0 0.0
        %v3688 = vand.u32 %v1171, 4294901760
        %3689 = vmatpush1.msra.mxu0 %v3688
        %3690 = vmatprep.subr.mxu0 0.0
        %v3691 = vand.u32 %v1172, 4294901760
        %3692 = vmatpush1.msra.mxu0 %v3691
        %3693 = vmatprep.subr.mxu0 0.0
        %v3694 = vand.u32 %v1173, 4294901760
        %3695 = vmatpush1.msra.mxu0 %v3694
        %3696 = vmatprep.subr.mxu0 0.0
        %v3697 = vand.u32 %v1174, 4294901760
        %3698 = vmatpush1.msra.mxu0 %v3697
        %3699 = vmatprep.subr.mxu0 0.0
        %v3700 = vand.u32 %v1175, 4294901760
        %3701 = vmatpush1.msra.mxu0 %v3700
        %3702 = vmatprep.subr.mxu0 0.0
        %v3703 = vand.u32 %v1176, 4294901760
        %3704 = vmatpush1.msra.mxu0 %v3703
        %3705 = vmatprep.subr.mxu0 0.0
        %v3706 = vand.u32 %v1177, 4294901760
        %3707 = vmatpush1.msra.mxu0 %v3706
        %3708 = vmatprep.subr.mxu0 0.0
        %v3709 = vand.u32 %v1178, 4294901760
        %3710 = vmatpush1.msra.mxu0 %v3709
        %3711 = vmatprep.subr.mxu0 0.0
        %v3712 = vand.u32 %v1179, 4294901760
        %3713 = vmatpush1.msra.mxu0 %v3712
        %3714 = vmatprep.subr.mxu0 0.0
        %v3715 = vand.u32 %v1180, 4294901760
        %3716 = vmatpush1.msra.mxu0 %v3715
        %3717 = vmatprep.subr.mxu0 0.0
        %v3718 = vand.u32 %v1181, 4294901760
        %3719 = vmatpush1.msra.mxu0 %v3718
        %3720 = vmatprep.subr.mxu0 0.0
        %v3721 = vand.u32 %v1182, 4294901760
        %3722 = vmatpush1.msra.mxu0 %v3721
        %v3723 = vand.u32 %v1382, 4294901760
        %v3724 = vsub.f32 %v1382, %v3723
        %v3725 = vand.u32 %v3724, 4294901760
        %3726 = vmatprep.mubr.f32.mxu0 %v3725
        %v3727 = vand.u32 %v1375, 4294901760
        %v3728 = vsub.f32 %v1375, %v3727
        %v3729 = vand.u32 %v3728, 4294901760
        %3730 = vmatmul.mubr.f32.gmra.mrb[0].mxu0 %v3729
        %v3731 = vpop.f32.mrb[0].mxu0
        %v3732 = vadd.f32 %v3624, %v3731
        %v3733 = vpop.f32.mrb[0].mxu0
        %3734 = vdwg.mxu0
        %3735 = vmatprep.subr.mxu0 0.0
        %v3736 = vand.u32 %v1151, 4294901760
        %v3737 = vsub.f32 %v1151, %v3736
        %v3738 = vand.u32 %v3737, 4294901760
        %3739 = vmatpush1.msra.mxu0 %v3738
        %3740 = vmatprep.subr.mxu0 0.0
        %v3741 = vand.u32 %v1152, 4294901760
        %v3742 = vsub.f32 %v1152, %v3741
        %v3743 = vand.u32 %v3742, 4294901760
        %3744 = vmatpush1.msra.mxu0 %v3743
        %3745 = vmatprep.subr.mxu0 0.0
        %v3746 = vand.u32 %v1153, 4294901760
        %v3747 = vsub.f32 %v1153, %v3746
        %v3748 = vand.u32 %v3747, 4294901760
        %3749 = vmatpush1.msra.mxu0 %v3748
        %3750 = vmatprep.subr.mxu0 0.0
        %v3751 = vand.u32 %v1154, 4294901760
        %v3752 = vsub.f32 %v1154, %v3751
        %v3753 = vand.u32 %v3752, 4294901760
        %3754 = vmatpush1.msra.mxu0 %v3753
        %3755 = vmatprep.subr.mxu0 0.0
        %v3756 = vand.u32 %v1155, 4294901760
        %v3757 = vsub.f32 %v1155, %v3756
        %v3758 = vand.u32 %v3757, 4294901760
        %3759 = vmatpush1.msra.mxu0 %v3758
        %3760 = vmatprep.subr.mxu0 0.0
        %v3761 = vand.u32 %v1156, 4294901760
        %v3762 = vsub.f32 %v1156, %v3761
        %v3763 = vand.u32 %v3762, 4294901760
        %3764 = vmatpush1.msra.mxu0 %v3763
        %3765 = vmatprep.subr.mxu0 0.0
        %v3766 = vand.u32 %v1157, 4294901760
        %v3767 = vsub.f32 %v1157, %v3766
        %v3768 = vand.u32 %v3767, 4294901760
        %3769 = vmatpush1.msra.mxu0 %v3768
        %3770 = vmatprep.subr.mxu0 0.0
        %v3771 = vand.u32 %v1158, 4294901760
        %v3772 = vsub.f32 %v1158, %v3771
        %v3773 = vand.u32 %v3772, 4294901760
        %3774 = vmatpush1.msra.mxu0 %v3773
        %3775 = vmatprep.subr.mxu0 0.0
        %v3776 = vand.u32 %v1159, 4294901760
        %v3777 = vsub.f32 %v1159, %v3776
        %v3778 = vand.u32 %v3777, 4294901760
        %3779 = vmatpush1.msra.mxu0 %v3778
        %3780 = vmatprep.subr.mxu0 0.0
        %v3781 = vand.u32 %v1160, 4294901760
        %v3782 = vsub.f32 %v1160, %v3781
        %v3783 = vand.u32 %v3782, 4294901760
        %3784 = vmatpush1.msra.mxu0 %v3783
        %3785 = vmatprep.subr.mxu0 0.0
        %v3786 = vand.u32 %v1161, 4294901760
        %v3787 = vsub.f32 %v1161, %v3786
        %v3788 = vand.u32 %v3787, 4294901760
        %3789 = vmatpush1.msra.mxu0 %v3788
        %3790 = vmatprep.subr.mxu0 0.0
        %v3791 = vand.u32 %v1162, 4294901760
        %v3792 = vsub.f32 %v1162, %v3791
        %v3793 = vand.u32 %v3792, 4294901760
        %3794 = vmatpush1.msra.mxu0 %v3793
        %3795 = vmatprep.subr.mxu0 0.0
        %v3796 = vand.u32 %v1163, 4294901760
        %v3797 = vsub.f32 %v1163, %v3796
        %v3798 = vand.u32 %v3797, 4294901760
        %3799 = vmatpush1.msra.mxu0 %v3798
        %3800 = vmatprep.subr.mxu0 0.0
        %v3801 = vand.u32 %v1164, 4294901760
        %v3802 = vsub.f32 %v1164, %v3801
        %v3803 = vand.u32 %v3802, 4294901760
        %3804 = vmatpush1.msra.mxu0 %v3803
        %3805 = vmatprep.subr.mxu0 0.0
        %v3806 = vand.u32 %v1165, 4294901760
        %v3807 = vsub.f32 %v1165, %v3806
        %v3808 = vand.u32 %v3807, 4294901760
        %3809 = vmatpush1.msra.mxu0 %v3808
        %3810 = vmatprep.subr.mxu0 0.0
        %v3811 = vand.u32 %v1166, 4294901760
        %v3812 = vsub.f32 %v1166, %v3811
        %v3813 = vand.u32 %v3812, 4294901760
        %3814 = vmatpush1.msra.mxu0 %v3813
        %3815 = vmatprep.subr.mxu0 0.0
        %v3816 = vand.u32 %v1167, 4294901760
        %v3817 = vsub.f32 %v1167, %v3816
        %v3818 = vand.u32 %v3817, 4294901760
        %3819 = vmatpush1.msra.mxu0 %v3818
        %3820 = vmatprep.subr.mxu0 0.0
        %v3821 = vand.u32 %v1168, 4294901760
        %v3822 = vsub.f32 %v1168, %v3821
        %v3823 = vand.u32 %v3822, 4294901760
        %3824 = vmatpush1.msra.mxu0 %v3823
        %3825 = vmatprep.subr.mxu0 0.0
        %v3826 = vand.u32 %v1169, 4294901760
        %v3827 = vsub.f32 %v1169, %v3826
        %v3828 = vand.u32 %v3827, 4294901760
        %3829 = vmatpush1.msra.mxu0 %v3828
        %3830 = vmatprep.subr.mxu0 0.0
        %v3831 = vand.u32 %v1170, 4294901760
        %v3832 = vsub.f32 %v1170, %v3831
        %v3833 = vand.u32 %v3832, 4294901760
        %3834 = vmatpush1.msra.mxu0 %v3833
        %3835 = vmatprep.subr.mxu0 0.0
        %v3836 = vand.u32 %v1171, 4294901760
        %v3837 = vsub.f32 %v1171, %v3836
        %v3838 = vand.u32 %v3837, 4294901760
        %3839 = vmatpush1.msra.mxu0 %v3838
        %3840 = vmatprep.subr.mxu0 0.0
        %v3841 = vand.u32 %v1172, 4294901760
        %v3842 = vsub.f32 %v1172, %v3841
        %v3843 = vand.u32 %v3842, 4294901760
        %3844 = vmatpush1.msra.mxu0 %v3843
        %3845 = vmatprep.subr.mxu0 0.0
        %v3846 = vand.u32 %v1173, 4294901760
        %v3847 = vsub.f32 %v1173, %v3846
        %v3848 = vand.u32 %v3847, 4294901760
        %3849 = vmatpush1.msra.mxu0 %v3848
        %3850 = vmatprep.subr.mxu0 0.0
        %v3851 = vand.u32 %v1174, 4294901760
        %v3852 = vsub.f32 %v1174, %v3851
        %v3853 = vand.u32 %v3852, 4294901760
        %3854 = vmatpush1.msra.mxu0 %v3853
        %3855 = vmatprep.subr.mxu0 0.0
        %v3856 = vand.u32 %v1175, 4294901760
        %v3857 = vsub.f32 %v1175, %v3856
        %v3858 = vand.u32 %v3857, 4294901760
        %3859 = vmatpush1.msra.mxu0 %v3858
        %3860 = vmatprep.subr.mxu0 0.0
        %v3861 = vand.u32 %v1176, 4294901760
        %v3862 = vsub.f32 %v1176, %v3861
        %v3863 = vand.u32 %v3862, 4294901760
        %3864 = vmatpush1.msra.mxu0 %v3863
        %3865 = vmatprep.subr.mxu0 0.0
        %v3866 = vand.u32 %v1177, 4294901760
        %v3867 = vsub.f32 %v1177, %v3866
        %v3868 = vand.u32 %v3867, 4294901760
        %3869 = vmatpush1.msra.mxu0 %v3868
        %3870 = vmatprep.subr.mxu0 0.0
        %v3871 = vand.u32 %v1178, 4294901760
        %v3872 = vsub.f32 %v1178, %v3871
        %v3873 = vand.u32 %v3872, 4294901760
        %3874 = vmatpush1.msra.mxu0 %v3873
        %3875 = vmatprep.subr.mxu0 0.0
        %v3876 = vand.u32 %v1179, 4294901760
        %v3877 = vsub.f32 %v1179, %v3876
        %v3878 = vand.u32 %v3877, 4294901760
        %3879 = vmatpush1.msra.mxu0 %v3878
        %3880 = vmatprep.subr.mxu0 0.0
        %v3881 = vand.u32 %v1180, 4294901760
        %v3882 = vsub.f32 %v1180, %v3881
        %v3883 = vand.u32 %v3882, 4294901760
        %3884 = vmatpush1.msra.mxu0 %v3883
        %3885 = vmatprep.subr.mxu0 0.0
        %v3886 = vand.u32 %v1181, 4294901760
        %v3887 = vsub.f32 %v1181, %v3886
        %v3888 = vand.u32 %v3887, 4294901760
        %3889 = vmatpush1.msra.mxu0 %v3888
        %3890 = vmatprep.subr.mxu0 0.0
        %v3891 = vand.u32 %v1182, 4294901760
        %v3892 = vsub.f32 %v1182, %v3891
        %v3893 = vand.u32 %v3892, 4294901760
        %3894 = vmatpush1.msra.mxu0 %v3893
        %v3895 = vand.u32 %v1382, 4294901760
        %3896 = vmatprep.mubr.f32.mxu0 %v3895
        %v3897 = vand.u32 %v1375, 4294901760
        %3898 = vmatmul.mubr.f32.gmra.mrb[0].mxu0 %v3897
        %v3899 = vpop.f32.mrb[0].mxu0
        %v3900 = vadd.f32 %v3732, %v3899
        %v3901 = vpop.f32.mrb[0].mxu0
        %3902 = vdwg.mxu0
        %3903 = vmatprep.subr.mxu0 0.0
        %v3904 = vand.u32 %v1151, 4294901760
        %3905 = vmatpush1.msra.mxu0 %v3904
        %3906 = vmatprep.subr.mxu0 0.0
        %v3907 = vand.u32 %v1152, 4294901760
        %3908 = vmatpush1.msra.mxu0 %v3907
        %3909 = vmatprep.subr.mxu0 0.0
        %v3910 = vand.u32 %v1153, 4294901760
        %3911 = vmatpush1.msra.mxu0 %v3910
        %3912 = vmatprep.subr.mxu0 0.0
        %v3913 = vand.u32 %v1154, 4294901760
        %3914 = vmatpush1.msra.mxu0 %v3913
        %3915 = vmatprep.subr.mxu0 0.0
        %v3916 = vand.u32 %v1155, 4294901760
        %3917 = vmatpush1.msra.mxu0 %v3916
        %3918 = vmatprep.subr.mxu0 0.0
        %v3919 = vand.u32 %v1156, 4294901760
        %3920 = vmatpush1.msra.mxu0 %v3919
        %3921 = vmatprep.subr.mxu0 0.0
        %v3922 = vand.u32 %v1157, 4294901760
        %3923 = vmatpush1.msra.mxu0 %v3922
        %3924 = vmatprep.subr.mxu0 0.0
        %v3925 = vand.u32 %v1158, 4294901760
        %3926 = vmatpush1.msra.mxu0 %v3925
        %3927 = vmatprep.subr.mxu0 0.0
        %v3928 = vand.u32 %v1159, 4294901760
        %3929 = vmatpush1.msra.mxu0 %v3928
        %3930 = vmatprep.subr.mxu0 0.0
        %v3931 = vand.u32 %v1160, 4294901760
        %3932 = vmatpush1.msra.mxu0 %v3931
        %3933 = vmatprep.subr.mxu0 0.0
        %v3934 = vand.u32 %v1161, 4294901760
        %3935 = vmatpush1.msra.mxu0 %v3934
        %3936 = vmatprep.subr.mxu0 0.0
        %v3937 = vand.u32 %v1162, 4294901760
        %3938 = vmatpush1.msra.mxu0 %v3937
        %3939 = vmatprep.subr.mxu0 0.0
        %v3940 = vand.u32 %v1163, 4294901760
        %3941 = vmatpush1.msra.mxu0 %v3940
        %3942 = vmatprep.subr.mxu0 0.0
        %v3943 = vand.u32 %v1164, 4294901760
        %3944 = vmatpush1.msra.mxu0 %v3943
        %3945 = vmatprep.subr.mxu0 0.0
        %v3946 = vand.u32 %v1165, 4294901760
        %3947 = vmatpush1.msra.mxu0 %v3946
        %3948 = vmatprep.subr.mxu0 0.0
        %v3949 = vand.u32 %v1166, 4294901760
        %3950 = vmatpush1.msra.mxu0 %v3949
        %3951 = vmatprep.subr.mxu0 0.0
        %v3952 = vand.u32 %v1167, 4294901760
        %3953 = vmatpush1.msra.mxu0 %v3952
        %3954 = vmatprep.subr.mxu0 0.0
        %v3955 = vand.u32 %v1168, 4294901760
        %3956 = vmatpush1.msra.mxu0 %v3955
        %3957 = vmatprep.subr.mxu0 0.0
        %v3958 = vand.u32 %v1169, 4294901760
        %3959 = vmatpush1.msra.mxu0 %v3958
        %3960 = vmatprep.subr.mxu0 0.0
        %v3961 = vand.u32 %v1170, 4294901760
        %3962 = vmatpush1.msra.mxu0 %v3961
        %3963 = vmatprep.subr.mxu0 0.0
        %v3964 = vand.u32 %v1171, 4294901760
        %3965 = vmatpush1.msra.mxu0 %v3964
        %3966 = vmatprep.subr.mxu0 0.0
        %v3967 = vand.u32 %v1172, 4294901760
        %3968 = vmatpush1.msra.mxu0 %v3967
        %3969 = vmatprep.subr.mxu0 0.0
        %v3970 = vand.u32 %v1173, 4294901760
        %3971 = vmatpush1.msra.mxu0 %v3970
        %3972 = vmatprep.subr.mxu0 0.0
        %v3973 = vand.u32 %v1174, 4294901760
        %3974 = vmatpush1.msra.mxu0 %v3973
        %3975 = vmatprep.subr.mxu0 0.0
        %v3976 = vand.u32 %v1175, 4294901760
        %3977 = vmatpush1.msra.mxu0 %v3976
        %3978 = vmatprep.subr.mxu0 0.0
        %v3979 = vand.u32 %v1176, 4294901760
        %3980 = vmatpush1.msra.mxu0 %v3979
        %3981 = vmatprep.subr.mxu0 0.0
        %v3982 = vand.u32 %v1177, 4294901760
        %3983 = vmatpush1.msra.mxu0 %v3982
        %3984 = vmatprep.subr.mxu0 0.0
        %v3985 = vand.u32 %v1178, 4294901760
        %3986 = vmatpush1.msra.mxu0 %v3985
        %3987 = vmatprep.subr.mxu0 0.0
        %v3988 = vand.u32 %v1179, 4294901760
        %3989 = vmatpush1.msra.mxu0 %v3988
        %3990 = vmatprep.subr.mxu0 0.0
        %v3991 = vand.u32 %v1180, 4294901760
        %3992 = vmatpush1.msra.mxu0 %v3991
        %3993 = vmatprep.subr.mxu0 0.0
        %v3994 = vand.u32 %v1181, 4294901760
        %3995 = vmatpush1.msra.mxu0 %v3994
        %3996 = vmatprep.subr.mxu0 0.0
        %v3997 = vand.u32 %v1182, 4294901760
        %3998 = vmatpush1.msra.mxu0 %v3997
        %v3999 = vand.u32 %v1382, 4294901760
        %4000 = vmatprep.mubr.f32.mxu0 %v3999
        %v4001 = vand.u32 %v1375, 4294901760
        %4002 = vmatmul.mubr.f32.gmra.mrb[0].mxu0 %v4001
        %v4003 = vpop.f32.mrb[0].mxu0
        %v4004 = vadd.f32 %v3900, %v4003
        %v4005 = vpop.f32.mrb[0].mxu0
        %4006 = vdwg.mxu0
        %4007 = vmatprep.subr.mxu0 0.0
        %v4008 = vand.u32 %v1183, 4294901760
        %4009 = vmatpush1.msra.mxu0 %v4008
        %4010 = vmatprep.subr.mxu0 0.0
        %v4011 = vand.u32 %v1184, 4294901760
        %4012 = vmatpush1.msra.mxu0 %v4011
        %4013 = vmatprep.subr.mxu0 0.0
        %v4014 = vand.u32 %v1185, 4294901760
        %4015 = vmatpush1.msra.mxu0 %v4014
        %4016 = vmatprep.subr.mxu0 0.0
        %v4017 = vand.u32 %v1186, 4294901760
        %4018 = vmatpush1.msra.mxu0 %v4017
        %4019 = vmatprep.subr.mxu0 0.0
        %v4020 = vand.u32 %v1187, 4294901760
        %4021 = vmatpush1.msra.mxu0 %v4020
        %4022 = vmatprep.subr.mxu0 0.0
        %v4023 = vand.u32 %v1188, 4294901760
        %4024 = vmatpush1.msra.mxu0 %v4023
        %4025 = vmatprep.subr.mxu0 0.0
        %v4026 = vand.u32 %v1189, 4294901760
        %4027 = vmatpush1.msra.mxu0 %v4026
        %4028 = vmatprep.subr.mxu0 0.0
        %v4029 = vand.u32 %v1190, 4294901760
        %4030 = vmatpush1.msra.mxu0 %v4029
        %4031 = vmatprep.subr.mxu0 0.0
        %v4032 = vand.u32 %v1191, 4294901760
        %4033 = vmatpush1.msra.mxu0 %v4032
        %4034 = vmatprep.subr.mxu0 0.0
        %v4035 = vand.u32 %v1192, 4294901760
        %4036 = vmatpush1.msra.mxu0 %v4035
        %4037 = vmatprep.subr.mxu0 0.0
        %v4038 = vand.u32 %v1193, 4294901760
        %4039 = vmatpush1.msra.mxu0 %v4038
        %4040 = vmatprep.subr.mxu0 0.0
        %v4041 = vand.u32 %v1194, 4294901760
        %4042 = vmatpush1.msra.mxu0 %v4041
        %4043 = vmatprep.subr.mxu0 0.0
        %v4044 = vand.u32 %v1195, 4294901760
        %4045 = vmatpush1.msra.mxu0 %v4044
        %4046 = vmatprep.subr.mxu0 0.0
        %v4047 = vand.u32 %v1196, 4294901760
        %4048 = vmatpush1.msra.mxu0 %v4047
        %4049 = vmatprep.subr.mxu0 0.0
        %v4050 = vand.u32 %v1197, 4294901760
        %4051 = vmatpush1.msra.mxu0 %v4050
        %4052 = vmatprep.subr.mxu0 0.0
        %v4053 = vand.u32 %v1198, 4294901760
        %4054 = vmatpush1.msra.mxu0 %v4053
        %4055 = vmatprep.subr.mxu0 0.0
        %v4056 = vand.u32 %v1199, 4294901760
        %4057 = vmatpush1.msra.mxu0 %v4056
        %4058 = vmatprep.subr.mxu0 0.0
        %v4059 = vand.u32 %v1200, 4294901760
        %4060 = vmatpush1.msra.mxu0 %v4059
        %4061 = vmatprep.subr.mxu0 0.0
        %v4062 = vand.u32 %v1201, 4294901760
        %4063 = vmatpush1.msra.mxu0 %v4062
        %4064 = vmatprep.subr.mxu0 0.0
        %v4065 = vand.u32 %v1202, 4294901760
        %4066 = vmatpush1.msra.mxu0 %v4065
        %4067 = vmatprep.subr.mxu0 0.0
        %v4068 = vand.u32 %v1203, 4294901760
        %4069 = vmatpush1.msra.mxu0 %v4068
        %4070 = vmatprep.subr.mxu0 0.0
        %v4071 = vand.u32 %v1204, 4294901760
        %4072 = vmatpush1.msra.mxu0 %v4071
        %4073 = vmatprep.subr.mxu0 0.0
        %v4074 = vand.u32 %v1205, 4294901760
        %4075 = vmatpush1.msra.mxu0 %v4074
        %4076 = vmatprep.subr.mxu0 0.0
        %v4077 = vand.u32 %v1206, 4294901760
        %4078 = vmatpush1.msra.mxu0 %v4077
        %4079 = vmatprep.subr.mxu0 0.0
        %v4080 = vand.u32 %v1207, 4294901760
        %4081 = vmatpush1.msra.mxu0 %v4080
        %4082 = vmatprep.subr.mxu0 0.0
        %v4083 = vand.u32 %v1208, 4294901760
        %4084 = vmatpush1.msra.mxu0 %v4083
        %4085 = vmatprep.subr.mxu0 0.0
        %v4086 = vand.u32 %v1209, 4294901760
        %4087 = vmatpush1.msra.mxu0 %v4086
        %4088 = vmatprep.subr.mxu0 0.0
        %v4089 = vand.u32 %v1210, 4294901760
        %4090 = vmatpush1.msra.mxu0 %v4089
        %4091 = vmatprep.subr.mxu0 0.0
        %v4092 = vand.u32 %v1211, 4294901760
        %4093 = vmatpush1.msra.mxu0 %v4092
        %4094 = vmatprep.subr.mxu0 0.0
        %v4095 = vand.u32 %v1212, 4294901760
        %4096 = vmatpush1.msra.mxu0 %v4095
        %4097 = vmatprep.subr.mxu0 0.0
        %v4098 = vand.u32 %v1213, 4294901760
        %4099 = vmatpush1.msra.mxu0 %v4098
        %4100 = vmatprep.subr.mxu0 0.0
        %v4101 = vand.u32 %v1214, 4294901760
        %4102 = vmatpush1.msra.mxu0 %v4101
        %v4103 = vand.u32 %v1396, 4294901760
        %v4104 = vsub.f32 %v1396, %v4103
        %v4105 = vand.u32 %v4104, 4294901760
        %v4106 = vsub.f32 %v4104, %v4105
        %v4107 = vand.u32 %v4106, 4294901760
        %4108 = vmatprep.mubr.f32.mxu0 %v4107
        %v4109 = vand.u32 %v1389, 4294901760
        %v4110 = vsub.f32 %v1389, %v4109
        %v4111 = vand.u32 %v4110, 4294901760
        %v4112 = vsub.f32 %v4110, %v4111
        %v4113 = vand.u32 %v4112, 4294901760
        %4114 = vmatmul.mubr.f32.gmra.mrb[0].mxu0 %v4113
        %v4115 = vpop.f32.mrb[0].mxu0
        %v4116 = vadd.f32 %v4004, %v4115
        %v4117 = vpop.f32.mrb[0].mxu0
        %4118 = vdwg.mxu0
        %4119 = vmatprep.subr.mxu0 0.0
        %v4120 = vand.u32 %v1183, 4294901760
        %v4121 = vsub.f32 %v1183, %v4120
        %v4122 = vand.u32 %v4121, 4294901760
        %v4123 = vsub.f32 %v4121, %v4122
        %v4124 = vand.u32 %v4123, 4294901760
        %4125 = vmatpush1.msra.mxu0 %v4124
        %4126 = vmatprep.subr.mxu0 0.0
        %v4127 = vand.u32 %v1184, 4294901760
        %v4128 = vsub.f32 %v1184, %v4127
        %v4129 = vand.u32 %v4128, 4294901760
        %v4130 = vsub.f32 %v4128, %v4129
        %v4131 = vand.u32 %v4130, 4294901760
        %4132 = vmatpush1.msra.mxu0 %v4131
        %4133 = vmatprep.subr.mxu0 0.0
        %v4134 = vand.u32 %v1185, 4294901760
        %v4135 = vsub.f32 %v1185, %v4134
        %v4136 = vand.u32 %v4135, 4294901760
        %v4137 = vsub.f32 %v4135, %v4136
        %v4138 = vand.u32 %v4137, 4294901760
        %4139 = vmatpush1.msra.mxu0 %v4138
        %4140 = vmatprep.subr.mxu0 0.0
        %v4141 = vand.u32 %v1186, 4294901760
        %v4142 = vsub.f32 %v1186, %v4141
        %v4143 = vand.u32 %v4142, 4294901760
        %v4144 = vsub.f32 %v4142, %v4143
        %v4145 = vand.u32 %v4144, 4294901760
        %4146 = vmatpush1.msra.mxu0 %v4145
        %4147 = vmatprep.subr.mxu0 0.0
        %v4148 = vand.u32 %v1187, 4294901760
        %v4149 = vsub.f32 %v1187, %v4148
        %v4150 = vand.u32 %v4149, 4294901760
        %v4151 = vsub.f32 %v4149, %v4150
        %v4152 = vand.u32 %v4151, 4294901760
        %4153 = vmatpush1.msra.mxu0 %v4152
        %4154 = vmatprep.subr.mxu0 0.0
        %v4155 = vand.u32 %v1188, 4294901760
        %v4156 = vsub.f32 %v1188, %v4155
        %v4157 = vand.u32 %v4156, 4294901760
        %v4158 = vsub.f32 %v4156, %v4157
        %v4159 = vand.u32 %v4158, 4294901760
        %4160 = vmatpush1.msra.mxu0 %v4159
        %4161 = vmatprep.subr.mxu0 0.0
        %v4162 = vand.u32 %v1189, 4294901760
        %v4163 = vsub.f32 %v1189, %v4162
        %v4164 = vand.u32 %v4163, 4294901760
        %v4165 = vsub.f32 %v4163, %v4164
        %v4166 = vand.u32 %v4165, 4294901760
        %4167 = vmatpush1.msra.mxu0 %v4166
        %4168 = vmatprep.subr.mxu0 0.0
        %v4169 = vand.u32 %v1190, 4294901760
        %v4170 = vsub.f32 %v1190, %v4169
        %v4171 = vand.u32 %v4170, 4294901760
        %v4172 = vsub.f32 %v4170, %v4171
        %v4173 = vand.u32 %v4172, 4294901760
        %4174 = vmatpush1.msra.mxu0 %v4173
        %4175 = vmatprep.subr.mxu0 0.0
        %v4176 = vand.u32 %v1191, 4294901760
        %v4177 = vsub.f32 %v1191, %v4176
        %v4178 = vand.u32 %v4177, 4294901760
        %v4179 = vsub.f32 %v4177, %v4178
        %v4180 = vand.u32 %v4179, 4294901760
        %4181 = vmatpush1.msra.mxu0 %v4180
        %4182 = vmatprep.subr.mxu0 0.0
        %v4183 = vand.u32 %v1192, 4294901760
        %v4184 = vsub.f32 %v1192, %v4183
        %v4185 = vand.u32 %v4184, 4294901760
        %v4186 = vsub.f32 %v4184, %v4185
        %v4187 = vand.u32 %v4186, 4294901760
        %4188 = vmatpush1.msra.mxu0 %v4187
        %4189 = vmatprep.subr.mxu0 0.0
        %v4190 = vand.u32 %v1193, 4294901760
        %v4191 = vsub.f32 %v1193, %v4190
        %v4192 = vand.u32 %v4191, 4294901760
        %v4193 = vsub.f32 %v4191, %v4192
        %v4194 = vand.u32 %v4193, 4294901760
        %4195 = vmatpush1.msra.mxu0 %v4194
        %4196 = vmatprep.subr.mxu0 0.0
        %v4197 = vand.u32 %v1194, 4294901760
        %v4198 = vsub.f32 %v1194, %v4197
        %v4199 = vand.u32 %v4198, 4294901760
        %v4200 = vsub.f32 %v4198, %v4199
        %v4201 = vand.u32 %v4200, 4294901760
        %4202 = vmatpush1.msra.mxu0 %v4201
        %4203 = vmatprep.subr.mxu0 0.0
        %v4204 = vand.u32 %v1195, 4294901760
        %v4205 = vsub.f32 %v1195, %v4204
        %v4206 = vand.u32 %v4205, 4294901760
        %v4207 = vsub.f32 %v4205, %v4206
        %v4208 = vand.u32 %v4207, 4294901760
        %4209 = vmatpush1.msra.mxu0 %v4208
        %4210 = vmatprep.subr.mxu0 0.0
        %v4211 = vand.u32 %v1196, 4294901760
        %v4212 = vsub.f32 %v1196, %v4211
        %v4213 = vand.u32 %v4212, 4294901760
        %v4214 = vsub.f32 %v4212, %v4213
        %v4215 = vand.u32 %v4214, 4294901760
        %4216 = vmatpush1.msra.mxu0 %v4215
        %4217 = vmatprep.subr.mxu0 0.0
        %v4218 = vand.u32 %v1197, 4294901760
        %v4219 = vsub.f32 %v1197, %v4218
        %v4220 = vand.u32 %v4219, 4294901760
        %v4221 = vsub.f32 %v4219, %v4220
        %v4222 = vand.u32 %v4221, 4294901760
        %4223 = vmatpush1.msra.mxu0 %v4222
        %4224 = vmatprep.subr.mxu0 0.0
        %v4225 = vand.u32 %v1198, 4294901760
        %v4226 = vsub.f32 %v1198, %v4225
        %v4227 = vand.u32 %v4226, 4294901760
        %v4228 = vsub.f32 %v4226, %v4227
        %v4229 = vand.u32 %v4228, 4294901760
        %4230 = vmatpush1.msra.mxu0 %v4229
        %4231 = vmatprep.subr.mxu0 0.0
        %v4232 = vand.u32 %v1199, 4294901760
        %v4233 = vsub.f32 %v1199, %v4232
        %v4234 = vand.u32 %v4233, 4294901760
        %v4235 = vsub.f32 %v4233, %v4234
        %v4236 = vand.u32 %v4235, 4294901760
        %4237 = vmatpush1.msra.mxu0 %v4236
        %4238 = vmatprep.subr.mxu0 0.0
        %v4239 = vand.u32 %v1200, 4294901760
        %v4240 = vsub.f32 %v1200, %v4239
        %v4241 = vand.u32 %v4240, 4294901760
        %v4242 = vsub.f32 %v4240, %v4241
        %v4243 = vand.u32 %v4242, 4294901760
        %4244 = vmatpush1.msra.mxu0 %v4243
        %4245 = vmatprep.subr.mxu0 0.0
        %v4246 = vand.u32 %v1201, 4294901760
        %v4247 = vsub.f32 %v1201, %v4246
        %v4248 = vand.u32 %v4247, 4294901760
        %v4249 = vsub.f32 %v4247, %v4248
        %v4250 = vand.u32 %v4249, 4294901760
        %4251 = vmatpush1.msra.mxu0 %v4250
        %4252 = vmatprep.subr.mxu0 0.0
        %v4253 = vand.u32 %v1202, 4294901760
        %v4254 = vsub.f32 %v1202, %v4253
        %v4255 = vand.u32 %v4254, 4294901760
        %v4256 = vsub.f32 %v4254, %v4255
        %v4257 = vand.u32 %v4256, 4294901760
        %4258 = vmatpush1.msra.mxu0 %v4257
        %4259 = vmatprep.subr.mxu0 0.0
        %v4260 = vand.u32 %v1203, 4294901760
        %v4261 = vsub.f32 %v1203, %v4260
        %v4262 = vand.u32 %v4261, 4294901760
        %v4263 = vsub.f32 %v4261, %v4262
        %v4264 = vand.u32 %v4263, 4294901760
        %4265 = vmatpush1.msra.mxu0 %v4264
        %4266 = vmatprep.subr.mxu0 0.0
        %v4267 = vand.u32 %v1204, 4294901760
        %v4268 = vsub.f32 %v1204, %v4267
        %v4269 = vand.u32 %v4268, 4294901760
        %v4270 = vsub.f32 %v4268, %v4269
        %v4271 = vand.u32 %v4270, 4294901760
        %4272 = vmatpush1.msra.mxu0 %v4271
        %4273 = vmatprep.subr.mxu0 0.0
        %v4274 = vand.u32 %v1205, 4294901760
        %v4275 = vsub.f32 %v1205, %v4274
        %v4276 = vand.u32 %v4275, 4294901760
        %v4277 = vsub.f32 %v4275, %v4276
        %v4278 = vand.u32 %v4277, 4294901760
        %4279 = vmatpush1.msra.mxu0 %v4278
        %4280 = vmatprep.subr.mxu0 0.0
        %v4281 = vand.u32 %v1206, 4294901760
        %v4282 = vsub.f32 %v1206, %v4281
        %v4283 = vand.u32 %v4282, 4294901760
        %v4284 = vsub.f32 %v4282, %v4283
        %v4285 = vand.u32 %v4284, 4294901760
        %4286 = vmatpush1.msra.mxu0 %v4285
        %4287 = vmatprep.subr.mxu0 0.0
        %v4288 = vand.u32 %v1207, 4294901760
        %v4289 = vsub.f32 %v1207, %v4288
        %v4290 = vand.u32 %v4289, 4294901760
        %v4291 = vsub.f32 %v4289, %v4290
        %v4292 = vand.u32 %v4291, 4294901760
        %4293 = vmatpush1.msra.mxu0 %v4292
        %4294 = vmatprep.subr.mxu0 0.0
        %v4295 = vand.u32 %v1208, 4294901760
        %v4296 = vsub.f32 %v1208, %v4295
        %v4297 = vand.u32 %v4296, 4294901760
        %v4298 = vsub.f32 %v4296, %v4297
        %v4299 = vand.u32 %v4298, 4294901760
        %4300 = vmatpush1.msra.mxu0 %v4299
        %4301 = vmatprep.subr.mxu0 0.0
        %v4302 = vand.u32 %v1209, 4294901760
        %v4303 = vsub.f32 %v1209, %v4302
        %v4304 = vand.u32 %v4303, 4294901760
        %v4305 = vsub.f32 %v4303, %v4304
        %v4306 = vand.u32 %v4305, 4294901760
        %4307 = vmatpush1.msra.mxu0 %v4306
        %4308 = vmatprep.subr.mxu0 0.0
        %v4309 = vand.u32 %v1210, 4294901760
        %v4310 = vsub.f32 %v1210, %v4309
        %v4311 = vand.u32 %v4310, 4294901760
        %v4312 = vsub.f32 %v4310, %v4311
        %v4313 = vand.u32 %v4312, 4294901760
        %4314 = vmatpush1.msra.mxu0 %v4313
        %4315 = vmatprep.subr.mxu0 0.0
        %v4316 = vand.u32 %v1211, 4294901760
        %v4317 = vsub.f32 %v1211, %v4316
        %v4318 = vand.u32 %v4317, 4294901760
        %v4319 = vsub.f32 %v4317, %v4318
        %v4320 = vand.u32 %v4319, 4294901760
        %4321 = vmatpush1.msra.mxu0 %v4320
        %4322 = vmatprep.subr.mxu0 0.0
        %v4323 = vand.u32 %v1212, 4294901760
        %v4324 = vsub.f32 %v1212, %v4323
        %v4325 = vand.u32 %v4324, 4294901760
        %v4326 = vsub.f32 %v4324, %v4325
        %v4327 = vand.u32 %v4326, 4294901760
        %4328 = vmatpush1.msra.mxu0 %v4327
        %4329 = vmatprep.subr.mxu0 0.0
        %v4330 = vand.u32 %v1213, 4294901760
        %v4331 = vsub.f32 %v1213, %v4330
        %v4332 = vand.u32 %v4331, 4294901760
        %v4333 = vsub.f32 %v4331, %v4332
        %v4334 = vand.u32 %v4333, 4294901760
        %4335 = vmatpush1.msra.mxu0 %v4334
        %4336 = vmatprep.subr.mxu0 0.0
        %v4337 = vand.u32 %v1214, 4294901760
        %v4338 = vsub.f32 %v1214, %v4337
        %v4339 = vand.u32 %v4338, 4294901760
        %v4340 = vsub.f32 %v4338, %v4339
        %v4341 = vand.u32 %v4340, 4294901760
        %4342 = vmatpush1.msra.mxu0 %v4341
        %v4343 = vand.u32 %v1396, 4294901760
        %4344 = vmatprep.mubr.f32.mxu0 %v4343
        %v4345 = vand.u32 %v1389, 4294901760
        %4346 = vmatmul.mubr.f32.gmra.mrb[0].mxu0 %v4345
        %v4347 = vpop.f32.mrb[0].mxu0
        %v4348 = vadd.f32 %v4116, %v4347
        %v4349 = vpop.f32.mrb[0].mxu0
        %4350 = vdwg.mxu0
        %4351 = vmatprep.subr.mxu0 0.0
        %v4352 = vand.u32 %v1183, 4294901760
        %v4353 = vsub.f32 %v1183, %v4352
        %4354 = vmatpush1.msra.mxu0 %v4353
        %4355 = vmatprep.subr.mxu0 0.0
        %v4356 = vand.u32 %v1184, 4294901760
        %v4357 = vsub.f32 %v1184, %v4356
        %4358 = vmatpush1.msra.mxu0 %v4357
        %4359 = vmatprep.subr.mxu0 0.0
        %v4360 = vand.u32 %v1185, 4294901760
        %v4361 = vsub.f32 %v1185, %v4360
        %4362 = vmatpush1.msra.mxu0 %v4361
        %4363 = vmatprep.subr.mxu0 0.0
        %v4364 = vand.u32 %v1186, 4294901760
        %v4365 = vsub.f32 %v1186, %v4364
        %4366 = vmatpush1.msra.mxu0 %v4365
        %4367 = vmatprep.subr.mxu0 0.0
        %v4368 = vand.u32 %v1187, 4294901760
        %v4369 = vsub.f32 %v1187, %v4368
        %4370 = vmatpush1.msra.mxu0 %v4369
        %4371 = vmatprep.subr.mxu0 0.0
        %v4372 = vand.u32 %v1188, 4294901760
        %v4373 = vsub.f32 %v1188, %v4372
        %4374 = vmatpush1.msra.mxu0 %v4373
        %4375 = vmatprep.subr.mxu0 0.0
        %v4376 = vand.u32 %v1189, 4294901760
        %v4377 = vsub.f32 %v1189, %v4376
        %4378 = vmatpush1.msra.mxu0 %v4377
        %4379 = vmatprep.subr.mxu0 0.0
        %v4380 = vand.u32 %v1190, 4294901760
        %v4381 = vsub.f32 %v1190, %v4380
        %4382 = vmatpush1.msra.mxu0 %v4381
        %4383 = vmatprep.subr.mxu0 0.0
        %v4384 = vand.u32 %v1191, 4294901760
        %v4385 = vsub.f32 %v1191, %v4384
        %4386 = vmatpush1.msra.mxu0 %v4385
        %4387 = vmatprep.subr.mxu0 0.0
        %v4388 = vand.u32 %v1192, 4294901760
        %v4389 = vsub.f32 %v1192, %v4388
        %4390 = vmatpush1.msra.mxu0 %v4389
        %4391 = vmatprep.subr.mxu0 0.0
        %v4392 = vand.u32 %v1193, 4294901760
        %v4393 = vsub.f32 %v1193, %v4392
        %4394 = vmatpush1.msra.mxu0 %v4393
        %4395 = vmatprep.subr.mxu0 0.0
        %v4396 = vand.u32 %v1194, 4294901760
        %v4397 = vsub.f32 %v1194, %v4396
        %4398 = vmatpush1.msra.mxu0 %v4397
        %4399 = vmatprep.subr.mxu0 0.0
        %v4400 = vand.u32 %v1195, 4294901760
        %v4401 = vsub.f32 %v1195, %v4400
        %4402 = vmatpush1.msra.mxu0 %v4401
        %4403 = vmatprep.subr.mxu0 0.0
        %v4404 = vand.u32 %v1196, 4294901760
        %v4405 = vsub.f32 %v1196, %v4404
        %4406 = vmatpush1.msra.mxu0 %v4405
        %4407 = vmatprep.subr.mxu0 0.0
        %v4408 = vand.u32 %v1197, 4294901760
        %v4409 = vsub.f32 %v1197, %v4408
        %4410 = vmatpush1.msra.mxu0 %v4409
        %4411 = vmatprep.subr.mxu0 0.0
        %v4412 = vand.u32 %v1198, 4294901760
        %v4413 = vsub.f32 %v1198, %v4412
        %4414 = vmatpush1.msra.mxu0 %v4413
        %4415 = vmatprep.subr.mxu0 0.0
        %v4416 = vand.u32 %v1199, 4294901760
        %v4417 = vsub.f32 %v1199, %v4416
        %4418 = vmatpush1.msra.mxu0 %v4417
        %4419 = vmatprep.subr.mxu0 0.0
        %v4420 = vand.u32 %v1200, 4294901760
        %v4421 = vsub.f32 %v1200, %v4420
        %4422 = vmatpush1.msra.mxu0 %v4421
        %4423 = vmatprep.subr.mxu0 0.0
        %v4424 = vand.u32 %v1201, 4294901760
        %v4425 = vsub.f32 %v1201, %v4424
        %4426 = vmatpush1.msra.mxu0 %v4425
        %4427 = vmatprep.subr.mxu0 0.0
        %v4428 = vand.u32 %v1202, 4294901760
        %v4429 = vsub.f32 %v1202, %v4428
        %4430 = vmatpush1.msra.mxu0 %v4429
        %4431 = vmatprep.subr.mxu0 0.0
        %v4432 = vand.u32 %v1203, 4294901760
        %v4433 = vsub.f32 %v1203, %v4432
        %4434 = vmatpush1.msra.mxu0 %v4433
        %4435 = vmatprep.subr.mxu0 0.0
        %v4436 = vand.u32 %v1204, 4294901760
        %v4437 = vsub.f32 %v1204, %v4436
        %4438 = vmatpush1.msra.mxu0 %v4437
        %4439 = vmatprep.subr.mxu0 0.0
        %v4440 = vand.u32 %v1205, 4294901760
        %v4441 = vsub.f32 %v1205, %v4440
        %4442 = vmatpush1.msra.mxu0 %v4441
        %4443 = vmatprep.subr.mxu0 0.0
        %v4444 = vand.u32 %v1206, 4294901760
        %v4445 = vsub.f32 %v1206, %v4444
        %4446 = vmatpush1.msra.mxu0 %v4445
        %4447 = vmatprep.subr.mxu0 0.0
        %v4448 = vand.u32 %v1207, 4294901760
        %v4449 = vsub.f32 %v1207, %v4448
        %4450 = vmatpush1.msra.mxu0 %v4449
        %4451 = vmatprep.subr.mxu0 0.0
        %v4452 = vand.u32 %v1208, 4294901760
        %v4453 = vsub.f32 %v1208, %v4452
        %4454 = vmatpush1.msra.mxu0 %v4453
        %4455 = vmatprep.subr.mxu0 0.0
        %v4456 = vand.u32 %v1209, 4294901760
        %v4457 = vsub.f32 %v1209, %v4456
        %4458 = vmatpush1.msra.mxu0 %v4457
        %4459 = vmatprep.subr.mxu0 0.0
        %v4460 = vand.u32 %v1210, 4294901760
        %v4461 = vsub.f32 %v1210, %v4460
        %4462 = vmatpush1.msra.mxu0 %v4461
        %4463 = vmatprep.subr.mxu0 0.0
        %v4464 = vand.u32 %v1211, 4294901760
        %v4465 = vsub.f32 %v1211, %v4464
        %4466 = vmatpush1.msra.mxu0 %v4465
        %4467 = vmatprep.subr.mxu0 0.0
        %v4468 = vand.u32 %v1212, 4294901760
        %v4469 = vsub.f32 %v1212, %v4468
        %4470 = vmatpush1.msra.mxu0 %v4469
        %4471 = vmatprep.subr.mxu0 0.0
        %v4472 = vand.u32 %v1213, 4294901760
        %v4473 = vsub.f32 %v1213, %v4472
        %4474 = vmatpush1.msra.mxu0 %v4473
        %4475 = vmatprep.subr.mxu0 0.0
        %v4476 = vand.u32 %v1214, 4294901760
        %v4477 = vsub.f32 %v1214, %v4476
        %4478 = vmatpush1.msra.mxu0 %v4477
        %v4479 = vand.u32 %v1396, 4294901760
        %v4480 = vsub.f32 %v1396, %v4479
        %4481 = vmatprep.mubr.f32.mxu0 %v4480
        %v4482 = vand.u32 %v1389, 4294901760
        %v4483 = vsub.f32 %v1389, %v4482
        %4484 = vmatmul.mubr.f32.gmra.mrb[0].mxu0 %v4483
        %v4485 = vpop.f32.mrb[0].mxu0
        %v4486 = vadd.f32 %v4348, %v4485
        %v4487 = vpop.f32.mrb[0].mxu0
        %4488 = vdwg.mxu0
        %4489 = vmatprep.subr.mxu0 0.0
        %v4490 = vand.u32 %v1183, 4294901760
        %4491 = vmatpush1.msra.mxu0 %v4490
        %4492 = vmatprep.subr.mxu0 0.0
        %v4493 = vand.u32 %v1184, 4294901760
        %4494 = vmatpush1.msra.mxu0 %v4493
        %4495 = vmatprep.subr.mxu0 0.0
        %v4496 = vand.u32 %v1185, 4294901760
        %4497 = vmatpush1.msra.mxu0 %v4496
        %4498 = vmatprep.subr.mxu0 0.0
        %v4499 = vand.u32 %v1186, 4294901760
        %4500 = vmatpush1.msra.mxu0 %v4499
        %4501 = vmatprep.subr.mxu0 0.0
        %v4502 = vand.u32 %v1187, 4294901760
        %4503 = vmatpush1.msra.mxu0 %v4502
        %4504 = vmatprep.subr.mxu0 0.0
        %v4505 = vand.u32 %v1188, 4294901760
        %4506 = vmatpush1.msra.mxu0 %v4505
        %4507 = vmatprep.subr.mxu0 0.0
        %v4508 = vand.u32 %v1189, 4294901760
        %4509 = vmatpush1.msra.mxu0 %v4508
        %4510 = vmatprep.subr.mxu0 0.0
        %v4511 = vand.u32 %v1190, 4294901760
        %4512 = vmatpush1.msra.mxu0 %v4511
        %4513 = vmatprep.subr.mxu0 0.0
        %v4514 = vand.u32 %v1191, 4294901760
        %4515 = vmatpush1.msra.mxu0 %v4514
        %4516 = vmatprep.subr.mxu0 0.0
        %v4517 = vand.u32 %v1192, 4294901760
        %4518 = vmatpush1.msra.mxu0 %v4517
        %4519 = vmatprep.subr.mxu0 0.0
        %v4520 = vand.u32 %v1193, 4294901760
        %4521 = vmatpush1.msra.mxu0 %v4520
        %4522 = vmatprep.subr.mxu0 0.0
        %v4523 = vand.u32 %v1194, 4294901760
        %4524 = vmatpush1.msra.mxu0 %v4523
        %4525 = vmatprep.subr.mxu0 0.0
        %v4526 = vand.u32 %v1195, 4294901760
        %4527 = vmatpush1.msra.mxu0 %v4526
        %4528 = vmatprep.subr.mxu0 0.0
        %v4529 = vand.u32 %v1196, 4294901760
        %4530 = vmatpush1.msra.mxu0 %v4529
        %4531 = vmatprep.subr.mxu0 0.0
        %v4532 = vand.u32 %v1197, 4294901760
        %4533 = vmatpush1.msra.mxu0 %v4532
        %4534 = vmatprep.subr.mxu0 0.0
        %v4535 = vand.u32 %v1198, 4294901760
        %4536 = vmatpush1.msra.mxu0 %v4535
        %4537 = vmatprep.subr.mxu0 0.0
        %v4538 = vand.u32 %v1199, 4294901760
        %4539 = vmatpush1.msra.mxu0 %v4538
        %4540 = vmatprep.subr.mxu0 0.0
        %v4541 = vand.u32 %v1200, 4294901760
        %4542 = vmatpush1.msra.mxu0 %v4541
        %4543 = vmatprep.subr.mxu0 0.0
        %v4544 = vand.u32 %v1201, 4294901760
        %4545 = vmatpush1.msra.mxu0 %v4544
        %4546 = vmatprep.subr.mxu0 0.0
        %v4547 = vand.u32 %v1202, 4294901760
        %4548 = vmatpush1.msra.mxu0 %v4547
        %4549 = vmatprep.subr.mxu0 0.0
        %v4550 = vand.u32 %v1203, 4294901760
        %4551 = vmatpush1.msra.mxu0 %v4550
        %4552 = vmatprep.subr.mxu0 0.0
        %v4553 = vand.u32 %v1204, 4294901760
        %4554 = vmatpush1.msra.mxu0 %v4553
        %4555 = vmatprep.subr.mxu0 0.0
        %v4556 = vand.u32 %v1205, 4294901760
        %4557 = vmatpush1.msra.mxu0 %v4556
        %4558 = vmatprep.subr.mxu0 0.0
        %v4559 = vand.u32 %v1206, 4294901760
        %4560 = vmatpush1.msra.mxu0 %v4559
        %4561 = vmatprep.subr.mxu0 0.0
        %v4562 = vand.u32 %v1207, 4294901760
        %4563 = vmatpush1.msra.mxu0 %v4562
        %4564 = vmatprep.subr.mxu0 0.0
        %v4565 = vand.u32 %v1208, 4294901760
        %4566 = vmatpush1.msra.mxu0 %v4565
        %4567 = vmatprep.subr.mxu0 0.0
        %v4568 = vand.u32 %v1209, 4294901760
        %4569 = vmatpush1.msra.mxu0 %v4568
        %4570 = vmatprep.subr.mxu0 0.0
        %v4571 = vand.u32 %v1210, 4294901760
        %4572 = vmatpush1.msra.mxu0 %v4571
        %4573 = vmatprep.subr.mxu0 0.0
        %v4574 = vand.u32 %v1211, 4294901760
        %4575 = vmatpush1.msra.mxu0 %v4574
        %4576 = vmatprep.subr.mxu0 0.0
        %v4577 = vand.u32 %v1212, 4294901760
        %4578 = vmatpush1.msra.mxu0 %v4577
        %4579 = vmatprep.subr.mxu0 0.0
        %v4580 = vand.u32 %v1213, 4294901760
        %4581 = vmatpush1.msra.mxu0 %v4580
        %4582 = vmatprep.subr.mxu0 0.0
        %v4583 = vand.u32 %v1214, 4294901760
        %4584 = vmatpush1.msra.mxu0 %v4583
        %v4585 = vand.u32 %v1396, 4294901760
        %v4586 = vsub.f32 %v1396, %v4585
        %v4587 = vand.u32 %v4586, 4294901760
        %4588 = vmatprep.mubr.f32.mxu0 %v4587
        %v4589 = vand.u32 %v1389, 4294901760
        %v4590 = vsub.f32 %v1389, %v4589
        %v4591 = vand.u32 %v4590, 4294901760
        %4592 = vmatmul.mubr.f32.gmra.mrb[0].mxu0 %v4591
        %v4593 = vpop.f32.mrb[0].mxu0
        %v4594 = vadd.f32 %v4486, %v4593
        %v4595 = vpop.f32.mrb[0].mxu0
        %4596 = vdwg.mxu0
        %4597 = vmatprep.subr.mxu0 0.0
        %v4598 = vand.u32 %v1183, 4294901760
        %v4599 = vsub.f32 %v1183, %v4598
        %v4600 = vand.u32 %v4599, 4294901760
        %4601 = vmatpush1.msra.mxu0 %v4600
        %4602 = vmatprep.subr.mxu0 0.0
        %v4603 = vand.u32 %v1184, 4294901760
        %v4604 = vsub.f32 %v1184, %v4603
        %v4605 = vand.u32 %v4604, 4294901760
        %4606 = vmatpush1.msra.mxu0 %v4605
        %4607 = vmatprep.subr.mxu0 0.0
        %v4608 = vand.u32 %v1185, 4294901760
        %v4609 = vsub.f32 %v1185, %v4608
        %v4610 = vand.u32 %v4609, 4294901760
        %4611 = vmatpush1.msra.mxu0 %v4610
        %4612 = vmatprep.subr.mxu0 0.0
        %v4613 = vand.u32 %v1186, 4294901760
        %v4614 = vsub.f32 %v1186, %v4613
        %v4615 = vand.u32 %v4614, 4294901760
        %4616 = vmatpush1.msra.mxu0 %v4615
        %4617 = vmatprep.subr.mxu0 0.0
        %v4618 = vand.u32 %v1187, 4294901760
        %v4619 = vsub.f32 %v1187, %v4618
        %v4620 = vand.u32 %v4619, 4294901760
        %4621 = vmatpush1.msra.mxu0 %v4620
        %4622 = vmatprep.subr.mxu0 0.0
        %v4623 = vand.u32 %v1188, 4294901760
        %v4624 = vsub.f32 %v1188, %v4623
        %v4625 = vand.u32 %v4624, 4294901760
        %4626 = vmatpush1.msra.mxu0 %v4625
        %4627 = vmatprep.subr.mxu0 0.0
        %v4628 = vand.u32 %v1189, 4294901760
        %v4629 = vsub.f32 %v1189, %v4628
        %v4630 = vand.u32 %v4629, 4294901760
        %4631 = vmatpush1.msra.mxu0 %v4630
        %4632 = vmatprep.subr.mxu0 0.0
        %v4633 = vand.u32 %v1190, 4294901760
        %v4634 = vsub.f32 %v1190, %v4633
        %v4635 = vand.u32 %v4634, 4294901760
        %4636 = vmatpush1.msra.mxu0 %v4635
        %4637 = vmatprep.subr.mxu0 0.0
        %v4638 = vand.u32 %v1191, 4294901760
        %v4639 = vsub.f32 %v1191, %v4638
        %v4640 = vand.u32 %v4639, 4294901760
        %4641 = vmatpush1.msra.mxu0 %v4640
        %4642 = vmatprep.subr.mxu0 0.0
        %v4643 = vand.u32 %v1192, 4294901760
        %v4644 = vsub.f32 %v1192, %v4643
        %v4645 = vand.u32 %v4644, 4294901760
        %4646 = vmatpush1.msra.mxu0 %v4645
        %4647 = vmatprep.subr.mxu0 0.0
        %v4648 = vand.u32 %v1193, 4294901760
        %v4649 = vsub.f32 %v1193, %v4648
        %v4650 = vand.u32 %v4649, 4294901760
        %4651 = vmatpush1.msra.mxu0 %v4650
        %4652 = vmatprep.subr.mxu0 0.0
        %v4653 = vand.u32 %v1194, 4294901760
        %v4654 = vsub.f32 %v1194, %v4653
        %v4655 = vand.u32 %v4654, 4294901760
        %4656 = vmatpush1.msra.mxu0 %v4655
        %4657 = vmatprep.subr.mxu0 0.0
        %v4658 = vand.u32 %v1195, 4294901760
        %v4659 = vsub.f32 %v1195, %v4658
        %v4660 = vand.u32 %v4659, 4294901760
        %4661 = vmatpush1.msra.mxu0 %v4660
        %4662 = vmatprep.subr.mxu0 0.0
        %v4663 = vand.u32 %v1196, 4294901760
        %v4664 = vsub.f32 %v1196, %v4663
        %v4665 = vand.u32 %v4664, 4294901760
        %4666 = vmatpush1.msra.mxu0 %v4665
        %4667 = vmatprep.subr.mxu0 0.0
        %v4668 = vand.u32 %v1197, 4294901760
        %v4669 = vsub.f32 %v1197, %v4668
        %v4670 = vand.u32 %v4669, 4294901760
        %4671 = vmatpush1.msra.mxu0 %v4670
        %4672 = vmatprep.subr.mxu0 0.0
        %v4673 = vand.u32 %v1198, 4294901760
        %v4674 = vsub.f32 %v1198, %v4673
        %v4675 = vand.u32 %v4674, 4294901760
        %4676 = vmatpush1.msra.mxu0 %v4675
        %4677 = vmatprep.subr.mxu0 0.0
        %v4678 = vand.u32 %v1199, 4294901760
        %v4679 = vsub.f32 %v1199, %v4678
        %v4680 = vand.u32 %v4679, 4294901760
        %4681 = vmatpush1.msra.mxu0 %v4680
        %4682 = vmatprep.subr.mxu0 0.0
        %v4683 = vand.u32 %v1200, 4294901760
        %v4684 = vsub.f32 %v1200, %v4683
        %v4685 = vand.u32 %v4684, 4294901760
        %4686 = vmatpush1.msra.mxu0 %v4685
        %4687 = vmatprep.subr.mxu0 0.0
        %v4688 = vand.u32 %v1201, 4294901760
        %v4689 = vsub.f32 %v1201, %v4688
        %v4690 = vand.u32 %v4689, 4294901760
        %4691 = vmatpush1.msra.mxu0 %v4690
        %4692 = vmatprep.subr.mxu0 0.0
        %v4693 = vand.u32 %v1202, 4294901760
        %v4694 = vsub.f32 %v1202, %v4693
        %v4695 = vand.u32 %v4694, 4294901760
        %4696 = vmatpush1.msra.mxu0 %v4695
        %4697 = vmatprep.subr.mxu0 0.0
        %v4698 = vand.u32 %v1203, 4294901760
        %v4699 = vsub.f32 %v1203, %v4698
        %v4700 = vand.u32 %v4699, 4294901760
        %4701 = vmatpush1.msra.mxu0 %v4700
        %4702 = vmatprep.subr.mxu0 0.0
        %v4703 = vand.u32 %v1204, 4294901760
        %v4704 = vsub.f32 %v1204, %v4703
        %v4705 = vand.u32 %v4704, 4294901760
        %4706 = vmatpush1.msra.mxu0 %v4705
        %4707 = vmatprep.subr.mxu0 0.0
        %v4708 = vand.u32 %v1205, 4294901760
        %v4709 = vsub.f32 %v1205, %v4708
        %v4710 = vand.u32 %v4709, 4294901760
        %4711 = vmatpush1.msra.mxu0 %v4710
        %4712 = vmatprep.subr.mxu0 0.0
        %v4713 = vand.u32 %v1206, 4294901760
        %v4714 = vsub.f32 %v1206, %v4713
        %v4715 = vand.u32 %v4714, 4294901760
        %4716 = vmatpush1.msra.mxu0 %v4715
        %4717 = vmatprep.subr.mxu0 0.0
        %v4718 = vand.u32 %v1207, 4294901760
        %v4719 = vsub.f32 %v1207, %v4718
        %v4720 = vand.u32 %v4719, 4294901760
        %4721 = vmatpush1.msra.mxu0 %v4720
        %4722 = vmatprep.subr.mxu0 0.0
        %v4723 = vand.u32 %v1208, 4294901760
        %v4724 = vsub.f32 %v1208, %v4723
        %v4725 = vand.u32 %v4724, 4294901760
        %4726 = vmatpush1.msra.mxu0 %v4725
        %4727 = vmatprep.subr.mxu0 0.0
        %v4728 = vand.u32 %v1209, 4294901760
        %v4729 = vsub.f32 %v1209, %v4728
        %v4730 = vand.u32 %v4729, 4294901760
        %4731 = vmatpush1.msra.mxu0 %v4730
        %4732 = vmatprep.subr.mxu0 0.0
        %v4733 = vand.u32 %v1210, 4294901760
        %v4734 = vsub.f32 %v1210, %v4733
        %v4735 = vand.u32 %v4734, 4294901760
        %4736 = vmatpush1.msra.mxu0 %v4735
        %4737 = vmatprep.subr.mxu0 0.0
        %v4738 = vand.u32 %v1211, 4294901760
        %v4739 = vsub.f32 %v1211, %v4738
        %v4740 = vand.u32 %v4739, 4294901760
        %4741 = vmatpush1.msra.mxu0 %v4740
        %4742 = vmatprep.subr.mxu0 0.0
        %v4743 = vand.u32 %v1212, 4294901760
        %v4744 = vsub.f32 %v1212, %v4743
        %v4745 = vand.u32 %v4744, 4294901760
        %4746 = vmatpush1.msra.mxu0 %v4745
        %4747 = vmatprep.subr.mxu0 0.0
        %v4748 = vand.u32 %v1213, 4294901760
        %v4749 = vsub.f32 %v1213, %v4748
        %v4750 = vand.u32 %v4749, 4294901760
        %4751 = vmatpush1.msra.mxu0 %v4750
        %4752 = vmatprep.subr.mxu0 0.0
        %v4753 = vand.u32 %v1214, 4294901760
        %v4754 = vsub.f32 %v1214, %v4753
        %v4755 = vand.u32 %v4754, 4294901760
        %4756 = vmatpush1.msra.mxu0 %v4755
        %v4757 = vand.u32 %v1396, 4294901760
        %4758 = vmatprep.mubr.f32.mxu0 %v4757
        %v4759 = vand.u32 %v1389, 4294901760
        %4760 = vmatmul.mubr.f32.gmra.mrb[0].mxu0 %v4759
        %v4761 = vpop.f32.mrb[0].mxu0
        %v4762 = vadd.f32 %v4594, %v4761
        %v4763 = vpop.f32.mrb[0].mxu0
        %4764 = vdwg.mxu0
        %4765 = vmatprep.subr.mxu0 0.0
        %v4766 = vand.u32 %v1183, 4294901760
        %4767 = vmatpush1.msra.mxu0 %v4766
        %4768 = vmatprep.subr.mxu0 0.0
        %v4769 = vand.u32 %v1184, 4294901760
        %4770 = vmatpush1.msra.mxu0 %v4769
        %4771 = vmatprep.subr.mxu0 0.0
        %v4772 = vand.u32 %v1185, 4294901760
        %4773 = vmatpush1.msra.mxu0 %v4772
        %4774 = vmatprep.subr.mxu0 0.0
        %v4775 = vand.u32 %v1186, 4294901760
        %4776 = vmatpush1.msra.mxu0 %v4775
        %4777 = vmatprep.subr.mxu0 0.0
        %v4778 = vand.u32 %v1187, 4294901760
        %4779 = vmatpush1.msra.mxu0 %v4778
        %4780 = vmatprep.subr.mxu0 0.0
        %v4781 = vand.u32 %v1188, 4294901760
        %4782 = vmatpush1.msra.mxu0 %v4781
        %4783 = vmatprep.subr.mxu0 0.0
        %v4784 = vand.u32 %v1189, 4294901760
        %4785 = vmatpush1.msra.mxu0 %v4784
        %4786 = vmatprep.subr.mxu0 0.0
        %v4787 = vand.u32 %v1190, 4294901760
        %4788 = vmatpush1.msra.mxu0 %v4787
        %4789 = vmatprep.subr.mxu0 0.0
        %v4790 = vand.u32 %v1191, 4294901760
        %4791 = vmatpush1.msra.mxu0 %v4790
        %4792 = vmatprep.subr.mxu0 0.0
        %v4793 = vand.u32 %v1192, 4294901760
        %4794 = vmatpush1.msra.mxu0 %v4793
        %4795 = vmatprep.subr.mxu0 0.0
        %v4796 = vand.u32 %v1193, 4294901760
        %4797 = vmatpush1.msra.mxu0 %v4796
        %4798 = vmatprep.subr.mxu0 0.0
        %v4799 = vand.u32 %v1194, 4294901760
        %4800 = vmatpush1.msra.mxu0 %v4799
        %4801 = vmatprep.subr.mxu0 0.0
        %v4802 = vand.u32 %v1195, 4294901760
        %4803 = vmatpush1.msra.mxu0 %v4802
        %4804 = vmatprep.subr.mxu0 0.0
        %v4805 = vand.u32 %v1196, 4294901760
        %4806 = vmatpush1.msra.mxu0 %v4805
        %4807 = vmatprep.subr.mxu0 0.0
        %v4808 = vand.u32 %v1197, 4294901760
        %4809 = vmatpush1.msra.mxu0 %v4808
        %4810 = vmatprep.subr.mxu0 0.0
        %v4811 = vand.u32 %v1198, 4294901760
        %4812 = vmatpush1.msra.mxu0 %v4811
        %4813 = vmatprep.subr.mxu0 0.0
        %v4814 = vand.u32 %v1199, 4294901760
        %4815 = vmatpush1.msra.mxu0 %v4814
        %4816 = vmatprep.subr.mxu0 0.0
        %v4817 = vand.u32 %v1200, 4294901760
        %4818 = vmatpush1.msra.mxu0 %v4817
        %4819 = vmatprep.subr.mxu0 0.0
        %v4820 = vand.u32 %v1201, 4294901760
        %4821 = vmatpush1.msra.mxu0 %v4820
        %4822 = vmatprep.subr.mxu0 0.0
        %v4823 = vand.u32 %v1202, 4294901760
        %4824 = vmatpush1.msra.mxu0 %v4823
        %4825 = vmatprep.subr.mxu0 0.0
        %v4826 = vand.u32 %v1203, 4294901760
        %4827 = vmatpush1.msra.mxu0 %v4826
        %4828 = vmatprep.subr.mxu0 0.0
        %v4829 = vand.u32 %v1204, 4294901760
        %4830 = vmatpush1.msra.mxu0 %v4829
        %4831 = vmatprep.subr.mxu0 0.0
        %v4832 = vand.u32 %v1205, 4294901760
        %4833 = vmatpush1.msra.mxu0 %v4832
        %4834 = vmatprep.subr.mxu0 0.0
        %v4835 = vand.u32 %v1206, 4294901760
        %4836 = vmatpush1.msra.mxu0 %v4835
        %4837 = vmatprep.subr.mxu0 0.0
        %v4838 = vand.u32 %v1207, 4294901760
        %4839 = vmatpush1.msra.mxu0 %v4838
        %4840 = vmatprep.subr.mxu0 0.0
        %v4841 = vand.u32 %v1208, 4294901760
        %4842 = vmatpush1.msra.mxu0 %v4841
        %4843 = vmatprep.subr.mxu0 0.0
        %v4844 = vand.u32 %v1209, 4294901760
        %4845 = vmatpush1.msra.mxu0 %v4844
        %4846 = vmatprep.subr.mxu0 0.0
        %v4847 = vand.u32 %v1210, 4294901760
        %4848 = vmatpush1.msra.mxu0 %v4847
        %4849 = vmatprep.subr.mxu0 0.0
        %v4850 = vand.u32 %v1211, 4294901760
        %4851 = vmatpush1.msra.mxu0 %v4850
        %4852 = vmatprep.subr.mxu0 0.0
        %v4853 = vand.u32 %v1212, 4294901760
        %4854 = vmatpush1.msra.mxu0 %v4853
        %4855 = vmatprep.subr.mxu0 0.0
        %v4856 = vand.u32 %v1213, 4294901760
        %4857 = vmatpush1.msra.mxu0 %v4856
        %4858 = vmatprep.subr.mxu0 0.0
        %v4859 = vand.u32 %v1214, 4294901760
        %4860 = vmatpush1.msra.mxu0 %v4859
        %v4861 = vand.u32 %v1396, 4294901760
        %4862 = vmatprep.mubr.f32.mxu0 %v4861
        %v4863 = vand.u32 %v1389, 4294901760
        %4864 = vmatmul.mubr.f32.gmra.mrb[0].mxu0 %v4863
        %v4865 = vpop.f32.mrb[0].mxu0
        %v4866 = vadd.f32 %v4762, %v4865
        %v4867 = vpop.f32.mrb[0].mxu0
        %4868 = vdwg.mxu0
        %4869 = vmatprep.subr.mxu0 0.0
        %v4870 = vand.u32 %v1215, 4294901760
        %4871 = vmatpush1.msra.mxu0 %v4870
        %4872 = vmatprep.subr.mxu0 0.0
        %v4873 = vand.u32 %v1216, 4294901760
        %4874 = vmatpush1.msra.mxu0 %v4873
        %4875 = vmatprep.subr.mxu0 0.0
        %v4876 = vand.u32 %v1217, 4294901760
        %4877 = vmatpush1.msra.mxu0 %v4876
        %4878 = vmatprep.subr.mxu0 0.0
        %v4879 = vand.u32 %v1218, 4294901760
        %4880 = vmatpush1.msra.mxu0 %v4879
        %4881 = vmatprep.subr.mxu0 0.0
        %v4882 = vand.u32 %v1219, 4294901760
        %4883 = vmatpush1.msra.mxu0 %v4882
        %4884 = vmatprep.subr.mxu0 0.0
        %v4885 = vand.u32 %v1220, 4294901760
        %4886 = vmatpush1.msra.mxu0 %v4885
        %4887 = vmatprep.subr.mxu0 0.0
        %v4888 = vand.u32 %v1221, 4294901760
        %4889 = vmatpush1.msra.mxu0 %v4888
        %4890 = vmatprep.subr.mxu0 0.0
        %v4891 = vand.u32 %v1222, 4294901760
        %4892 = vmatpush1.msra.mxu0 %v4891
        %4893 = vmatprep.subr.mxu0 0.0
        %v4894 = vand.u32 %v1223, 4294901760
        %4895 = vmatpush1.msra.mxu0 %v4894
        %4896 = vmatprep.subr.mxu0 0.0
        %v4897 = vand.u32 %v1224, 4294901760
        %4898 = vmatpush1.msra.mxu0 %v4897
        %4899 = vmatprep.subr.mxu0 0.0
        %v4900 = vand.u32 %v1225, 4294901760
        %4901 = vmatpush1.msra.mxu0 %v4900
        %4902 = vmatprep.subr.mxu0 0.0
        %v4903 = vand.u32 %v1226, 4294901760
        %4904 = vmatpush1.msra.mxu0 %v4903
        %4905 = vmatprep.subr.mxu0 0.0
        %v4906 = vand.u32 %v1227, 4294901760
        %4907 = vmatpush1.msra.mxu0 %v4906
        %4908 = vmatprep.subr.mxu0 0.0
        %v4909 = vand.u32 %v1228, 4294901760
        %4910 = vmatpush1.msra.mxu0 %v4909
        %4911 = vmatprep.subr.mxu0 0.0
        %v4912 = vand.u32 %v1229, 4294901760
        %4913 = vmatpush1.msra.mxu0 %v4912
        %4914 = vmatprep.subr.mxu0 0.0
        %v4915 = vand.u32 %v1230, 4294901760
        %4916 = vmatpush1.msra.mxu0 %v4915
        %4917 = vmatprep.subr.mxu0 0.0
        %v4918 = vand.u32 %v1231, 4294901760
        %4919 = vmatpush1.msra.mxu0 %v4918
        %4920 = vmatprep.subr.mxu0 0.0
        %v4921 = vand.u32 %v1232, 4294901760
        %4922 = vmatpush1.msra.mxu0 %v4921
        %4923 = vmatprep.subr.mxu0 0.0
        %v4924 = vand.u32 %v1233, 4294901760
        %4925 = vmatpush1.msra.mxu0 %v4924
        %4926 = vmatprep.subr.mxu0 0.0
        %v4927 = vand.u32 %v1234, 4294901760
        %4928 = vmatpush1.msra.mxu0 %v4927
        %4929 = vmatprep.subr.mxu0 0.0
        %v4930 = vand.u32 %v1235, 4294901760
        %4931 = vmatpush1.msra.mxu0 %v4930
        %4932 = vmatprep.subr.mxu0 0.0
        %v4933 = vand.u32 %v1236, 4294901760
        %4934 = vmatpush1.msra.mxu0 %v4933
        %4935 = vmatprep.subr.mxu0 0.0
        %v4936 = vand.u32 %v1237, 4294901760
        %4937 = vmatpush1.msra.mxu0 %v4936
        %4938 = vmatprep.subr.mxu0 0.0
        %v4939 = vand.u32 %v1238, 4294901760
        %4940 = vmatpush1.msra.mxu0 %v4939
        %4941 = vmatprep.subr.mxu0 0.0
        %v4942 = vand.u32 %v1239, 4294901760
        %4943 = vmatpush1.msra.mxu0 %v4942
        %4944 = vmatprep.subr.mxu0 0.0
        %v4945 = vand.u32 %v1240, 4294901760
        %4946 = vmatpush1.msra.mxu0 %v4945
        %4947 = vmatprep.subr.mxu0 0.0
        %v4948 = vand.u32 %v1241, 4294901760
        %4949 = vmatpush1.msra.mxu0 %v4948
        %4950 = vmatprep.subr.mxu0 0.0
        %v4951 = vand.u32 %v1242, 4294901760
        %4952 = vmatpush1.msra.mxu0 %v4951
        %4953 = vmatprep.subr.mxu0 0.0
        %v4954 = vand.u32 %v1243, 4294901760
        %4955 = vmatpush1.msra.mxu0 %v4954
        %4956 = vmatprep.subr.mxu0 0.0
        %v4957 = vand.u32 %v1244, 4294901760
        %4958 = vmatpush1.msra.mxu0 %v4957
        %4959 = vmatprep.subr.mxu0 0.0
        %v4960 = vand.u32 %v1245, 4294901760
        %4961 = vmatpush1.msra.mxu0 %v4960
        %4962 = vmatprep.subr.mxu0 0.0
        %v4963 = vand.u32 %v1246, 4294901760
        %4964 = vmatpush1.msra.mxu0 %v4963
        %v4965 = vand.u32 %v1410, 4294901760
        %v4966 = vsub.f32 %v1410, %v4965
        %v4967 = vand.u32 %v4966, 4294901760
        %v4968 = vsub.f32 %v4966, %v4967
        %v4969 = vand.u32 %v4968, 4294901760
        %4970 = vmatprep.mubr.f32.mxu0 %v4969
        %v4971 = vand.u32 %v1403, 4294901760
        %v4972 = vsub.f32 %v1403, %v4971
        %v4973 = vand.u32 %v4972, 4294901760
        %v4974 = vsub.f32 %v4972, %v4973
        %v4975 = vand.u32 %v4974, 4294901760
        %4976 = vmatmul.mubr.f32.gmra.mrb[0].mxu0 %v4975
        %v4977 = vpop.f32.mrb[0].mxu0
        %v4978 = vadd.f32 %v4866, %v4977
        %v4979 = vpop.f32.mrb[0].mxu0
        %4980 = vdwg.mxu0
        %4981 = vmatprep.subr.mxu0 0.0
        %v4982 = vand.u32 %v1215, 4294901760
        %v4983 = vsub.f32 %v1215, %v4982
        %v4984 = vand.u32 %v4983, 4294901760
        %v4985 = vsub.f32 %v4983, %v4984
        %v4986 = vand.u32 %v4985, 4294901760
        %4987 = vmatpush1.msra.mxu0 %v4986
        %4988 = vmatprep.subr.mxu0 0.0
        %v4989 = vand.u32 %v1216, 4294901760
        %v4990 = vsub.f32 %v1216, %v4989
        %v4991 = vand.u32 %v4990, 4294901760
        %v4992 = vsub.f32 %v4990, %v4991
        %v4993 = vand.u32 %v4992, 4294901760
        %4994 = vmatpush1.msra.mxu0 %v4993
        %4995 = vmatprep.subr.mxu0 0.0
        %v4996 = vand.u32 %v1217, 4294901760
        %v4997 = vsub.f32 %v1217, %v4996
        %v4998 = vand.u32 %v4997, 4294901760
        %v4999 = vsub.f32 %v4997, %v4998
        %v5000 = vand.u32 %v4999, 4294901760
        %5001 = vmatpush1.msra.mxu0 %v5000
        %5002 = vmatprep.subr.mxu0 0.0
        %v5003 = vand.u32 %v1218, 4294901760
        %v5004 = vsub.f32 %v1218, %v5003
        %v5005 = vand.u32 %v5004, 4294901760
        %v5006 = vsub.f32 %v5004, %v5005
        %v5007 = vand.u32 %v5006, 4294901760
        %5008 = vmatpush1.msra.mxu0 %v5007
        %5009 = vmatprep.subr.mxu0 0.0
        %v5010 = vand.u32 %v1219, 4294901760
        %v5011 = vsub.f32 %v1219, %v5010
        %v5012 = vand.u32 %v5011, 4294901760
        %v5013 = vsub.f32 %v5011, %v5012
        %v5014 = vand.u32 %v5013, 4294901760
        %5015 = vmatpush1.msra.mxu0 %v5014
        %5016 = vmatprep.subr.mxu0 0.0
        %v5017 = vand.u32 %v1220, 4294901760
        %v5018 = vsub.f32 %v1220, %v5017
        %v5019 = vand.u32 %v5018, 4294901760
        %v5020 = vsub.f32 %v5018, %v5019
        %v5021 = vand.u32 %v5020, 4294901760
        %5022 = vmatpush1.msra.mxu0 %v5021
        %5023 = vmatprep.subr.mxu0 0.0
        %v5024 = vand.u32 %v1221, 4294901760
        %v5025 = vsub.f32 %v1221, %v5024
        %v5026 = vand.u32 %v5025, 4294901760
        %v5027 = vsub.f32 %v5025, %v5026
        %v5028 = vand.u32 %v5027, 4294901760
        %5029 = vmatpush1.msra.mxu0 %v5028
        %5030 = vmatprep.subr.mxu0 0.0
        %v5031 = vand.u32 %v1222, 4294901760
        %v5032 = vsub.f32 %v1222, %v5031
        %v5033 = vand.u32 %v5032, 4294901760
        %v5034 = vsub.f32 %v5032, %v5033
        %v5035 = vand.u32 %v5034, 4294901760
        %5036 = vmatpush1.msra.mxu0 %v5035
        %5037 = vmatprep.subr.mxu0 0.0
        %v5038 = vand.u32 %v1223, 4294901760
        %v5039 = vsub.f32 %v1223, %v5038
        %v5040 = vand.u32 %v5039, 4294901760
        %v5041 = vsub.f32 %v5039, %v5040
        %v5042 = vand.u32 %v5041, 4294901760
        %5043 = vmatpush1.msra.mxu0 %v5042
        %5044 = vmatprep.subr.mxu0 0.0
        %v5045 = vand.u32 %v1224, 4294901760
        %v5046 = vsub.f32 %v1224, %v5045
        %v5047 = vand.u32 %v5046, 4294901760
        %v5048 = vsub.f32 %v5046, %v5047
        %v5049 = vand.u32 %v5048, 4294901760
        %5050 = vmatpush1.msra.mxu0 %v5049
        %5051 = vmatprep.subr.mxu0 0.0
        %v5052 = vand.u32 %v1225, 4294901760
        %v5053 = vsub.f32 %v1225, %v5052
        %v5054 = vand.u32 %v5053, 4294901760
        %v5055 = vsub.f32 %v5053, %v5054
        %v5056 = vand.u32 %v5055, 4294901760
        %5057 = vmatpush1.msra.mxu0 %v5056
        %5058 = vmatprep.subr.mxu0 0.0
        %v5059 = vand.u32 %v1226, 4294901760
        %v5060 = vsub.f32 %v1226, %v5059
        %v5061 = vand.u32 %v5060, 4294901760
        %v5062 = vsub.f32 %v5060, %v5061
        %v5063 = vand.u32 %v5062, 4294901760
        %5064 = vmatpush1.msra.mxu0 %v5063
        %5065 = vmatprep.subr.mxu0 0.0
        %v5066 = vand.u32 %v1227, 4294901760
        %v5067 = vsub.f32 %v1227, %v5066
        %v5068 = vand.u32 %v5067, 4294901760
        %v5069 = vsub.f32 %v5067, %v5068
        %v5070 = vand.u32 %v5069, 4294901760
        %5071 = vmatpush1.msra.mxu0 %v5070
        %5072 = vmatprep.subr.mxu0 0.0
        %v5073 = vand.u32 %v1228, 4294901760
        %v5074 = vsub.f32 %v1228, %v5073
        %v5075 = vand.u32 %v5074, 4294901760
        %v5076 = vsub.f32 %v5074, %v5075
        %v5077 = vand.u32 %v5076, 4294901760
        %5078 = vmatpush1.msra.mxu0 %v5077
        %5079 = vmatprep.subr.mxu0 0.0
        %v5080 = vand.u32 %v1229, 4294901760
        %v5081 = vsub.f32 %v1229, %v5080
        %v5082 = vand.u32 %v5081, 4294901760
        %v5083 = vsub.f32 %v5081, %v5082
        %v5084 = vand.u32 %v5083, 4294901760
        %5085 = vmatpush1.msra.mxu0 %v5084
        %5086 = vmatprep.subr.mxu0 0.0
        %v5087 = vand.u32 %v1230, 4294901760
        %v5088 = vsub.f32 %v1230, %v5087
        %v5089 = vand.u32 %v5088, 4294901760
        %v5090 = vsub.f32 %v5088, %v5089
        %v5091 = vand.u32 %v5090, 4294901760
        %5092 = vmatpush1.msra.mxu0 %v5091
        %5093 = vmatprep.subr.mxu0 0.0
        %v5094 = vand.u32 %v1231, 4294901760
        %v5095 = vsub.f32 %v1231, %v5094
        %v5096 = vand.u32 %v5095, 4294901760
        %v5097 = vsub.f32 %v5095, %v5096
        %v5098 = vand.u32 %v5097, 4294901760
        %5099 = vmatpush1.msra.mxu0 %v5098
        %5100 = vmatprep.subr.mxu0 0.0
        %v5101 = vand.u32 %v1232, 4294901760
        %v5102 = vsub.f32 %v1232, %v5101
        %v5103 = vand.u32 %v5102, 4294901760
        %v5104 = vsub.f32 %v5102, %v5103
        %v5105 = vand.u32 %v5104, 4294901760
        %5106 = vmatpush1.msra.mxu0 %v5105
        %5107 = vmatprep.subr.mxu0 0.0
        %v5108 = vand.u32 %v1233, 4294901760
        %v5109 = vsub.f32 %v1233, %v5108
        %v5110 = vand.u32 %v5109, 4294901760
        %v5111 = vsub.f32 %v5109, %v5110
        %v5112 = vand.u32 %v5111, 4294901760
        %5113 = vmatpush1.msra.mxu0 %v5112
        %5114 = vmatprep.subr.mxu0 0.0
        %v5115 = vand.u32 %v1234, 4294901760
        %v5116 = vsub.f32 %v1234, %v5115
        %v5117 = vand.u32 %v5116, 4294901760
        %v5118 = vsub.f32 %v5116, %v5117
        %v5119 = vand.u32 %v5118, 4294901760
        %5120 = vmatpush1.msra.mxu0 %v5119
        %5121 = vmatprep.subr.mxu0 0.0
        %v5122 = vand.u32 %v1235, 4294901760
        %v5123 = vsub.f32 %v1235, %v5122
        %v5124 = vand.u32 %v5123, 4294901760
        %v5125 = vsub.f32 %v5123, %v5124
        %v5126 = vand.u32 %v5125, 4294901760
        %5127 = vmatpush1.msra.mxu0 %v5126
        %5128 = vmatprep.subr.mxu0 0.0
        %v5129 = vand.u32 %v1236, 4294901760
        %v5130 = vsub.f32 %v1236, %v5129
        %v5131 = vand.u32 %v5130, 4294901760
        %v5132 = vsub.f32 %v5130, %v5131
        %v5133 = vand.u32 %v5132, 4294901760
        %5134 = vmatpush1.msra.mxu0 %v5133
        %5135 = vmatprep.subr.mxu0 0.0
        %v5136 = vand.u32 %v1237, 4294901760
        %v5137 = vsub.f32 %v1237, %v5136
        %v5138 = vand.u32 %v5137, 4294901760
        %v5139 = vsub.f32 %v5137, %v5138
        %v5140 = vand.u32 %v5139, 4294901760
        %5141 = vmatpush1.msra.mxu0 %v5140
        %5142 = vmatprep.subr.mxu0 0.0
        %v5143 = vand.u32 %v1238, 4294901760
        %v5144 = vsub.f32 %v1238, %v5143
        %v5145 = vand.u32 %v5144, 4294901760
        %v5146 = vsub.f32 %v5144, %v5145
        %v5147 = vand.u32 %v5146, 4294901760
        %5148 = vmatpush1.msra.mxu0 %v5147
        %5149 = vmatprep.subr.mxu0 0.0
        %v5150 = vand.u32 %v1239, 4294901760
        %v5151 = vsub.f32 %v1239, %v5150
        %v5152 = vand.u32 %v5151, 4294901760
        %v5153 = vsub.f32 %v5151, %v5152
        %v5154 = vand.u32 %v5153, 4294901760
        %5155 = vmatpush1.msra.mxu0 %v5154
        %5156 = vmatprep.subr.mxu0 0.0
        %v5157 = vand.u32 %v1240, 4294901760
        %v5158 = vsub.f32 %v1240, %v5157
        %v5159 = vand.u32 %v5158, 4294901760
        %v5160 = vsub.f32 %v5158, %v5159
        %v5161 = vand.u32 %v5160, 4294901760
        %5162 = vmatpush1.msra.mxu0 %v5161
        %5163 = vmatprep.subr.mxu0 0.0
        %v5164 = vand.u32 %v1241, 4294901760
        %v5165 = vsub.f32 %v1241, %v5164
        %v5166 = vand.u32 %v5165, 4294901760
        %v5167 = vsub.f32 %v5165, %v5166
        %v5168 = vand.u32 %v5167, 4294901760
        %5169 = vmatpush1.msra.mxu0 %v5168
        %5170 = vmatprep.subr.mxu0 0.0
        %v5171 = vand.u32 %v1242, 4294901760
        %v5172 = vsub.f32 %v1242, %v5171
        %v5173 = vand.u32 %v5172, 4294901760
        %v5174 = vsub.f32 %v5172, %v5173
        %v5175 = vand.u32 %v5174, 4294901760
        %5176 = vmatpush1.msra.mxu0 %v5175
        %5177 = vmatprep.subr.mxu0 0.0
        %v5178 = vand.u32 %v1243, 4294901760
        %v5179 = vsub.f32 %v1243, %v5178
        %v5180 = vand.u32 %v5179, 4294901760
        %v5181 = vsub.f32 %v5179, %v5180
        %v5182 = vand.u32 %v5181, 4294901760
        %5183 = vmatpush1.msra.mxu0 %v5182
        %5184 = vmatprep.subr.mxu0 0.0
        %v5185 = vand.u32 %v1244, 4294901760
        %v5186 = vsub.f32 %v1244, %v5185
        %v5187 = vand.u32 %v5186, 4294901760
        %v5188 = vsub.f32 %v5186, %v5187
        %v5189 = vand.u32 %v5188, 4294901760
        %5190 = vmatpush1.msra.mxu0 %v5189
        %5191 = vmatprep.subr.mxu0 0.0
        %v5192 = vand.u32 %v1245, 4294901760
        %v5193 = vsub.f32 %v1245, %v5192
        %v5194 = vand.u32 %v5193, 4294901760
        %v5195 = vsub.f32 %v5193, %v5194
        %v5196 = vand.u32 %v5195, 4294901760
        %5197 = vmatpush1.msra.mxu0 %v5196
        %5198 = vmatprep.subr.mxu0 0.0
        %v5199 = vand.u32 %v1246, 4294901760
        %v5200 = vsub.f32 %v1246, %v5199
        %v5201 = vand.u32 %v5200, 4294901760
        %v5202 = vsub.f32 %v5200, %v5201
        %v5203 = vand.u32 %v5202, 4294901760
        %5204 = vmatpush1.msra.mxu0 %v5203
        %v5205 = vand.u32 %v1410, 4294901760
        %5206 = vmatprep.mubr.f32.mxu0 %v5205
        %v5207 = vand.u32 %v1403, 4294901760
        %5208 = vmatmul.mubr.f32.gmra.mrb[0].mxu0 %v5207
        %v5209 = vpop.f32.mrb[0].mxu0
        %v5210 = vadd.f32 %v4978, %v5209
        %v5211 = vpop.f32.mrb[0].mxu0
        %5212 = vdwg.mxu0
        %5213 = vmatprep.subr.mxu0 0.0
        %v5214 = vand.u32 %v1215, 4294901760
        %v5215 = vsub.f32 %v1215, %v5214
        %5216 = vmatpush1.msra.mxu0 %v5215
        %5217 = vmatprep.subr.mxu0 0.0
        %v5218 = vand.u32 %v1216, 4294901760
        %v5219 = vsub.f32 %v1216, %v5218
        %5220 = vmatpush1.msra.mxu0 %v5219
        %5221 = vmatprep.subr.mxu0 0.0
        %v5222 = vand.u32 %v1217, 4294901760
        %v5223 = vsub.f32 %v1217, %v5222
        %5224 = vmatpush1.msra.mxu0 %v5223
        %5225 = vmatprep.subr.mxu0 0.0
        %v5226 = vand.u32 %v1218, 4294901760
        %v5227 = vsub.f32 %v1218, %v5226
        %5228 = vmatpush1.msra.mxu0 %v5227
        %5229 = vmatprep.subr.mxu0 0.0
        %v5230 = vand.u32 %v1219, 4294901760
        %v5231 = vsub.f32 %v1219, %v5230
        %5232 = vmatpush1.msra.mxu0 %v5231
        %5233 = vmatprep.subr.mxu0 0.0
        %v5234 = vand.u32 %v1220, 4294901760
        %v5235 = vsub.f32 %v1220, %v5234
        %5236 = vmatpush1.msra.mxu0 %v5235
        %5237 = vmatprep.subr.mxu0 0.0
        %v5238 = vand.u32 %v1221, 4294901760
        %v5239 = vsub.f32 %v1221, %v5238
        %5240 = vmatpush1.msra.mxu0 %v5239
        %5241 = vmatprep.subr.mxu0 0.0
        %v5242 = vand.u32 %v1222, 4294901760
        %v5243 = vsub.f32 %v1222, %v5242
        %5244 = vmatpush1.msra.mxu0 %v5243
        %5245 = vmatprep.subr.mxu0 0.0
        %v5246 = vand.u32 %v1223, 4294901760
        %v5247 = vsub.f32 %v1223, %v5246
        %5248 = vmatpush1.msra.mxu0 %v5247
        %5249 = vmatprep.subr.mxu0 0.0
        %v5250 = vand.u32 %v1224, 4294901760
        %v5251 = vsub.f32 %v1224, %v5250
        %5252 = vmatpush1.msra.mxu0 %v5251
        %5253 = vmatprep.subr.mxu0 0.0
        %v5254 = vand.u32 %v1225, 4294901760
        %v5255 = vsub.f32 %v1225, %v5254
        %5256 = vmatpush1.msra.mxu0 %v5255
        %5257 = vmatprep.subr.mxu0 0.0
        %v5258 = vand.u32 %v1226, 4294901760
        %v5259 = vsub.f32 %v1226, %v5258
        %5260 = vmatpush1.msra.mxu0 %v5259
        %5261 = vmatprep.subr.mxu0 0.0
        %v5262 = vand.u32 %v1227, 4294901760
        %v5263 = vsub.f32 %v1227, %v5262
        %5264 = vmatpush1.msra.mxu0 %v5263
        %5265 = vmatprep.subr.mxu0 0.0
        %v5266 = vand.u32 %v1228, 4294901760
        %v5267 = vsub.f32 %v1228, %v5266
        %5268 = vmatpush1.msra.mxu0 %v5267
        %5269 = vmatprep.subr.mxu0 0.0
        %v5270 = vand.u32 %v1229, 4294901760
        %v5271 = vsub.f32 %v1229, %v5270
        %5272 = vmatpush1.msra.mxu0 %v5271
        %5273 = vmatprep.subr.mxu0 0.0
        %v5274 = vand.u32 %v1230, 4294901760
        %v5275 = vsub.f32 %v1230, %v5274
        %5276 = vmatpush1.msra.mxu0 %v5275
        %5277 = vmatprep.subr.mxu0 0.0
        %v5278 = vand.u32 %v1231, 4294901760
        %v5279 = vsub.f32 %v1231, %v5278
        %5280 = vmatpush1.msra.mxu0 %v5279
        %5281 = vmatprep.subr.mxu0 0.0
        %v5282 = vand.u32 %v1232, 4294901760
        %v5283 = vsub.f32 %v1232, %v5282
        %5284 = vmatpush1.msra.mxu0 %v5283
        %5285 = vmatprep.subr.mxu0 0.0
        %v5286 = vand.u32 %v1233, 4294901760
        %v5287 = vsub.f32 %v1233, %v5286
        %5288 = vmatpush1.msra.mxu0 %v5287
        %5289 = vmatprep.subr.mxu0 0.0
        %v5290 = vand.u32 %v1234, 4294901760
        %v5291 = vsub.f32 %v1234, %v5290
        %5292 = vmatpush1.msra.mxu0 %v5291
        %5293 = vmatprep.subr.mxu0 0.0
        %v5294 = vand.u32 %v1235, 4294901760
        %v5295 = vsub.f32 %v1235, %v5294
        %5296 = vmatpush1.msra.mxu0 %v5295
        %5297 = vmatprep.subr.mxu0 0.0
        %v5298 = vand.u32 %v1236, 4294901760
        %v5299 = vsub.f32 %v1236, %v5298
        %5300 = vmatpush1.msra.mxu0 %v5299
        %5301 = vmatprep.subr.mxu0 0.0
        %v5302 = vand.u32 %v1237, 4294901760
        %v5303 = vsub.f32 %v1237, %v5302
        %5304 = vmatpush1.msra.mxu0 %v5303
        %5305 = vmatprep.subr.mxu0 0.0
        %v5306 = vand.u32 %v1238, 4294901760
        %v5307 = vsub.f32 %v1238, %v5306
        %5308 = vmatpush1.msra.mxu0 %v5307
        %5309 = vmatprep.subr.mxu0 0.0
        %v5310 = vand.u32 %v1239, 4294901760
        %v5311 = vsub.f32 %v1239, %v5310
        %5312 = vmatpush1.msra.mxu0 %v5311
        %5313 = vmatprep.subr.mxu0 0.0
        %v5314 = vand.u32 %v1240, 4294901760
        %v5315 = vsub.f32 %v1240, %v5314
        %5316 = vmatpush1.msra.mxu0 %v5315
        %5317 = vmatprep.subr.mxu0 0.0
        %v5318 = vand.u32 %v1241, 4294901760
        %v5319 = vsub.f32 %v1241, %v5318
        %5320 = vmatpush1.msra.mxu0 %v5319
        %5321 = vmatprep.subr.mxu0 0.0
        %v5322 = vand.u32 %v1242, 4294901760
        %v5323 = vsub.f32 %v1242, %v5322
        %5324 = vmatpush1.msra.mxu0 %v5323
        %5325 = vmatprep.subr.mxu0 0.0
        %v5326 = vand.u32 %v1243, 4294901760
        %v5327 = vsub.f32 %v1243, %v5326
        %5328 = vmatpush1.msra.mxu0 %v5327
        %5329 = vmatprep.subr.mxu0 0.0
        %v5330 = vand.u32 %v1244, 4294901760
        %v5331 = vsub.f32 %v1244, %v5330
        %5332 = vmatpush1.msra.mxu0 %v5331
        %5333 = vmatprep.subr.mxu0 0.0
        %v5334 = vand.u32 %v1245, 4294901760
        %v5335 = vsub.f32 %v1245, %v5334
        %5336 = vmatpush1.msra.mxu0 %v5335
        %5337 = vmatprep.subr.mxu0 0.0
        %v5338 = vand.u32 %v1246, 4294901760
        %v5339 = vsub.f32 %v1246, %v5338
        %5340 = vmatpush1.msra.mxu0 %v5339
        %v5341 = vand.u32 %v1410, 4294901760
        %v5342 = vsub.f32 %v1410, %v5341
        %5343 = vmatprep.mubr.f32.mxu0 %v5342
        %v5344 = vand.u32 %v1403, 4294901760
        %v5345 = vsub.f32 %v1403, %v5344
        %5346 = vmatmul.mubr.f32.gmra.mrb[0].mxu0 %v5345
        %v5347 = vpop.f32.mrb[0].mxu0
        %v5348 = vadd.f32 %v5210, %v5347
        %v5349 = vpop.f32.mrb[0].mxu0
        %5350 = vdwg.mxu0
        %5351 = vmatprep.subr.mxu0 0.0
        %v5352 = vand.u32 %v1215, 4294901760
        %5353 = vmatpush1.msra.mxu0 %v5352
        %5354 = vmatprep.subr.mxu0 0.0
        %v5355 = vand.u32 %v1216, 4294901760
        %5356 = vmatpush1.msra.mxu0 %v5355
        %5357 = vmatprep.subr.mxu0 0.0
        %v5358 = vand.u32 %v1217, 4294901760
        %5359 = vmatpush1.msra.mxu0 %v5358
        %5360 = vmatprep.subr.mxu0 0.0
        %v5361 = vand.u32 %v1218, 4294901760
        %5362 = vmatpush1.msra.mxu0 %v5361
        %5363 = vmatprep.subr.mxu0 0.0
        %v5364 = vand.u32 %v1219, 4294901760
        %5365 = vmatpush1.msra.mxu0 %v5364
        %5366 = vmatprep.subr.mxu0 0.0
        %v5367 = vand.u32 %v1220, 4294901760
        %5368 = vmatpush1.msra.mxu0 %v5367
        %5369 = vmatprep.subr.mxu0 0.0
        %v5370 = vand.u32 %v1221, 4294901760
        %5371 = vmatpush1.msra.mxu0 %v5370
        %5372 = vmatprep.subr.mxu0 0.0
        %v5373 = vand.u32 %v1222, 4294901760
        %5374 = vmatpush1.msra.mxu0 %v5373
        %5375 = vmatprep.subr.mxu0 0.0
        %v5376 = vand.u32 %v1223, 4294901760
        %5377 = vmatpush1.msra.mxu0 %v5376
        %5378 = vmatprep.subr.mxu0 0.0
        %v5379 = vand.u32 %v1224, 4294901760
        %5380 = vmatpush1.msra.mxu0 %v5379
        %5381 = vmatprep.subr.mxu0 0.0
        %v5382 = vand.u32 %v1225, 4294901760
        %5383 = vmatpush1.msra.mxu0 %v5382
        %5384 = vmatprep.subr.mxu0 0.0
        %v5385 = vand.u32 %v1226, 4294901760
        %5386 = vmatpush1.msra.mxu0 %v5385
        %5387 = vmatprep.subr.mxu0 0.0
        %v5388 = vand.u32 %v1227, 4294901760
        %5389 = vmatpush1.msra.mxu0 %v5388
        %5390 = vmatprep.subr.mxu0 0.0
        %v5391 = vand.u32 %v1228, 4294901760
        %5392 = vmatpush1.msra.mxu0 %v5391
        %5393 = vmatprep.subr.mxu0 0.0
        %v5394 = vand.u32 %v1229, 4294901760
        %5395 = vmatpush1.msra.mxu0 %v5394
        %5396 = vmatprep.subr.mxu0 0.0
        %v5397 = vand.u32 %v1230, 4294901760
        %5398 = vmatpush1.msra.mxu0 %v5397
        %5399 = vmatprep.subr.mxu0 0.0
        %v5400 = vand.u32 %v1231, 4294901760
        %5401 = vmatpush1.msra.mxu0 %v5400
        %5402 = vmatprep.subr.mxu0 0.0
        %v5403 = vand.u32 %v1232, 4294901760
        %5404 = vmatpush1.msra.mxu0 %v5403
        %5405 = vmatprep.subr.mxu0 0.0
        %v5406 = vand.u32 %v1233, 4294901760
        %5407 = vmatpush1.msra.mxu0 %v5406
        %5408 = vmatprep.subr.mxu0 0.0
        %v5409 = vand.u32 %v1234, 4294901760
        %5410 = vmatpush1.msra.mxu0 %v5409
        %5411 = vmatprep.subr.mxu0 0.0
        %v5412 = vand.u32 %v1235, 4294901760
        %5413 = vmatpush1.msra.mxu0 %v5412
        %5414 = vmatprep.subr.mxu0 0.0
        %v5415 = vand.u32 %v1236, 4294901760
        %5416 = vmatpush1.msra.mxu0 %v5415
        %5417 = vmatprep.subr.mxu0 0.0
        %v5418 = vand.u32 %v1237, 4294901760
        %5419 = vmatpush1.msra.mxu0 %v5418
        %5420 = vmatprep.subr.mxu0 0.0
        %v5421 = vand.u32 %v1238, 4294901760
        %5422 = vmatpush1.msra.mxu0 %v5421
        %5423 = vmatprep.subr.mxu0 0.0
        %v5424 = vand.u32 %v1239, 4294901760
        %5425 = vmatpush1.msra.mxu0 %v5424
        %5426 = vmatprep.subr.mxu0 0.0
        %v5427 = vand.u32 %v1240, 4294901760
        %5428 = vmatpush1.msra.mxu0 %v5427
        %5429 = vmatprep.subr.mxu0 0.0
        %v5430 = vand.u32 %v1241, 4294901760
        %5431 = vmatpush1.msra.mxu0 %v5430
        %5432 = vmatprep.subr.mxu0 0.0
        %v5433 = vand.u32 %v1242, 4294901760
        %5434 = vmatpush1.msra.mxu0 %v5433
        %5435 = vmatprep.subr.mxu0 0.0
        %v5436 = vand.u32 %v1243, 4294901760
        %5437 = vmatpush1.msra.mxu0 %v5436
        %5438 = vmatprep.subr.mxu0 0.0
        %v5439 = vand.u32 %v1244, 4294901760
        %5440 = vmatpush1.msra.mxu0 %v5439
        %5441 = vmatprep.subr.mxu0 0.0
        %v5442 = vand.u32 %v1245, 4294901760
        %5443 = vmatpush1.msra.mxu0 %v5442
        %5444 = vmatprep.subr.mxu0 0.0
        %v5445 = vand.u32 %v1246, 4294901760
        %5446 = vmatpush1.msra.mxu0 %v5445
        %v5447 = vand.u32 %v1410, 4294901760
        %v5448 = vsub.f32 %v1410, %v5447
        %v5449 = vand.u32 %v5448, 4294901760
        %5450 = vmatprep.mubr.f32.mxu0 %v5449
        %v5451 = vand.u32 %v1403, 4294901760
        %v5452 = vsub.f32 %v1403, %v5451
        %v5453 = vand.u32 %v5452, 4294901760
        %5454 = vmatmul.mubr.f32.gmra.mrb[0].mxu0 %v5453
        %v5455 = vpop.f32.mrb[0].mxu0
        %v5456 = vadd.f32 %v5348, %v5455
        %v5457 = vpop.f32.mrb[0].mxu0
        %5458 = vdwg.mxu0
        %5459 = vmatprep.subr.mxu0 0.0
        %v5460 = vand.u32 %v1215, 4294901760
        %v5461 = vsub.f32 %v1215, %v5460
        %v5462 = vand.u32 %v5461, 4294901760
        %5463 = vmatpush1.msra.mxu0 %v5462
        %5464 = vmatprep.subr.mxu0 0.0
        %v5465 = vand.u32 %v1216, 4294901760
        %v5466 = vsub.f32 %v1216, %v5465
        %v5467 = vand.u32 %v5466, 4294901760
        %5468 = vmatpush1.msra.mxu0 %v5467
        %5469 = vmatprep.subr.mxu0 0.0
        %v5470 = vand.u32 %v1217, 4294901760
        %v5471 = vsub.f32 %v1217, %v5470
        %v5472 = vand.u32 %v5471, 4294901760
        %5473 = vmatpush1.msra.mxu0 %v5472
        %5474 = vmatprep.subr.mxu0 0.0
        %v5475 = vand.u32 %v1218, 4294901760
        %v5476 = vsub.f32 %v1218, %v5475
        %v5477 = vand.u32 %v5476, 4294901760
        %5478 = vmatpush1.msra.mxu0 %v5477
        %5479 = vmatprep.subr.mxu0 0.0
        %v5480 = vand.u32 %v1219, 4294901760
        %v5481 = vsub.f32 %v1219, %v5480
        %v5482 = vand.u32 %v5481, 4294901760
        %5483 = vmatpush1.msra.mxu0 %v5482
        %5484 = vmatprep.subr.mxu0 0.0
        %v5485 = vand.u32 %v1220, 4294901760
        %v5486 = vsub.f32 %v1220, %v5485
        %v5487 = vand.u32 %v5486, 4294901760
        %5488 = vmatpush1.msra.mxu0 %v5487
        %5489 = vmatprep.subr.mxu0 0.0
        %v5490 = vand.u32 %v1221, 4294901760
        %v5491 = vsub.f32 %v1221, %v5490
        %v5492 = vand.u32 %v5491, 4294901760
        %5493 = vmatpush1.msra.mxu0 %v5492
        %5494 = vmatprep.subr.mxu0 0.0
        %v5495 = vand.u32 %v1222, 4294901760
        %v5496 = vsub.f32 %v1222, %v5495
        %v5497 = vand.u32 %v5496, 4294901760
        %5498 = vmatpush1.msra.mxu0 %v5497
        %5499 = vmatprep.subr.mxu0 0.0
        %v5500 = vand.u32 %v1223, 4294901760
        %v5501 = vsub.f32 %v1223, %v5500
        %v5502 = vand.u32 %v5501, 4294901760
        %5503 = vmatpush1.msra.mxu0 %v5502
        %5504 = vmatprep.subr.mxu0 0.0
        %v5505 = vand.u32 %v1224, 4294901760
        %v5506 = vsub.f32 %v1224, %v5505
        %v5507 = vand.u32 %v5506, 4294901760
        %5508 = vmatpush1.msra.mxu0 %v5507
        %5509 = vmatprep.subr.mxu0 0.0
        %v5510 = vand.u32 %v1225, 4294901760
        %v5511 = vsub.f32 %v1225, %v5510
        %v5512 = vand.u32 %v5511, 4294901760
        %5513 = vmatpush1.msra.mxu0 %v5512
        %5514 = vmatprep.subr.mxu0 0.0
        %v5515 = vand.u32 %v1226, 4294901760
        %v5516 = vsub.f32 %v1226, %v5515
        %v5517 = vand.u32 %v5516, 4294901760
        %5518 = vmatpush1.msra.mxu0 %v5517
        %5519 = vmatprep.subr.mxu0 0.0
        %v5520 = vand.u32 %v1227, 4294901760
        %v5521 = vsub.f32 %v1227, %v5520
        %v5522 = vand.u32 %v5521, 4294901760
        %5523 = vmatpush1.msra.mxu0 %v5522
        %5524 = vmatprep.subr.mxu0 0.0
        %v5525 = vand.u32 %v1228, 4294901760
        %v5526 = vsub.f32 %v1228, %v5525
        %v5527 = vand.u32 %v5526, 4294901760
        %5528 = vmatpush1.msra.mxu0 %v5527
        %5529 = vmatprep.subr.mxu0 0.0
        %v5530 = vand.u32 %v1229, 4294901760
        %v5531 = vsub.f32 %v1229, %v5530
        %v5532 = vand.u32 %v5531, 4294901760
        %5533 = vmatpush1.msra.mxu0 %v5532
        %5534 = vmatprep.subr.mxu0 0.0
        %v5535 = vand.u32 %v1230, 4294901760
        %v5536 = vsub.f32 %v1230, %v5535
        %v5537 = vand.u32 %v5536, 4294901760
        %5538 = vmatpush1.msra.mxu0 %v5537
        %5539 = vmatprep.subr.mxu0 0.0
        %v5540 = vand.u32 %v1231, 4294901760
        %v5541 = vsub.f32 %v1231, %v5540
        %v5542 = vand.u32 %v5541, 4294901760
        %5543 = vmatpush1.msra.mxu0 %v5542
        %5544 = vmatprep.subr.mxu0 0.0
        %v5545 = vand.u32 %v1232, 4294901760
        %v5546 = vsub.f32 %v1232, %v5545
        %v5547 = vand.u32 %v5546, 4294901760
        %5548 = vmatpush1.msra.mxu0 %v5547
        %5549 = vmatprep.subr.mxu0 0.0
        %v5550 = vand.u32 %v1233, 4294901760
        %v5551 = vsub.f32 %v1233, %v5550
        %v5552 = vand.u32 %v5551, 4294901760
        %5553 = vmatpush1.msra.mxu0 %v5552
        %5554 = vmatprep.subr.mxu0 0.0
        %v5555 = vand.u32 %v1234, 4294901760
        %v5556 = vsub.f32 %v1234, %v5555
        %v5557 = vand.u32 %v5556, 4294901760
        %5558 = vmatpush1.msra.mxu0 %v5557
        %5559 = vmatprep.subr.mxu0 0.0
        %v5560 = vand.u32 %v1235, 4294901760
        %v5561 = vsub.f32 %v1235, %v5560
        %v5562 = vand.u32 %v5561, 4294901760
        %5563 = vmatpush1.msra.mxu0 %v5562
        %5564 = vmatprep.subr.mxu0 0.0
        %v5565 = vand.u32 %v1236, 4294901760
        %v5566 = vsub.f32 %v1236, %v5565
        %v5567 = vand.u32 %v5566, 4294901760
        %5568 = vmatpush1.msra.mxu0 %v5567
        %5569 = vmatprep.subr.mxu0 0.0
        %v5570 = vand.u32 %v1237, 4294901760
        %v5571 = vsub.f32 %v1237, %v5570
        %v5572 = vand.u32 %v5571, 4294901760
        %5573 = vmatpush1.msra.mxu0 %v5572
        %5574 = vmatprep.subr.mxu0 0.0
        %v5575 = vand.u32 %v1238, 4294901760
        %v5576 = vsub.f32 %v1238, %v5575
        %v5577 = vand.u32 %v5576, 4294901760
        %5578 = vmatpush1.msra.mxu0 %v5577
        %5579 = vmatprep.subr.mxu0 0.0
        %v5580 = vand.u32 %v1239, 4294901760
        %v5581 = vsub.f32 %v1239, %v5580
        %v5582 = vand.u32 %v5581, 4294901760
        %5583 = vmatpush1.msra.mxu0 %v5582
        %5584 = vmatprep.subr.mxu0 0.0
        %v5585 = vand.u32 %v1240, 4294901760
        %v5586 = vsub.f32 %v1240, %v5585
        %v5587 = vand.u32 %v5586, 4294901760
        %5588 = vmatpush1.msra.mxu0 %v5587
        %5589 = vmatprep.subr.mxu0 0.0
        %v5590 = vand.u32 %v1241, 4294901760
        %v5591 = vsub.f32 %v1241, %v5590
        %v5592 = vand.u32 %v5591, 4294901760
        %5593 = vmatpush1.msra.mxu0 %v5592
        %5594 = vmatprep.subr.mxu0 0.0
        %v5595 = vand.u32 %v1242, 4294901760
        %v5596 = vsub.f32 %v1242, %v5595
        %v5597 = vand.u32 %v5596, 4294901760
        %5598 = vmatpush1.msra.mxu0 %v5597
        %5599 = vmatprep.subr.mxu0 0.0
        %v5600 = vand.u32 %v1243, 4294901760
        %v5601 = vsub.f32 %v1243, %v5600
        %v5602 = vand.u32 %v5601, 4294901760
        %5603 = vmatpush1.msra.mxu0 %v5602
        %5604 = vmatprep.subr.mxu0 0.0
        %v5605 = vand.u32 %v1244, 4294901760
        %v5606 = vsub.f32 %v1244, %v5605
        %v5607 = vand.u32 %v5606, 4294901760
        %5608 = vmatpush1.msra.mxu0 %v5607
        %5609 = vmatprep.subr.mxu0 0.0
        %v5610 = vand.u32 %v1245, 4294901760
        %v5611 = vsub.f32 %v1245, %v5610
        %v5612 = vand.u32 %v5611, 4294901760
        %5613 = vmatpush1.msra.mxu0 %v5612
        %5614 = vmatprep.subr.mxu0 0.0
        %v5615 = vand.u32 %v1246, 4294901760
        %v5616 = vsub.f32 %v1246, %v5615
        %v5617 = vand.u32 %v5616, 4294901760
        %5618 = vmatpush1.msra.mxu0 %v5617
        %v5619 = vand.u32 %v1410, 4294901760
        %5620 = vmatprep.mubr.f32.mxu0 %v5619
        %v5621 = vand.u32 %v1403, 4294901760
        %5622 = vmatmul.mubr.f32.gmra.mrb[0].mxu0 %v5621
        %v5623 = vpop.f32.mrb[0].mxu0
        %v5624 = vadd.f32 %v5456, %v5623
        %v5625 = vpop.f32.mrb[0].mxu0
        %5626 = vdwg.mxu0
        %5627 = vmatprep.subr.mxu0 0.0
        %v5628 = vand.u32 %v1215, 4294901760
        %5629 = vmatpush1.msra.mxu0 %v5628
        %5630 = vmatprep.subr.mxu0 0.0
        %v5631 = vand.u32 %v1216, 4294901760
        %5632 = vmatpush1.msra.mxu0 %v5631
        %5633 = vmatprep.subr.mxu0 0.0
        %v5634 = vand.u32 %v1217, 4294901760
        %5635 = vmatpush1.msra.mxu0 %v5634
        %5636 = vmatprep.subr.mxu0 0.0
        %v5637 = vand.u32 %v1218, 4294901760
        %5638 = vmatpush1.msra.mxu0 %v5637
        %5639 = vmatprep.subr.mxu0 0.0
        %v5640 = vand.u32 %v1219, 4294901760
        %5641 = vmatpush1.msra.mxu0 %v5640
        %5642 = vmatprep.subr.mxu0 0.0
        %v5643 = vand.u32 %v1220, 4294901760
        %5644 = vmatpush1.msra.mxu0 %v5643
        %5645 = vmatprep.subr.mxu0 0.0
        %v5646 = vand.u32 %v1221, 4294901760
        %5647 = vmatpush1.msra.mxu0 %v5646
        %5648 = vmatprep.subr.mxu0 0.0
        %v5649 = vand.u32 %v1222, 4294901760
        %5650 = vmatpush1.msra.mxu0 %v5649
        %5651 = vmatprep.subr.mxu0 0.0
        %v5652 = vand.u32 %v1223, 4294901760
        %5653 = vmatpush1.msra.mxu0 %v5652
        %5654 = vmatprep.subr.mxu0 0.0
        %v5655 = vand.u32 %v1224, 4294901760
        %5656 = vmatpush1.msra.mxu0 %v5655
        %5657 = vmatprep.subr.mxu0 0.0
        %v5658 = vand.u32 %v1225, 4294901760
        %5659 = vmatpush1.msra.mxu0 %v5658
        %5660 = vmatprep.subr.mxu0 0.0
        %v5661 = vand.u32 %v1226, 4294901760
        %5662 = vmatpush1.msra.mxu0 %v5661
        %5663 = vmatprep.subr.mxu0 0.0
        %v5664 = vand.u32 %v1227, 4294901760
        %5665 = vmatpush1.msra.mxu0 %v5664
        %5666 = vmatprep.subr.mxu0 0.0
        %v5667 = vand.u32 %v1228, 4294901760
        %5668 = vmatpush1.msra.mxu0 %v5667
        %5669 = vmatprep.subr.mxu0 0.0
        %v5670 = vand.u32 %v1229, 4294901760
        %5671 = vmatpush1.msra.mxu0 %v5670
        %5672 = vmatprep.subr.mxu0 0.0
        %v5673 = vand.u32 %v1230, 4294901760
        %5674 = vmatpush1.msra.mxu0 %v5673
        %5675 = vmatprep.subr.mxu0 0.0
        %v5676 = vand.u32 %v1231, 4294901760
        %5677 = vmatpush1.msra.mxu0 %v5676
        %5678 = vmatprep.subr.mxu0 0.0
        %v5679 = vand.u32 %v1232, 4294901760
        %5680 = vmatpush1.msra.mxu0 %v5679
        %5681 = vmatprep.subr.mxu0 0.0
        %v5682 = vand.u32 %v1233, 4294901760
        %5683 = vmatpush1.msra.mxu0 %v5682
        %5684 = vmatprep.subr.mxu0 0.0
        %v5685 = vand.u32 %v1234, 4294901760
        %5686 = vmatpush1.msra.mxu0 %v5685
        %5687 = vmatprep.subr.mxu0 0.0
        %v5688 = vand.u32 %v1235, 4294901760
        %5689 = vmatpush1.msra.mxu0 %v5688
        %5690 = vmatprep.subr.mxu0 0.0
        %v5691 = vand.u32 %v1236, 4294901760
        %5692 = vmatpush1.msra.mxu0 %v5691
        %5693 = vmatprep.subr.mxu0 0.0
        %v5694 = vand.u32 %v1237, 4294901760
        %5695 = vmatpush1.msra.mxu0 %v5694
        %5696 = vmatprep.subr.mxu0 0.0
        %v5697 = vand.u32 %v1238, 4294901760
        %5698 = vmatpush1.msra.mxu0 %v5697
        %5699 = vmatprep.subr.mxu0 0.0
        %v5700 = vand.u32 %v1239, 4294901760
        %5701 = vmatpush1.msra.mxu0 %v5700
        %5702 = vmatprep.subr.mxu0 0.0
        %v5703 = vand.u32 %v1240, 4294901760
        %5704 = vmatpush1.msra.mxu0 %v5703
        %5705 = vmatprep.subr.mxu0 0.0
        %v5706 = vand.u32 %v1241, 4294901760
        %5707 = vmatpush1.msra.mxu0 %v5706
        %5708 = vmatprep.subr.mxu0 0.0
        %v5709 = vand.u32 %v1242, 4294901760
        %5710 = vmatpush1.msra.mxu0 %v5709
        %5711 = vmatprep.subr.mxu0 0.0
        %v5712 = vand.u32 %v1243, 4294901760
        %5713 = vmatpush1.msra.mxu0 %v5712
        %5714 = vmatprep.subr.mxu0 0.0
        %v5715 = vand.u32 %v1244, 4294901760
        %5716 = vmatpush1.msra.mxu0 %v5715
        %5717 = vmatprep.subr.mxu0 0.0
        %v5718 = vand.u32 %v1245, 4294901760
        %5719 = vmatpush1.msra.mxu0 %v5718
        %5720 = vmatprep.subr.mxu0 0.0
        %v5721 = vand.u32 %v1246, 4294901760
        %5722 = vmatpush1.msra.mxu0 %v5721
        %v5723 = vand.u32 %v1410, 4294901760
        %5724 = vmatprep.mubr.f32.mxu0 %v5723
        %v5725 = vand.u32 %v1403, 4294901760
        %5726 = vmatmul.mubr.f32.gmra.mrb[0].mxu0 %v5725
        %v5727 = vpop.f32.mrb[0].mxu0
        %v5728 = vadd.f32 %v5624, %v5727
        %v5729 = vpop.f32.mrb[0].mxu0
        %5730 = vdwg.mxu0
        %5731 = vst [vmem:[%s204] sm:$0xff] %v5728
        %s5732 = sand.u32 %s97, 1
        %s5733 = scalar_lea.sflag [#allocation4], %s5732
        %s5734 = sand.u32 %s97, 1
        %s5735 = smul.addr %s5734, 8
        %s5736 = scalar_lea.vmem [#allocation7], %s5735
        // Predicated region
        $region41: #{tpu_custom_call.1} parent=31 // pred_check
          %p5737 = pneg %p107
        $region42: #{tpu_custom_call.1} parent=31 // pred_check_branch
          %5739 = sbr.rel (%p5737) target = $region44
        $region43: #{tpu_custom_call.1} parent=31 // pred_region
          %s5741 = ssub.s32 128, 128
          %5742 = vsyncadd %s5733, %s5741
          %s5743 = smul.addr %s21, 128
          %s5744 = scalar_lea.hbm %s3, %s5743
          %s5746 = sshll.u32 %s5736, 4
          %s5747 = int_to_ptr.vmem [resolvable:$true] %s5746
          %5749 = dma.vmem_to_hbm [thread:$0]  %s5747, 128, %s5744, %s5733
        $region44: #{tpu_custom_call.1} parent=31 // pred_fallthru
          _
      $region32: #{tpu_custom_call.1} parent=5 // pred_fallthru
        _
      %p5750 = scmp.le.s32.totalorder 2, %s16
      // Predicated region
      $region45: #{tpu_custom_call.1} parent=5 // pred_check
        %p5751 = pneg %p5750
      $region46: #{tpu_custom_call.1} parent=5 // pred_check_branch
        %5753 = sbr.rel (%p5751) target = $region48
      $region47: #{tpu_custom_call.1} parent=5 // pred_region
        %s5754 = ssub.s32 %s16, 2
        // Predicated region
        $region49: #{tpu_custom_call.1} parent=47 // pred_check
          %p5755 = pneg %p113
        $region50: #{tpu_custom_call.1} parent=47 // pred_check_branch
          %5757 = sbr.rel (%p5755) target = $region52
        $region51: #{tpu_custom_call.1} parent=47 // pred_region
          %s5758 = sand.u32 %s98, 1
          %s5759 = scalar_lea.sflag [#allocation4], %s5758
          %s5760 = sand.u32 %s98, 1
          %s5761 = smul.addr %s5760, 8
          %s5762 = scalar_lea.vmem [#allocation7], %s5761
          %5763 = dma.done %s5759, 128
        $region52: #{tpu_custom_call.1} parent=47 // pred_fallthru
          _
      $region48: #{tpu_custom_call.1} parent=5 // pred_fallthru
        _
    $region6: #{tpu_custom_call.1} parent=1 // loop_footer
      %s20 = sadd.s32 1, %s16
    $region7: #{tpu_custom_call.1} parent=1 // loop_footer_branch
      %15 = sbr.rel target = $region3
    $region8: #{tpu_custom_call.1} parent=1 // loop_exit
      _
    %5764 = vsyncpa [#allocation3], 1
    %s5765 = scalar_lea.sflag [#allocation3], 1
    %5766 = vsyncpa %s5765, 1
    %5767 = vsyncpa [#allocation6], 1
    %5768 = vsyncpa [#allocation4], 1
    %s5769 = scalar_lea.sflag [#allocation4], 1
    %5770 = vsyncpa %s5769, 1

</llo_original>
